<compile_context>
chip_gen: v6e
topology: v6e:2x2x1
jax: 0.10.0
libtpu: 0.0.40
codegen_flags: <defaults>
</compile_context>

<pallas_src>
import numpy as np
import jax
import jax.numpy as jnp
from jax.experimental import pallas as pl
from jax.experimental.pallas import tpu as pltpu

# ----------------------- model hyper-parameters (small demo sizes) -----------------------
NUM_WAVELENGTHS = 64          # L
ENCODING_SIZE   = 8           # E
KERNEL_SIZE     = 3           # must be odd
BATCH           = 2           # small demo batch (wrapper pads/tiles to BATCH_TILE)

POOL_KERNEL = 4
PAD         = (KERNEL_SIZE - 1) // 2
POOLED      = int(np.floor(NUM_WAVELENGTHS / POOL_KERNEL))                     # 16
UNPOOL_NO_OUTPAD = POOL_KERNEL * (POOLED - 1) + POOL_KERNEL
POOL_PADOUT = int(abs(NUM_WAVELENGTHS - UNPOOL_NO_OUTPAD))                      # 0 here

BATCH_TILE = 256                                             # MXU-M multiple on v5e/v6e/v7x
OUT_LANES  = ((NUM_WAVELENGTHS + 127) // 128) * 128          # lane-dense padded output width


# ----------------------------------- Pallas kernel ---------------------------------------
def decoder_kernel(x_ref,
                   w0_ref, b0_ref,
                   w1_ref, b1_ref,
                   w2_ref, b2_ref,
                   mu_ref, bu_ref,
                   mc1_ref, bc1_ref,
                   mc2_ref, bc2_ref,
                   wo_ref, bo_ref,
                   o_ref):
    """One batch tile: 7 MXU matmuls with f32 accumulation + bias/relu/tanh in f32."""

    def relu(v):
        return jnp.maximum(v, 0.0)

    def mm(a, w_ref, b_ref):
        # Weights are stored bf16 (HBM-byte savings); upcast and accumulate in f32.
        w = w_ref[...].astype(jnp.float32)
        return jnp.dot(a, w, preferred_element_type=jnp.float32) + b_ref[...]

    h = relu(mm(x_ref[...], w0_ref, b0_ref))          # (TB, 128)        dense0 + relu
    h = relu(mm(h, w1_ref, b1_ref))                   # (TB, 256)        dense1 + relu
    h = relu(mm(h, w2_ref, b2_ref))                   # (TB, 16*P)       dense2 + relu
    # view(-1, 16, P) is implicit (features stay flattened channel-major)
    h = relu(mm(h, mu_ref, bu_ref))                   # (TB, 16*L)       unpooling (convT, stride 4) + relu
    h = relu(mm(h, mc1_ref, bc1_ref))                 # (TB, 4*L)        convT1 + relu
    h = relu(mm(h, mc2_ref, bc2_ref))                 # (TB, L)          convT2 + relu
    # view(-1, L) is implicit
    o_ref[...] = jnp.tanh(mm(h, wo_ref, bo_ref))      # (TB, OUT_LANES)  output linear (lane-padded) + tanh


def _resident_spec(shape):
    """Same block at every grid step -> DMA'd once, stays VMEM-resident across batch tiles."""
    zeros = (0,) * len(shape)
    return pl.BlockSpec(shape, lambda i, z=zeros: z)


def decoder_forward(x, kernel_args, batch_tile=BATCH_TILE):
    batch = x.shape[0]
    num_tiles = pl.cdiv(batch, batch_tile)
    padded = num_tiles * batch_tile
    if padded != batch:
        x = jnp.concatenate(
            [x, jnp.zeros((padded - batch, x.shape[1]), x.dtype)], axis=0)

    args = (x,) + tuple(kernel_args)
    in_specs = [pl.BlockSpec((batch_tile, x.shape[1]), lambda i: (i, 0))]
    in_specs += [_resident_spec(a.shape) for a in kernel_args]
    # NOTE: weights could additionally use pipeline_mode=pl.Buffered(1) (single buffer instead
    # of the default double buffer), but at ~1.3 MiB total bf16 weights VMEM is not a
    # constraint on any generation, so headroom is left for larger batch tiles instead.

    out = pl.pallas_call(
        decoder_kernel,
        out_shape=jax.ShapeDtypeStruct((padded, OUT_LANES), jnp.float32),
        grid=(num_tiles,),
        in_specs=in_specs,
        out_specs=pl.BlockSpec((batch_tile, OUT_LANES), lambda i: (i, 0)),
        compiler_params=pltpu.CompilerParams(
            dimension_semantics=("parallel",)),    # lets v7x split tiles across its 2 TCs
    )(*args)
    return out[:batch, :NUM_WAVELENGTHS]


# ------------------------- host-side parameter / matrix construction ---------------------
def conv_transpose1d_as_matrix(w, lin, lout, stride, padding):
    """ConvTranspose1d (Cin,Cout,K) -> dense matrix mapping flat (Cin*lin) -> flat (Cout*lout).

    out[co, j] = sum_{ci,i,k : i*stride - padding + k == j} x[ci, i] * w[ci, co, k]
    (output_padding positions, if any, receive only bias -> rows of zeros, handled naturally).
    """
    cin, cout, K = w.shape
    M = np.zeros((cin * lin, cout * lout), dtype=np.float32)
    for ci in range(cin):
        for i in range(lin):
            for k in range(K):
                j = i * stride - padding + k
                if 0 <= j < lout:
                    M[ci * lin + i, j::lout] += w[ci, :, k]
    return M


def init_params(key):
    """Deterministic synthetic parameters with PyTorch-convention shapes."""
    def uni(k, shape, fan_in):
        bound = 1.0 / np.sqrt(fan_in)
        return np.asarray(jax.random.uniform(k, shape, jnp.float32, -bound, bound))

    ks = jax.random.split(key, 14)
    P, L, E, K = POOLED, NUM_WAVELENGTHS, ENCODING_SIZE, KERNEL_SIZE
    p = {
        "W0": uni(ks[0], (128, E), E),            "b0": uni(ks[1], (128,), E),
        "W1": uni(ks[2], (256, 128), 128),        "b1": uni(ks[3], (256,), 128),
        "W2": uni(ks[4], (16 * P, 256), 256),     "b2": uni(ks[5], (16 * P,), 256),
        "Wu": uni(ks[6], (16, 16, POOL_KERNEL), 16 * POOL_KERNEL),
        "bu": uni(ks[7], (16,), 16 * POOL_KERNEL),
        "Wc1": uni(ks[8], (16, 4, K), 16 * K),    "bc1": uni(ks[9], (4,), 16 * K),
        "Wc2": uni(ks[10], (4, 1, K), 4 * K),     "bc2": uni(ks[11], (1,), 4 * K),
        "Wo": uni(ks[12], (L, L), L),             "bo": uni(ks[13], (L,), L),
    }
    return p


def build_kernel_args(p):
    """Weights as bf16 (halve HBM bytes), biases in f32; final layer lane-padded to OUT_LANES."""
    P, L = POOLED, NUM_WAVELENGTHS
    Mu  = conv_transpose1d_as_matrix(p["Wu"], P, L, POOL_KERNEL, 0)     # (16P, 16L)
    Mc1 = conv_transpose1d_as_matrix(p["Wc1"], L, L, 1, PAD)            # (16L, 4L)
    Mc2 = conv_transpose1d_as_matrix(p["Wc2"], L, L, 1, PAD)            # (4L, L)

    Wo_pad = np.zeros((L, OUT_LANES), dtype=np.float32)
    Wo_pad[:, :L] = p["Wo"].T
    bo_pad = np.zeros((1, OUT_LANES), dtype=np.float32)
    bo_pad[0, :L] = p["bo"]

    weights = [p["W0"].T, p["W1"].T, p["W2"].T, Mu, Mc1, Mc2, Wo_pad]
    biases  = [p["b0"][None, :], p["b1"][None, :], p["b2"][None, :],
               np.repeat(p["bu"], L)[None, :],
               np.repeat(p["bc1"], L)[None, :],
               np.repeat(p["bc2"], L)[None, :],
               bo_pad]

    args = []
    for w, b in zip(weights, biases):
        args.append(jnp.asarray(w, jnp.bfloat16))   # bf16 weight storage
        args.append(jnp.asarray(b, jnp.float32))    # biases stay f32
    return tuple(args)


# -------------------------------- numpy reference (float64) ------------------------------
def np_conv_transpose1d(x, w, b, stride, padding, output_padding):
    B, cin, lin = x.shape
    _, cout, K = w.shape
    lout = (lin - 1) * stride - 2 * padding + K + output_padding
    y = np.zeros((B, cout, lout), dtype=np.float64)
    for i in range(lin):
        for k in range(K):
            j = i * stride - padding + k
            if 0 <= j < lout:
                y[:, :, j] += x[:, :, i] @ w[:, :, k]
    return y + b[None, :, None]


def reference_forward(x, p):
    relu = lambda a: np.maximum(a, 0.0)
    f64 = lambda a: np.asarray(a, np.float64)
    h = relu(f64(x) @ f64(p["W0"]).T + f64(p["b0"]))
    h = relu(h @ f64(p["W1"]).T + f64(p["b1"]))
    h = relu(h @ f64(p["W2"]).T + f64(p["b2"]))
    z = h.reshape(-1, 16, POOLED)
    u = relu(np_conv_transpose1d(z, f64(p["Wu"]), f64(p["bu"]), POOL_KERNEL, 0, POOL_PADOUT))
    v = relu(np_conv_transpose1d(u, f64(p["Wc1"]), f64(p["bc1"]), 1, PAD, 0))
    w = relu(np_conv_transpose1d(v, f64(p["Wc2"]), f64(p["bc2"]), 1, PAD, 0))
    flat = w.reshape(-1, NUM_WAVELENGTHS)
    return np.tanh(flat @ f64(p["Wo"]).T + f64(p["bo"]))


# -------------------------------------------- main ---------------------------------------
if __name__ == "__main__":
    key = jax.random.PRNGKey(0)
    pkey, xkey1, xkey2 = jax.random.split(key, 3)

    params = init_params(pkey)
    kernel_args = build_kernel_args(params)

    def run_and_check(batch, xkey):
        x = jax.random.normal(xkey, (batch, ENCODING_SIZE), dtype=jnp.float32)
        out = jax.block_until_ready(decoder_forward(x, kernel_args))
        assert out.shape == (batch, NUM_WAVELENGTHS), out.shape
        ref = reference_forward(np.asarray(x), params)
        max_err = float(np.max(np.abs(np.asarray(out, np.float64) - ref)))
        # bf16 weight storage (f32 accumulation) allows slightly more drift than the pure-f32
        # path (which was < 1e-3); observed error stays in the low 1e-3 range.
        assert max_err < 2e-2, f"mismatch vs reference (batch={batch}): max abs err = {max_err}"

    run_and_check(BATCH, xkey1)   # small demo batch: pads to one 256-row tile, grid=(1,)
    run_and_check(300, xkey2)     # multi-tile path: pads to 512 rows, grid=(2,), weights resident

    print("KERNEL_OK")
</pallas_src>

<mosaic_0001>
module attributes {stable_mosaic.version = 11 : i64} {
  func.func @decoder_kernel(%arg0: i32, %arg1: memref<256x8xf32, #tpu.memory_space<vmem>>, %arg2: memref<8x128xbf16, #tpu.memory_space<vmem>>, %arg3: memref<1x128xf32, #tpu.memory_space<vmem>>, %arg4: memref<128x256xbf16, #tpu.memory_space<vmem>>, %arg5: memref<1x256xf32, #tpu.memory_space<vmem>>, %arg6: memref<256x256xbf16, #tpu.memory_space<vmem>>, %arg7: memref<1x256xf32, #tpu.memory_space<vmem>>, %arg8: memref<256x1024xbf16, #tpu.memory_space<vmem>>, %arg9: memref<1x1024xf32, #tpu.memory_space<vmem>>, %arg10: memref<1024x256xbf16, #tpu.memory_space<vmem>>, %arg11: memref<1x256xf32, #tpu.memory_space<vmem>>, %arg12: memref<256x64xbf16, #tpu.memory_space<vmem>>, %arg13: memref<1x64xf32, #tpu.memory_space<vmem>>, %arg14: memref<64x128xbf16, #tpu.memory_space<vmem>>, %arg15: memref<1x128xf32, #tpu.memory_space<vmem>>, %arg16: memref<256x128xf32, #tpu.memory_space<vmem>>) attributes {dimension_semantics = [#tpu.dimension_semantics<parallel>], iteration_bounds = array<i64: 1>, scalar_prefetch = 0 : i64, scratch_operands = 0 : i64, tpu.core_type = #tpu.core_type<tc>, window_params = [{transform_indices = @transform_0, window_bounds = array<i64: 256, 8>}, {pipeline_mode = #tpu.pipeline_mode<synchronous>, transform_indices = @transform_1, window_bounds = array<i64: 8, 128>}, {pipeline_mode = #tpu.pipeline_mode<synchronous>, transform_indices = @transform_2, window_bounds = array<i64: 1, 128>}, {pipeline_mode = #tpu.pipeline_mode<synchronous>, transform_indices = @transform_3, window_bounds = array<i64: 128, 256>}, {pipeline_mode = #tpu.pipeline_mode<synchronous>, transform_indices = @transform_4, window_bounds = array<i64: 1, 256>}, {pipeline_mode = #tpu.pipeline_mode<synchronous>, transform_indices = @transform_5, window_bounds = array<i64: 256, 256>}, {pipeline_mode = #tpu.pipeline_mode<synchronous>, transform_indices = @transform_6, window_bounds = array<i64: 1, 256>}, {pipeline_mode = #tpu.pipeline_mode<synchronous>, transform_indices = @transform_7, window_bounds = array<i64: 256, 1024>}, {pipeline_mode = #tpu.pipeline_mode<synchronous>, transform_indices = @transform_8, window_bounds = array<i64: 1, 1024>}, {pipeline_mode = #tpu.pipeline_mode<synchronous>, transform_indices = @transform_9, window_bounds = array<i64: 1024, 256>}, {pipeline_mode = #tpu.pipeline_mode<synchronous>, transform_indices = @transform_10, window_bounds = array<i64: 1, 256>}, {pipeline_mode = #tpu.pipeline_mode<synchronous>, transform_indices = @transform_11, window_bounds = array<i64: 256, 64>}, {pipeline_mode = #tpu.pipeline_mode<synchronous>, transform_indices = @transform_12, window_bounds = array<i64: 1, 64>}, {pipeline_mode = #tpu.pipeline_mode<synchronous>, transform_indices = @transform_13, window_bounds = array<i64: 64, 128>}, {pipeline_mode = #tpu.pipeline_mode<synchronous>, transform_indices = @transform_14, window_bounds = array<i64: 1, 128>}, {transform_indices = @transform_15, window_bounds = array<i64: 256, 128>}]} {
    %c0 = arith.constant 0 : index
    %c0_0 = arith.constant 0 : index
    %0 = vector.load %arg1[%c0, %c0_0] : memref<256x8xf32, #tpu.memory_space<vmem>>, vector<256x8xf32>
    %c0_1 = arith.constant 0 : index
    %c0_2 = arith.constant 0 : index
    %1 = vector.load %arg2[%c0_1, %c0_2] : memref<8x128xbf16, #tpu.memory_space<vmem>>, vector<8x128xbf16>
    %2 = arith.extf %1 : vector<8x128xbf16> to vector<8x128xf32>
    %cst = arith.constant dense<0.000000e+00> : vector<256x128xf32>
    %3 = tpu.matmul %0, %2, %cst {dimension_numbers = #tpu.dot_dimension_numbers<[1], [0], [0], [1], [0, 0, 1, 1], [], []>} : vector<256x8xf32>, vector<8x128xf32>, vector<256x128xf32> -> vector<256x128xf32>
    %c0_3 = arith.constant 0 : index
    %c0_4 = arith.constant 0 : index
    %4 = vector.load %arg3[%c0_3, %c0_4] : memref<1x128xf32, #tpu.memory_space<vmem>>, vector<1x128xf32>
    %5 = vector.broadcast %4 : vector<1x128xf32> to vector<256x128xf32>
    %6 = arith.addf %3, %5 : vector<256x128xf32>
    %cst_5 = arith.constant 0.000000e+00 : f32
    %7 = vector.broadcast %cst_5 : f32 to vector<256x128xf32>
    %8 = arith.maximumf %6, %7 : vector<256x128xf32>
    %c0_6 = arith.constant 0 : index
    %c0_7 = arith.constant 0 : index
    %9 = vector.load %arg4[%c0_6, %c0_7] : memref<128x256xbf16, #tpu.memory_space<vmem>>, vector<128x256xbf16>
    %10 = arith.extf %9 : vector<128x256xbf16> to vector<128x256xf32>
    %cst_8 = arith.constant dense<0.000000e+00> : vector<256x256xf32>
    %11 = tpu.matmul %8, %10, %cst_8 {dimension_numbers = #tpu.dot_dimension_numbers<[1], [0], [0], [1], [0, 0, 1, 1], [], []>} : vector<256x128xf32>, vector<128x256xf32>, vector<256x256xf32> -> vector<256x256xf32>
    %c0_9 = arith.constant 0 : index
    %c0_10 = arith.constant 0 : index
    %12 = vector.load %arg5[%c0_9, %c0_10] : memref<1x256xf32, #tpu.memory_space<vmem>>, vector<1x256xf32>
    %13 = vector.broadcast %12 : vector<1x256xf32> to vector<256x256xf32>
    %14 = arith.addf %11, %13 : vector<256x256xf32>
    %cst_11 = arith.constant 0.000000e+00 : f32
    %15 = vector.broadcast %cst_11 : f32 to vector<256x256xf32>
    %16 = arith.maximumf %14, %15 : vector<256x256xf32>
    %c0_12 = arith.constant 0 : index
    %c0_13 = arith.constant 0 : index
    %17 = vector.load %arg6[%c0_12, %c0_13] : memref<256x256xbf16, #tpu.memory_space<vmem>>, vector<256x256xbf16>
    %18 = arith.extf %17 : vector<256x256xbf16> to vector<256x256xf32>
    %cst_14 = arith.constant dense<0.000000e+00> : vector<256x256xf32>
    %19 = tpu.matmul %16, %18, %cst_14 {dimension_numbers = #tpu.dot_dimension_numbers<[1], [0], [0], [1], [0, 0, 1, 1], [], []>} : vector<256x256xf32>, vector<256x256xf32>, vector<256x256xf32> -> vector<256x256xf32>
    %c0_15 = arith.constant 0 : index
    %c0_16 = arith.constant 0 : index
    %20 = vector.load %arg7[%c0_15, %c0_16] : memref<1x256xf32, #tpu.memory_space<vmem>>, vector<1x256xf32>
    %21 = vector.broadcast %20 : vector<1x256xf32> to vector<256x256xf32>
    %22 = arith.addf %19, %21 : vector<256x256xf32>
    %cst_17 = arith.constant 0.000000e+00 : f32
    %23 = vector.broadcast %cst_17 : f32 to vector<256x256xf32>
    %24 = arith.maximumf %22, %23 : vector<256x256xf32>
    %c0_18 = arith.constant 0 : index
    %c0_19 = arith.constant 0 : index
    %25 = vector.load %arg8[%c0_18, %c0_19] : memref<256x1024xbf16, #tpu.memory_space<vmem>>, vector<256x1024xbf16>
    %26 = arith.extf %25 : vector<256x1024xbf16> to vector<256x1024xf32>
    %cst_20 = arith.constant dense<0.000000e+00> : vector<256x1024xf32>
    %27 = tpu.matmul %24, %26, %cst_20 {dimension_numbers = #tpu.dot_dimension_numbers<[1], [0], [0], [1], [0, 0, 1, 1], [], []>} : vector<256x256xf32>, vector<256x1024xf32>, vector<256x1024xf32> -> vector<256x1024xf32>
    %c0_21 = arith.constant 0 : index
    %c0_22 = arith.constant 0 : index
    %28 = vector.load %arg9[%c0_21, %c0_22] : memref<1x1024xf32, #tpu.memory_space<vmem>>, vector<1x1024xf32>
    %29 = vector.broadcast %28 : vector<1x1024xf32> to vector<256x1024xf32>
    %30 = arith.addf %27, %29 : vector<256x1024xf32>
    %cst_23 = arith.constant 0.000000e+00 : f32
    %31 = vector.broadcast %cst_23 : f32 to vector<256x1024xf32>
    %32 = arith.maximumf %30, %31 : vector<256x1024xf32>
    %c0_24 = arith.constant 0 : index
    %c0_25 = arith.constant 0 : index
    %33 = vector.load %arg10[%c0_24, %c0_25] : memref<1024x256xbf16, #tpu.memory_space<vmem>>, vector<1024x256xbf16>
    %34 = arith.extf %33 : vector<1024x256xbf16> to vector<1024x256xf32>
    %cst_26 = arith.constant dense<0.000000e+00> : vector<256x256xf32>
    %35 = tpu.matmul %32, %34, %cst_26 {dimension_numbers = #tpu.dot_dimension_numbers<[1], [0], [0], [1], [0, 0, 1, 1], [], []>} : vector<256x1024xf32>, vector<1024x256xf32>, vector<256x256xf32> -> vector<256x256xf32>
    %c0_27 = arith.constant 0 : index
    %c0_28 = arith.constant 0 : index
    %36 = vector.load %arg11[%c0_27, %c0_28] : memref<1x256xf32, #tpu.memory_space<vmem>>, vector<1x256xf32>
    %37 = vector.broadcast %36 : vector<1x256xf32> to vector<256x256xf32>
    %38 = arith.addf %35, %37 : vector<256x256xf32>
    %cst_29 = arith.constant 0.000000e+00 : f32
    %39 = vector.broadcast %cst_29 : f32 to vector<256x256xf32>
    %40 = arith.maximumf %38, %39 : vector<256x256xf32>
    %c0_30 = arith.constant 0 : index
    %c0_31 = arith.constant 0 : index
    %41 = vector.load %arg12[%c0_30, %c0_31] : memref<256x64xbf16, #tpu.memory_space<vmem>>, vector<256x64xbf16>
    %42 = arith.extf %41 : vector<256x64xbf16> to vector<256x64xf32>
    %cst_32 = arith.constant dense<0.000000e+00> : vector<256x64xf32>
    %43 = tpu.matmul %40, %42, %cst_32 {dimension_numbers = #tpu.dot_dimension_numbers<[1], [0], [0], [1], [0, 0, 1, 1], [], []>} : vector<256x256xf32>, vector<256x64xf32>, vector<256x64xf32> -> vector<256x64xf32>
    %c0_33 = arith.constant 0 : index
    %c0_34 = arith.constant 0 : index
    %44 = vector.load %arg13[%c0_33, %c0_34] : memref<1x64xf32, #tpu.memory_space<vmem>>, vector<1x64xf32>
    %45 = vector.broadcast %44 : vector<1x64xf32> to vector<256x64xf32>
    %46 = arith.addf %43, %45 : vector<256x64xf32>
    %cst_35 = arith.constant 0.000000e+00 : f32
    %47 = vector.broadcast %cst_35 : f32 to vector<256x64xf32>
    %48 = arith.maximumf %46, %47 : vector<256x64xf32>
    %c0_36 = arith.constant 0 : index
    %c0_37 = arith.constant 0 : index
    %49 = vector.load %arg14[%c0_36, %c0_37] : memref<64x128xbf16, #tpu.memory_space<vmem>>, vector<64x128xbf16>
    %50 = arith.extf %49 : vector<64x128xbf16> to vector<64x128xf32>
    %cst_38 = arith.constant dense<0.000000e+00> : vector<256x128xf32>
    %51 = tpu.matmul %48, %50, %cst_38 {dimension_numbers = #tpu.dot_dimension_numbers<[1], [0], [0], [1], [0, 0, 1, 1], [], []>} : vector<256x64xf32>, vector<64x128xf32>, vector<256x128xf32> -> vector<256x128xf32>
    %c0_39 = arith.constant 0 : index
    %c0_40 = arith.constant 0 : index
    %52 = vector.load %arg15[%c0_39, %c0_40] : memref<1x128xf32, #tpu.memory_space<vmem>>, vector<1x128xf32>
    %53 = vector.broadcast %52 : vector<1x128xf32> to vector<256x128xf32>
    %54 = arith.addf %51, %53 : vector<256x128xf32>
    %55 = math.tanh %54 : vector<256x128xf32>
    %c0_41 = arith.constant 0 : index
    %c0_42 = arith.constant 0 : index
    %56 = vector.load %arg16[%c0_41, %c0_42] : memref<256x128xf32, #tpu.memory_space<vmem>>, vector<256x128xf32>
    tpu.vector_store %arg16[%c0_41, %c0_42], %55 {strides = array<i32>} : memref<256x128xf32, #tpu.memory_space<vmem>>, vector<256x128xf32>,
    return
  }
  func.func @transform_0(%arg0: i32) -> (i32, i32) {
    %c0_i32 = arith.constant 0 : i32
    %c0_i32_0 = arith.constant 0 : i32
    return %arg0, %c0_i32 : i32, i32
  }
  func.func @transform_1(%arg0: i32) -> (i32, i32) {
    %c0_i32 = arith.constant 0 : i32
    %c0_i32_0 = arith.constant 0 : i32
    %c0_i32_1 = arith.constant 0 : i32
    return %c0_i32, %c0_i32_0 : i32, i32
  }
  func.func @transform_2(%arg0: i32) -> (i32, i32) {
    %c0_i32 = arith.constant 0 : i32
    %c0_i32_0 = arith.constant 0 : i32
    %c0_i32_1 = arith.constant 0 : i32
    return %c0_i32, %c0_i32_0 : i32, i32
  }
  func.func @transform_3(%arg0: i32) -> (i32, i32) {
    %c0_i32 = arith.constant 0 : i32
    %c0_i32_0 = arith.constant 0 : i32
    %c0_i32_1 = arith.constant 0 : i32
    return %c0_i32, %c0_i32_0 : i32, i32
  }
  func.func @transform_4(%arg0: i32) -> (i32, i32) {
    %c0_i32 = arith.constant 0 : i32
    %c0_i32_0 = arith.constant 0 : i32
    %c0_i32_1 = arith.constant 0 : i32
    return %c0_i32, %c0_i32_0 : i32, i32
  }
  func.func @transform_5(%arg0: i32) -> (i32, i32) {
    %c0_i32 = arith.constant 0 : i32
    %c0_i32_0 = arith.constant 0 : i32
    %c0_i32_1 = arith.constant 0 : i32
    return %c0_i32, %c0_i32_0 : i32, i32
  }
  func.func @transform_6(%arg0: i32) -> (i32, i32) {
    %c0_i32 = arith.constant 0 : i32
    %c0_i32_0 = arith.constant 0 : i32
    %c0_i32_1 = arith.constant 0 : i32
    return %c0_i32, %c0_i32_0 : i32, i32
  }
  func.func @transform_7(%arg0: i32) -> (i32, i32) {
    %c0_i32 = arith.constant 0 : i32
    %c0_i32_0 = arith.constant 0 : i32
    %c0_i32_1 = arith.constant 0 : i32
    return %c0_i32, %c0_i32_0 : i32, i32
  }
  func.func @transform_8(%arg0: i32) -> (i32, i32) {
    %c0_i32 = arith.constant 0 : i32
    %c0_i32_0 = arith.constant 0 : i32
    %c0_i32_1 = arith.constant 0 : i32
    return %c0_i32, %c0_i32_0 : i32, i32
  }
  func.func @transform_9(%arg0: i32) -> (i32, i32) {
    %c0_i32 = arith.constant 0 : i32
    %c0_i32_0 = arith.constant 0 : i32
    %c0_i32_1 = arith.constant 0 : i32
    return %c0_i32, %c0_i32_0 : i32, i32
  }
  func.func @transform_10(%arg0: i32) -> (i32, i32) {
    %c0_i32 = arith.constant 0 : i32
    %c0_i32_0 = arith.constant 0 : i32
    %c0_i32_1 = arith.constant 0 : i32
    return %c0_i32, %c0_i32_0 : i32, i32
  }
  func.func @transform_11(%arg0: i32) -> (i32, i32) {
    %c0_i32 = arith.constant 0 : i32
    %c0_i32_0 = arith.constant 0 : i32
    %c0_i32_1 = arith.constant 0 : i32
    return %c0_i32, %c0_i32_0 : i32, i32
  }
  func.func @transform_12(%arg0: i32) -> (i32, i32) {
    %c0_i32 = arith.constant 0 : i32
    %c0_i32_0 = arith.constant 0 : i32
    %c0_i32_1 = arith.constant 0 : i32
    return %c0_i32, %c0_i32_0 : i32, i32
  }
  func.func @transform_13(%arg0: i32) -> (i32, i32) {
    %c0_i32 = arith.constant 0 : i32
    %c0_i32_0 = arith.constant 0 : i32
    %c0_i32_1 = arith.constant 0 : i32
    return %c0_i32, %c0_i32_0 : i32, i32
  }
  func.func @transform_14(%arg0: i32) -> (i32, i32) {
    %c0_i32 = arith.constant 0 : i32
    %c0_i32_0 = arith.constant 0 : i32
    %c0_i32_1 = arith.constant 0 : i32
    return %c0_i32, %c0_i32_0 : i32, i32
  }
  func.func @transform_15(%arg0: i32) -> (i32, i32) {
    %c0_i32 = arith.constant 0 : i32
    %c0_i32_0 = arith.constant 0 : i32
    return %arg0, %c0_i32 : i32, i32
  }
}

</mosaic_0001>

<llo_original>
// kernel: tpu_custom_call.1
$region0: #{tpu_custom_call.1}
  #allocation0 [shape = 'u32[]', space=smem, size = 0x4, offset = 0x4, fixed_abs, tag = 'smem constant byte address 0x4 - core index']
  #allocation1 [shape = 'u32[144,128]{1,0:T(1,128)}', space=vmem, size = 0x12000, scoped, tag = 'internal scratch']
  %s0 = inlined_call_operand.vmem [shape: f32[256,8], index: 0, kind: input, shape index: {}]
  %s1 = inlined_call_operand.vmem [shape: bf16[8,128], index: 1, kind: input, shape index: {}]
  %s2 = inlined_call_operand.vmem [shape: f32[1,128], index: 2, kind: input, shape index: {}]
  %s3 = inlined_call_operand.vmem [shape: bf16[128,256], index: 3, kind: input, shape index: {}]
  %s4 = inlined_call_operand.vmem [shape: f32[1,256], index: 4, kind: input, shape index: {}]
  %s5 = inlined_call_operand.vmem [shape: bf16[256,256], index: 5, kind: input, shape index: {}]
  %s6 = inlined_call_operand.vmem [shape: f32[1,256], index: 6, kind: input, shape index: {}]
  %s7 = inlined_call_operand.hbm [shape: bf16[256,1024], index: 7, kind: input, shape index: {}]
  %s8 = inlined_call_operand.vmem [shape: f32[1,1024], index: 8, kind: input, shape index: {}]
  %s9 = inlined_call_operand.hbm [shape: bf16[1024,256], index: 9, kind: input, shape index: {}]
  %s10 = inlined_call_operand.vmem [shape: f32[1,256], index: 10, kind: input, shape index: {}]
  %s11 = inlined_call_operand.vmem [shape: bf16[256,64], index: 11, kind: input, shape index: {}]
  %s12 = inlined_call_operand.vmem [shape: f32[1,64], index: 12, kind: input, shape index: {}]
  %s13 = inlined_call_operand.vmem [shape: bf16[64,128], index: 13, kind: input, shape index: {}]
  %s14 = inlined_call_operand.vmem [shape: f32[1,128], index: 14, kind: input, shape index: {}]
  %s15 = inlined_call_operand.hbm [shape: f32[256,128], index: 15, kind: output, shape index: {}]
  %s16 = sld [smem:[#allocation0]]
  $region78: #{tpu_custom_call.1} parent=0
    _
  %s18 = ssub.s32 1, %s16
  %s19 = scalar_select 0, %s18, %s16
  $region1: #{tpu_custom_call.1} parent=0
    #allocation2 [shape = 'u8[524288]{0}', space=vmem, size = 0x80000, scoped, tag = 'input window, operand 7, single buffered']
    #allocation3 [shape = 's32[1]{0}', space=sflag, size = 0x4, scoped, tag = 'scoped memory for tpu_custom_call.1']
    #allocation4 [shape = 's32[1]{0}', space=sflag, size = 0x4, scoped, tag = 'scoped memory for tpu_custom_call.1']
    #allocation5 [shape = 'u8[524288]{0}', space=vmem, size = 0x80000, scoped, tag = 'input window, operand 9, single buffered']
    #allocation6 [shape = 's32[1]{0}', space=sflag, size = 0x4, scoped, tag = 'scoped memory for tpu_custom_call.1']
    #allocation7 [shape = 'u8[131072]{0}', space=vmem, size = 0x20000, scoped, tag = 'output window, operand 0, single buffered']
    %20 = vsyncpa [#allocation3], 0
    %21 = vsyncpa [#allocation6], 0
    %22 = vsyncpa [#allocation4], 0
    // Predicated region
    $region2: #{tpu_custom_call.1} parent=1 // pred_check
      _
    $region3: #{tpu_custom_call.1} parent=1 // pred_check_branch
      %24 = sbr.rel (0) target = $region5
    $region4: #{tpu_custom_call.1} parent=1 // pred_region
      _
    $region5: #{tpu_custom_call.1} parent=1 // pred_fallthru
      _
    // Predicated region
    $region6: #{tpu_custom_call.1} parent=1 // pred_check
      _
    $region7: #{tpu_custom_call.1} parent=1 // pred_check_branch
      %26 = sbr.rel (0) target = $region9
    $region8: #{tpu_custom_call.1} parent=1 // pred_region
      _
    $region9: #{tpu_custom_call.1} parent=1 // pred_fallthru
      _
    // Predicated region
    $region10: #{tpu_custom_call.1} parent=1 // pred_check
      _
    $region11: #{tpu_custom_call.1} parent=1 // pred_check_branch
      %28 = sbr.rel (0) target = $region13
    $region12: #{tpu_custom_call.1} parent=1 // pred_region
      _
    $region13: #{tpu_custom_call.1} parent=1 // pred_fallthru
      _
    // Predicated region
    $region14: #{tpu_custom_call.1} parent=1 // pred_check
      _
    $region15: #{tpu_custom_call.1} parent=1 // pred_check_branch
      %30 = sbr.rel (0) target = $region17
    $region16: #{tpu_custom_call.1} parent=1 // pred_region
      _
    $region17: #{tpu_custom_call.1} parent=1 // pred_fallthru
      _
    // Predicated region
    $region18: #{tpu_custom_call.1} parent=1 // pred_check
      _
    $region19: #{tpu_custom_call.1} parent=1 // pred_check_branch
      %32 = sbr.rel (0) target = $region21
    $region20: #{tpu_custom_call.1} parent=1 // pred_region
      _
    $region21: #{tpu_custom_call.1} parent=1 // pred_fallthru
      _
    // Predicated region
    $region22: #{tpu_custom_call.1} parent=1 // pred_check
      _
    $region23: #{tpu_custom_call.1} parent=1 // pred_check_branch
      %34 = sbr.rel (0) target = $region25
    $region24: #{tpu_custom_call.1} parent=1 // pred_region
      _
    $region25: #{tpu_custom_call.1} parent=1 // pred_fallthru
      _
    // Predicated region
    $region26: #{tpu_custom_call.1} parent=1 // pred_check
      _
    $region27: #{tpu_custom_call.1} parent=1 // pred_check_branch
      %36 = sbr.rel (0) target = $region29
    $region28: #{tpu_custom_call.1} parent=1 // pred_region
      _
    $region29: #{tpu_custom_call.1} parent=1 // pred_fallthru
      _
    // Predicated region
    $region30: #{tpu_custom_call.1} parent=1 // pred_check
      _
    $region31: #{tpu_custom_call.1} parent=1 // pred_check_branch
      %38 = sbr.rel (0) target = $region33
    $region32: #{tpu_custom_call.1} parent=1 // pred_region
      %s40 = ssub.s32 16384, 16384
      %41 = vsyncadd [#allocation3], %s40
      %s42 = sshll.u32 [#allocation2], 4
      %s43 = int_to_ptr.vmem [resolvable:$true] %s42
      %48 = dma.hbm_to_vmem [thread:$0]  %s7, 16384, %s43, [#allocation3], 512, 512, 32
    $region33: #{tpu_custom_call.1} parent=1 // pred_fallthru
      _
    // Predicated region
    $region34: #{tpu_custom_call.1} parent=1 // pred_check
      _
    $region35: #{tpu_custom_call.1} parent=1 // pred_check_branch
      %50 = sbr.rel (0) target = $region37
    $region36: #{tpu_custom_call.1} parent=1 // pred_region
      _
    $region37: #{tpu_custom_call.1} parent=1 // pred_fallthru
      _
    // Predicated region
    $region38: #{tpu_custom_call.1} parent=1 // pred_check
      _
    $region39: #{tpu_custom_call.1} parent=1 // pred_check_branch
      %52 = sbr.rel (0) target = $region41
    $region40: #{tpu_custom_call.1} parent=1 // pred_region
      %s54 = ssub.s32 16384, 16384
      %55 = vsyncadd [#allocation6], %s54
      %s56 = sshll.u32 [#allocation5], 4
      %s57 = int_to_ptr.vmem [resolvable:$true] %s56
      %62 = dma.hbm_to_vmem [thread:$0]  %s9, 16384, %s57, [#allocation6], 128, 128, 8
    $region41: #{tpu_custom_call.1} parent=1 // pred_fallthru
      _
    // Predicated region
    $region42: #{tpu_custom_call.1} parent=1 // pred_check
      _
    $region43: #{tpu_custom_call.1} parent=1 // pred_check_branch
      %64 = sbr.rel (0) target = $region45
    $region44: #{tpu_custom_call.1} parent=1 // pred_region
      _
    $region45: #{tpu_custom_call.1} parent=1 // pred_fallthru
      _
    // Predicated region
    $region46: #{tpu_custom_call.1} parent=1 // pred_check
      _
    $region47: #{tpu_custom_call.1} parent=1 // pred_check_branch
      %66 = sbr.rel (0) target = $region49
    $region48: #{tpu_custom_call.1} parent=1 // pred_region
      _
    $region49: #{tpu_custom_call.1} parent=1 // pred_fallthru
      _
    // Predicated region
    $region50: #{tpu_custom_call.1} parent=1 // pred_check
      _
    $region51: #{tpu_custom_call.1} parent=1 // pred_check_branch
      %68 = sbr.rel (0) target = $region53
    $region52: #{tpu_custom_call.1} parent=1 // pred_region
      _
    $region53: #{tpu_custom_call.1} parent=1 // pred_fallthru
      _
    // Predicated region
    $region54: #{tpu_custom_call.1} parent=1 // pred_check
      _
    $region55: #{tpu_custom_call.1} parent=1 // pred_check_branch
      %70 = sbr.rel (0) target = $region57
    $region56: #{tpu_custom_call.1} parent=1 // pred_region
      _
    $region57: #{tpu_custom_call.1} parent=1 // pred_fallthru
      _
    // Predicated region
    $region58: #{tpu_custom_call.1} parent=1 // pred_check
      _
    $region59: #{tpu_custom_call.1} parent=1 // pred_check_branch
      %72 = sbr.rel (0) target = $region61
    $region60: #{tpu_custom_call.1} parent=1 // pred_region
      _
    $region61: #{tpu_custom_call.1} parent=1 // pred_fallthru
      _
    // Predicated region
    $region62: #{tpu_custom_call.1} parent=1 // pred_check
      _
    $region63: #{tpu_custom_call.1} parent=1 // pred_check_branch
      %74 = sbr.rel (0) target = $region65
    $region64: #{tpu_custom_call.1} parent=1 // pred_region
      %75 = dma.done [#allocation3], 16384
    $region65: #{tpu_custom_call.1} parent=1 // pred_fallthru
      _
    // Predicated region
    $region66: #{tpu_custom_call.1} parent=1 // pred_check
      _
    $region67: #{tpu_custom_call.1} parent=1 // pred_check_branch
      %77 = sbr.rel (0) target = $region69
    $region68: #{tpu_custom_call.1} parent=1 // pred_region
      %78 = dma.done [#allocation6], 16384
    $region69: #{tpu_custom_call.1} parent=1 // pred_fallthru
      _
    %v79 = vld [vmem:[%s0] sm:$0xff]
    %v80 = vld [vmem:[%s0 + $0x8] sm:$0xff]
    %v81 = vld [vmem:[%s0 + $0x10] sm:$0xff]
    %v82 = vld [vmem:[%s0 + $0x18] sm:$0xff]
    %v83 = vld [vmem:[%s0 + $0x20] sm:$0xff]
    %v84 = vld [vmem:[%s0 + $0x28] sm:$0xff]
    %v85 = vld [vmem:[%s0 + $0x30] sm:$0xff]
    %v86 = vld [vmem:[%s0 + $0x38] sm:$0xff]
    %v87 = vld [vmem:[%s0 + $0x40] sm:$0xff]
    %v88 = vld [vmem:[%s0 + $0x48] sm:$0xff]
    %v89 = vld [vmem:[%s0 + $0x50] sm:$0xff]
    %v90 = vld [vmem:[%s0 + $0x58] sm:$0xff]
    %v91 = vld [vmem:[%s0 + $0x60] sm:$0xff]
    %v92 = vld [vmem:[%s0 + $0x68] sm:$0xff]
    %v93 = vld [vmem:[%s0 + $0x70] sm:$0xff]
    %v94 = vld [vmem:[%s0 + $0x78] sm:$0xff]
    %v95 = vld [vmem:[%s0 + $0x80] sm:$0xff]
    %v96 = vld [vmem:[%s0 + $0x88] sm:$0xff]
    %v97 = vld [vmem:[%s0 + $0x90] sm:$0xff]
    %v98 = vld [vmem:[%s0 + $0x98] sm:$0xff]
    %v99 = vld [vmem:[%s0 + $0xa0] sm:$0xff]
    %v100 = vld [vmem:[%s0 + $0xa8] sm:$0xff]
    %v101 = vld [vmem:[%s0 + $0xb0] sm:$0xff]
    %v102 = vld [vmem:[%s0 + $0xb8] sm:$0xff]
    %v103 = vld [vmem:[%s0 + $0xc0] sm:$0xff]
    %v104 = vld [vmem:[%s0 + $0xc8] sm:$0xff]
    %v105 = vld [vmem:[%s0 + $0xd0] sm:$0xff]
    %v106 = vld [vmem:[%s0 + $0xd8] sm:$0xff]
    %v107 = vld [vmem:[%s0 + $0xe0] sm:$0xff]
    %v108 = vld [vmem:[%s0 + $0xe8] sm:$0xff]
    %v109 = vld [vmem:[%s0 + $0xf0] sm:$0xff]
    %v110 = vld [vmem:[%s0 + $0xf8] sm:$0xff]
    %v111 = vld [vmem:[%s1] sm:$0xf]
    %v112 = vunpack.c.l.bf16 %v111
    %v113 = vld [vmem:[%s2] sm:$0x1]
    %v115 = vlaneseq
    %v116 = vshrl.u32 %v115, 7
    %v117 = vsub.s32 0, %v116
    %v118 = vrot.slane %v113, %v117
    %vm120 = vcmask 64512
    %v122 = vsel %vm120, %v79, 0
    %v125 = vsel %vm120, %v80, 0
    %v128 = vsel %vm120, %v81, 0
    %v131 = vsel %vm120, %v82, 0
    %v134 = vsel %vm120, %v83, 0
    %v137 = vsel %vm120, %v84, 0
    %v140 = vsel %vm120, %v85, 0
    %v143 = vsel %vm120, %v86, 0
    %v146 = vsel %vm120, %v87, 0
    %v149 = vsel %vm120, %v88, 0
    %v152 = vsel %vm120, %v89, 0
    %v155 = vsel %vm120, %v90, 0
    %v158 = vsel %vm120, %v91, 0
    %v161 = vsel %vm120, %v92, 0
    %v164 = vsel %vm120, %v93, 0
    %v167 = vsel %vm120, %v94, 0
    %v170 = vsel %vm120, %v95, 0
    %v173 = vsel %vm120, %v96, 0
    %v176 = vsel %vm120, %v97, 0
    %v179 = vsel %vm120, %v98, 0
    %v182 = vsel %vm120, %v99, 0
    %v185 = vsel %vm120, %v100, 0
    %v188 = vsel %vm120, %v101, 0
    %v191 = vsel %vm120, %v102, 0
    %v194 = vsel %vm120, %v103, 0
    %v197 = vsel %vm120, %v104, 0
    %v200 = vsel %vm120, %v105, 0
    %v203 = vsel %vm120, %v106, 0
    %v206 = vsel %vm120, %v107, 0
    %v209 = vsel %vm120, %v108, 0
    %v212 = vsel %vm120, %v109, 0
    %v215 = vsel %vm120, %v110, 0
    %217 = vmatprep.subr.mxu0 0.0
    %218 = vmatpush1.msra.mxu0 0.0
    %219 = vmatprep.subr.mxu0 0.0
    %220 = vmatpush1.msra.mxu0 0.0
    %221 = vmatprep.subr.mxu0 0.0
    %222 = vmatpush1.msra.mxu0 0.0
    %223 = vmatprep.subr.mxu0 0.0
    %224 = vmatpush1.msra.mxu0 0.0
    %225 = vmatprep.subr.mxu0 0.0
    %226 = vmatpush1.msra.mxu0 0.0
    %227 = vmatprep.subr.mxu0 0.0
    %228 = vmatpush1.msra.mxu0 0.0
    %229 = vmatprep.subr.mxu0 0.0
    %230 = vmatpush1.msra.mxu0 0.0
    %231 = vmatprep.subr.mxu0 0.0
    %232 = vmatpush1.msra.mxu0 0.0
    %233 = vmatprep.subr.mxu0 0.0
    %234 = vmatpush1.msra.mxu0 0.0
    %235 = vmatprep.subr.mxu0 0.0
    %236 = vmatpush1.msra.mxu0 0.0
    %237 = vmatprep.subr.mxu0 0.0
    %238 = vmatpush1.msra.mxu0 0.0
    %239 = vmatprep.subr.mxu0 0.0
    %240 = vmatpush1.msra.mxu0 0.0
    %241 = vmatprep.subr.mxu0 0.0
    %242 = vmatpush1.msra.mxu0 0.0
    %243 = vmatprep.subr.mxu0 0.0
    %244 = vmatpush1.msra.mxu0 0.0
    %245 = vmatprep.subr.mxu0 0.0
    %246 = vmatpush1.msra.mxu0 0.0
    %247 = vmatprep.subr.mxu0 0.0
    %248 = vmatpush1.msra.mxu0 %v112
    %249 = vmatprep.subr.mxu0 0.0
    %250 = vmatpush2.msra.mxu0 0.0
    %251 = vmatprep.subr.mxu0 0.0
    %252 = vmatpush2.msra.mxu0 0.0
    %253 = vmatprep.subr.mxu0 0.0
    %254 = vmatpush2.msra.mxu0 0.0
    %255 = vmatprep.subr.mxu0 0.0
    %256 = vmatpush2.msra.mxu0 0.0
    %257 = vmatprep.subr.mxu0 0.0
    %258 = vmatpush2.msra.mxu0 0.0
    %259 = vmatprep.subr.mxu0 0.0
    %260 = vmatpush2.msra.mxu0 0.0
    %261 = vmatprep.subr.mxu0 0.0
    %262 = vmatpush2.msra.mxu0 0.0
    %263 = vmatprep.subr.mxu0 0.0
    %264 = vmatpush2.msra.mxu0 0.0
    %265 = vmatprep.subr.mxu0 0.0
    %266 = vmatpush2.msra.mxu0 0.0
    %267 = vmatprep.subr.mxu0 0.0
    %268 = vmatpush2.msra.mxu0 0.0
    %269 = vmatprep.subr.mxu0 0.0
    %270 = vmatpush2.msra.mxu0 0.0
    %271 = vmatprep.subr.mxu0 0.0
    %272 = vmatpush2.msra.mxu0 0.0
    %273 = vmatprep.subr.mxu0 0.0
    %274 = vmatpush2.msra.mxu0 0.0
    %275 = vmatprep.subr.mxu0 0.0
    %276 = vmatpush2.msra.mxu0 0.0
    %277 = vmatprep.subr.mxu0 0.0
    %278 = vmatpush2.msra.mxu0 0.0
    %279 = vmatprep.subr.mxu0 0.0
    %280 = vmatpush2.msra.mxu0 0.0
    %281 = vmatprep.mubr.f32.mxu0 0.0
    %282 = vmatmul.mubr.f32.gmra.mxu0 %v122
    %v283 = vpop.f32.mrf.mxu0
    %v284 = vadd.f32 %v118, %v283
    %v285 = vpop.f32.mrf.mxu0
    %286 = vmatprep.mubr.f32.mxu0 0.0
    %287 = vmatmul.mubr.f32.gmra.mxu0 %v125
    %v288 = vpop.f32.mrf.mxu0
    %v289 = vadd.f32 %v118, %v288
    %v290 = vpop.f32.mrf.mxu0
    %291 = vmatprep.mubr.f32.mxu0 0.0
    %292 = vmatmul.mubr.f32.gmra.mxu0 %v128
    %v293 = vpop.f32.mrf.mxu0
    %v294 = vadd.f32 %v118, %v293
    %v295 = vpop.f32.mrf.mxu0
    %296 = vmatprep.mubr.f32.mxu0 0.0
    %297 = vmatmul.mubr.f32.gmra.mxu0 %v131
    %v298 = vpop.f32.mrf.mxu0
    %v299 = vadd.f32 %v118, %v298
    %v300 = vpop.f32.mrf.mxu0
    %301 = vmatprep.mubr.f32.mxu0 0.0
    %302 = vmatmul.mubr.f32.gmra.mxu0 %v134
    %v303 = vpop.f32.mrf.mxu0
    %v304 = vadd.f32 %v118, %v303
    %v305 = vpop.f32.mrf.mxu0
    %306 = vmatprep.mubr.f32.mxu0 0.0
    %307 = vmatmul.mubr.f32.gmra.mxu0 %v137
    %v308 = vpop.f32.mrf.mxu0
    %v309 = vadd.f32 %v118, %v308
    %v310 = vpop.f32.mrf.mxu0
    %311 = vmatprep.mubr.f32.mxu0 0.0
    %312 = vmatmul.mubr.f32.gmra.mxu0 %v140
    %v313 = vpop.f32.mrf.mxu0
    %v314 = vadd.f32 %v118, %v313
    %v315 = vpop.f32.mrf.mxu0
    %316 = vmatprep.mubr.f32.mxu0 0.0
    %317 = vmatmul.mubr.f32.gmra.mxu0 %v143
    %v318 = vpop.f32.mrf.mxu0
    %v319 = vadd.f32 %v118, %v318
    %v320 = vpop.f32.mrf.mxu0
    %321 = vmatprep.mubr.f32.mxu0 0.0
    %322 = vmatmul.mubr.f32.gmra.mxu0 %v146
    %v323 = vpop.f32.mrf.mxu0
    %v324 = vadd.f32 %v118, %v323
    %v325 = vpop.f32.mrf.mxu0
    %326 = vmatprep.mubr.f32.mxu0 0.0
    %327 = vmatmul.mubr.f32.gmra.mxu0 %v149
    %v328 = vpop.f32.mrf.mxu0
    %v329 = vadd.f32 %v118, %v328
    %v330 = vpop.f32.mrf.mxu0
    %331 = vmatprep.mubr.f32.mxu0 0.0
    %332 = vmatmul.mubr.f32.gmra.mxu0 %v152
    %v333 = vpop.f32.mrf.mxu0
    %v334 = vadd.f32 %v118, %v333
    %v335 = vpop.f32.mrf.mxu0
    %336 = vmatprep.mubr.f32.mxu0 0.0
    %337 = vmatmul.mubr.f32.gmra.mxu0 %v155
    %v338 = vpop.f32.mrf.mxu0
    %v339 = vadd.f32 %v118, %v338
    %v340 = vpop.f32.mrf.mxu0
    %341 = vmatprep.mubr.f32.mxu0 0.0
    %342 = vmatmul.mubr.f32.gmra.mxu0 %v158
    %v343 = vpop.f32.mrf.mxu0
    %v344 = vadd.f32 %v118, %v343
    %v345 = vpop.f32.mrf.mxu0
    %346 = vmatprep.mubr.f32.mxu0 0.0
    %347 = vmatmul.mubr.f32.gmra.mxu0 %v161
    %v348 = vpop.f32.mrf.mxu0
    %v349 = vadd.f32 %v118, %v348
    %v350 = vpop.f32.mrf.mxu0
    %351 = vmatprep.mubr.f32.mxu0 0.0
    %352 = vmatmul.mubr.f32.gmra.mxu0 %v164
    %v353 = vpop.f32.mrf.mxu0
    %v354 = vadd.f32 %v118, %v353
    %v355 = vpop.f32.mrf.mxu0
    %356 = vmatprep.mubr.f32.mxu0 0.0
    %357 = vmatmul.mubr.f32.gmra.mxu0 %v167
    %v358 = vpop.f32.mrf.mxu0
    %v359 = vadd.f32 %v118, %v358
    %v360 = vpop.f32.mrf.mxu0
    %361 = vmatprep.mubr.f32.mxu0 0.0
    %362 = vmatmul.mubr.f32.gmra.mxu0 %v170
    %v363 = vpop.f32.mrf.mxu0
    %v364 = vadd.f32 %v118, %v363
    %v365 = vpop.f32.mrf.mxu0
    %366 = vmatprep.mubr.f32.mxu0 0.0
    %367 = vmatmul.mubr.f32.gmra.mxu0 %v173
    %v368 = vpop.f32.mrf.mxu0
    %v369 = vadd.f32 %v118, %v368
    %v370 = vpop.f32.mrf.mxu0
    %371 = vmatprep.mubr.f32.mxu0 0.0
    %372 = vmatmul.mubr.f32.gmra.mxu0 %v176
    %v373 = vpop.f32.mrf.mxu0
    %v374 = vadd.f32 %v118, %v373
    %v375 = vpop.f32.mrf.mxu0
    %376 = vmatprep.mubr.f32.mxu0 0.0
    %377 = vmatmul.mubr.f32.gmra.mxu0 %v179
    %v378 = vpop.f32.mrf.mxu0
    %v379 = vadd.f32 %v118, %v378
    %v380 = vpop.f32.mrf.mxu0
    %381 = vmatprep.mubr.f32.mxu0 0.0
    %382 = vmatmul.mubr.f32.gmra.mxu0 %v182
    %v383 = vpop.f32.mrf.mxu0
    %v384 = vadd.f32 %v118, %v383
    %v385 = vpop.f32.mrf.mxu0
    %386 = vmatprep.mubr.f32.mxu0 0.0
    %387 = vmatmul.mubr.f32.gmra.mxu0 %v185
    %v388 = vpop.f32.mrf.mxu0
    %v389 = vadd.f32 %v118, %v388
    %v390 = vpop.f32.mrf.mxu0
    %391 = vmatprep.mubr.f32.mxu0 0.0
    %392 = vmatmul.mubr.f32.gmra.mxu0 %v188
    %v393 = vpop.f32.mrf.mxu0
    %v394 = vadd.f32 %v118, %v393
    %v395 = vpop.f32.mrf.mxu0
    %396 = vmatprep.mubr.f32.mxu0 0.0
    %397 = vmatmul.mubr.f32.gmra.mxu0 %v191
    %v398 = vpop.f32.mrf.mxu0
    %v399 = vadd.f32 %v118, %v398
    %v400 = vpop.f32.mrf.mxu0
    %401 = vmatprep.mubr.f32.mxu0 0.0
    %402 = vmatmul.mubr.f32.gmra.mxu0 %v194
    %v403 = vpop.f32.mrf.mxu0
    %v404 = vadd.f32 %v118, %v403
    %v405 = vpop.f32.mrf.mxu0
    %406 = vmatprep.mubr.f32.mxu0 0.0
    %407 = vmatmul.mubr.f32.gmra.mxu0 %v197
    %v408 = vpop.f32.mrf.mxu0
    %v409 = vadd.f32 %v118, %v408
    %v410 = vpop.f32.mrf.mxu0
    %411 = vmatprep.mubr.f32.mxu0 0.0
    %412 = vmatmul.mubr.f32.gmra.mxu0 %v200
    %v413 = vpop.f32.mrf.mxu0
    %v414 = vadd.f32 %v118, %v413
    %v415 = vpop.f32.mrf.mxu0
    %416 = vmatprep.mubr.f32.mxu0 0.0
    %417 = vmatmul.mubr.f32.gmra.mxu0 %v203
    %v418 = vpop.f32.mrf.mxu0
    %v419 = vadd.f32 %v118, %v418
    %v420 = vpop.f32.mrf.mxu0
    %421 = vmatprep.mubr.f32.mxu0 0.0
    %422 = vmatmul.mubr.f32.gmra.mxu0 %v206
    %v423 = vpop.f32.mrf.mxu0
    %v424 = vadd.f32 %v118, %v423
    %v425 = vpop.f32.mrf.mxu0
    %426 = vmatprep.mubr.f32.mxu0 0.0
    %427 = vmatmul.mubr.f32.gmra.mxu0 %v209
    %v428 = vpop.f32.mrf.mxu0
    %v429 = vadd.f32 %v118, %v428
    %v430 = vpop.f32.mrf.mxu0
    %431 = vmatprep.mubr.f32.mxu0 0.0
    %432 = vmatmul.mubr.f32.gmra.mxu0 %v212
    %v433 = vpop.f32.mrf.mxu0
    %v434 = vadd.f32 %v118, %v433
    %v435 = vpop.f32.mrf.mxu0
    %436 = vmatprep.mubr.f32.mxu0 0.0
    %437 = vmatmul.mubr.f32.gmra.mxu0 %v215
    %v438 = vpop.f32.mrf.mxu0
    %v439 = vadd.f32 %v118, %v438
    %v440 = vpop.f32.mrf.mxu0
    %441 = vdwg.mxu0
    %v442 = vmax.f32 %v284, 0.0
    %v443 = vmax.f32 %v289, 0.0
    %v444 = vmax.f32 %v294, 0.0
    %v445 = vmax.f32 %v299, 0.0
    %v446 = vmax.f32 %v304, 0.0
    %v447 = vmax.f32 %v309, 0.0
    %v448 = vmax.f32 %v314, 0.0
    %v449 = vmax.f32 %v319, 0.0
    %v450 = vmax.f32 %v324, 0.0
    %v451 = vmax.f32 %v329, 0.0
    %v452 = vmax.f32 %v334, 0.0
    %v453 = vmax.f32 %v339, 0.0
    %v454 = vmax.f32 %v344, 0.0
    %v455 = vmax.f32 %v349, 0.0
    %v456 = vmax.f32 %v354, 0.0
    %v457 = vmax.f32 %v359, 0.0
    %v458 = vmax.f32 %v364, 0.0
    %v459 = vmax.f32 %v369, 0.0
    %v460 = vmax.f32 %v374, 0.0
    %v461 = vmax.f32 %v379, 0.0
    %v462 = vmax.f32 %v384, 0.0
    %v463 = vmax.f32 %v389, 0.0
    %v464 = vmax.f32 %v394, 0.0
    %v465 = vmax.f32 %v399, 0.0
    %v466 = vmax.f32 %v404, 0.0
    %v467 = vmax.f32 %v409, 0.0
    %v468 = vmax.f32 %v414, 0.0
    %v469 = vmax.f32 %v419, 0.0
    %v470 = vmax.f32 %v424, 0.0
    %v471 = vmax.f32 %v429, 0.0
    %v472 = vmax.f32 %v434, 0.0
    %v473 = vmax.f32 %v439, 0.0
    %v474 = vld [vmem:[%s3] sm:$0xff]
    %v475 = vld [vmem:[%s3 + $0x8] sm:$0xff]
    %v476 = vld [vmem:[%s3 + $0x10] sm:$0xff]
    %v477 = vld [vmem:[%s3 + $0x18] sm:$0xff]
    %v478 = vld [vmem:[%s3 + $0x20] sm:$0xff]
    %v479 = vld [vmem:[%s3 + $0x28] sm:$0xff]
    %v480 = vld [vmem:[%s3 + $0x30] sm:$0xff]
    %v481 = vld [vmem:[%s3 + $0x38] sm:$0xff]
    %v482 = vld [vmem:[%s3 + $0x40] sm:$0xff]
    %v483 = vld [vmem:[%s3 + $0x48] sm:$0xff]
    %v484 = vld [vmem:[%s3 + $0x50] sm:$0xff]
    %v485 = vld [vmem:[%s3 + $0x58] sm:$0xff]
    %v486 = vld [vmem:[%s3 + $0x60] sm:$0xff]
    %v487 = vld [vmem:[%s3 + $0x68] sm:$0xff]
    %v488 = vld [vmem:[%s3 + $0x70] sm:$0xff]
    %v489 = vld [vmem:[%s3 + $0x78] sm:$0xff]
    %v490 = vunpack.c.l.bf16 %v474
    %v491 = vunpack.c.h.bf16 %v474
    %v492 = vunpack.c.l.bf16 %v475
    %v493 = vunpack.c.h.bf16 %v475
    %v494 = vunpack.c.l.bf16 %v476
    %v495 = vunpack.c.h.bf16 %v476
    %v496 = vunpack.c.l.bf16 %v477
    %v497 = vunpack.c.h.bf16 %v477
    %v498 = vunpack.c.l.bf16 %v478
    %v499 = vunpack.c.h.bf16 %v478
    %v500 = vunpack.c.l.bf16 %v479
    %v501 = vunpack.c.h.bf16 %v479
    %v502 = vunpack.c.l.bf16 %v480
    %v503 = vunpack.c.h.bf16 %v480
    %v504 = vunpack.c.l.bf16 %v481
    %v505 = vunpack.c.h.bf16 %v481
    %v506 = vunpack.c.l.bf16 %v482
    %v507 = vunpack.c.h.bf16 %v482
    %v508 = vunpack.c.l.bf16 %v483
    %v509 = vunpack.c.h.bf16 %v483
    %v510 = vunpack.c.l.bf16 %v484
    %v511 = vunpack.c.h.bf16 %v484
    %v512 = vunpack.c.l.bf16 %v485
    %v513 = vunpack.c.h.bf16 %v485
    %v514 = vunpack.c.l.bf16 %v486
    %v515 = vunpack.c.h.bf16 %v486
    %v516 = vunpack.c.l.bf16 %v487
    %v517 = vunpack.c.h.bf16 %v487
    %v518 = vunpack.c.l.bf16 %v488
    %v519 = vunpack.c.h.bf16 %v488
    %v520 = vunpack.c.l.bf16 %v489
    %v521 = vunpack.c.h.bf16 %v489
    %v522 = vld [vmem:[%s4] sm:$0x3]
    %v524 = vlaneseq
    %v525 = vshrl.u32 %v524, 7
    %v526 = vsub.s32 0, %v525
    %v527 = vrot.slane %v522, %v526
    %v528 = vlaneseq
    %v529 = vshrl.u32 %v528, 7
    %v530 = vsub.s32 1, %v529
    %v531 = vrot.slane %v522, %v530
    %534 = vmatprep.subr.mxu0 %v521
    %535 = vmatpush1.msra.mxu0 %v520
    %536 = vmatprep.subr.mxu0 %v519
    %537 = vmatpush1.msra.mxu0 %v518
    %538 = vmatprep.subr.mxu0 %v517
    %539 = vmatpush1.msra.mxu0 %v516
    %540 = vmatprep.subr.mxu0 %v515
    %541 = vmatpush1.msra.mxu0 %v514
    %542 = vmatprep.subr.mxu0 %v513
    %543 = vmatpush1.msra.mxu0 %v512
    %544 = vmatprep.subr.mxu0 %v511
    %545 = vmatpush1.msra.mxu0 %v510
    %546 = vmatprep.subr.mxu0 %v509
    %547 = vmatpush1.msra.mxu0 %v508
    %548 = vmatprep.subr.mxu0 %v507
    %549 = vmatpush1.msra.mxu0 %v506
    %550 = vmatprep.subr.mxu0 %v505
    %551 = vmatpush1.msra.mxu0 %v504
    %552 = vmatprep.subr.mxu0 %v503
    %553 = vmatpush1.msra.mxu0 %v502
    %554 = vmatprep.subr.mxu0 %v501
    %555 = vmatpush1.msra.mxu0 %v500
    %556 = vmatprep.subr.mxu0 %v499
    %557 = vmatpush1.msra.mxu0 %v498
    %558 = vmatprep.subr.mxu0 %v497
    %559 = vmatpush1.msra.mxu0 %v496
    %560 = vmatprep.subr.mxu0 %v495
    %561 = vmatpush1.msra.mxu0 %v494
    %562 = vmatprep.subr.mxu0 %v493
    %563 = vmatpush1.msra.mxu0 %v492
    %564 = vmatprep.subr.mxu0 %v491
    %565 = vmatpush1.msra.mxu0 %v490
    %566 = vmatprep.subr.mxu0 0.0
    %567 = vmatpush2.msra.mxu0 0.0
    %568 = vmatprep.subr.mxu0 0.0
    %569 = vmatpush2.msra.mxu0 0.0
    %570 = vmatprep.subr.mxu0 0.0
    %571 = vmatpush2.msra.mxu0 0.0
    %572 = vmatprep.subr.mxu0 0.0
    %573 = vmatpush2.msra.mxu0 0.0
    %574 = vmatprep.subr.mxu0 0.0
    %575 = vmatpush2.msra.mxu0 0.0
    %576 = vmatprep.subr.mxu0 0.0
    %577 = vmatpush2.msra.mxu0 0.0
    %578 = vmatprep.subr.mxu0 0.0
    %579 = vmatpush2.msra.mxu0 0.0
    %580 = vmatprep.subr.mxu0 0.0
    %581 = vmatpush2.msra.mxu0 0.0
    %582 = vmatprep.subr.mxu0 0.0
    %583 = vmatpush2.msra.mxu0 0.0
    %584 = vmatprep.subr.mxu0 0.0
    %585 = vmatpush2.msra.mxu0 0.0
    %586 = vmatprep.subr.mxu0 0.0
    %587 = vmatpush2.msra.mxu0 0.0
    %588 = vmatprep.subr.mxu0 0.0
    %589 = vmatpush2.msra.mxu0 0.0
    %590 = vmatprep.subr.mxu0 0.0
    %591 = vmatpush2.msra.mxu0 0.0
    %592 = vmatprep.subr.mxu0 0.0
    %593 = vmatpush2.msra.mxu0 0.0
    %594 = vmatprep.subr.mxu0 0.0
    %595 = vmatpush2.msra.mxu0 0.0
    %596 = vmatprep.subr.mxu0 0.0
    %597 = vmatpush2.msra.mxu0 0.0
    %598 = vmatprep.mubr.f32.mxu0 0.0
    %599 = vmatmul.mubr.f32.gmra.mxu0 %v442
    %v600 = vpop.f32.mrf.mxu0
    %v601 = vadd.f32 %v527, %v600
    %v602 = vpop.f32.mrf.mxu0
    %v603 = vadd.f32 %v531, %v602
    %604 = vmatprep.mubr.f32.mxu0 0.0
    %605 = vmatmul.mubr.f32.gmra.mxu0 %v443
    %v606 = vpop.f32.mrf.mxu0
    %v607 = vadd.f32 %v527, %v606
    %v608 = vpop.f32.mrf.mxu0
    %v609 = vadd.f32 %v531, %v608
    %610 = vmatprep.mubr.f32.mxu0 0.0
    %611 = vmatmul.mubr.f32.gmra.mxu0 %v444
    %v612 = vpop.f32.mrf.mxu0
    %v613 = vadd.f32 %v527, %v612
    %v614 = vpop.f32.mrf.mxu0
    %v615 = vadd.f32 %v531, %v614
    %616 = vmatprep.mubr.f32.mxu0 0.0
    %617 = vmatmul.mubr.f32.gmra.mxu0 %v445
    %v618 = vpop.f32.mrf.mxu0
    %v619 = vadd.f32 %v527, %v618
    %v620 = vpop.f32.mrf.mxu0
    %v621 = vadd.f32 %v531, %v620
    %622 = vmatprep.mubr.f32.mxu0 0.0
    %623 = vmatmul.mubr.f32.gmra.mxu0 %v446
    %v624 = vpop.f32.mrf.mxu0
    %v625 = vadd.f32 %v527, %v624
    %v626 = vpop.f32.mrf.mxu0
    %v627 = vadd.f32 %v531, %v626
    %628 = vmatprep.mubr.f32.mxu0 0.0
    %629 = vmatmul.mubr.f32.gmra.mxu0 %v447
    %v630 = vpop.f32.mrf.mxu0
    %v631 = vadd.f32 %v527, %v630
    %v632 = vpop.f32.mrf.mxu0
    %v633 = vadd.f32 %v531, %v632
    %634 = vmatprep.mubr.f32.mxu0 0.0
    %635 = vmatmul.mubr.f32.gmra.mxu0 %v448
    %v636 = vpop.f32.mrf.mxu0
    %v637 = vadd.f32 %v527, %v636
    %v638 = vpop.f32.mrf.mxu0
    %v639 = vadd.f32 %v531, %v638
    %640 = vmatprep.mubr.f32.mxu0 0.0
    %641 = vmatmul.mubr.f32.gmra.mxu0 %v449
    %v642 = vpop.f32.mrf.mxu0
    %v643 = vadd.f32 %v527, %v642
    %v644 = vpop.f32.mrf.mxu0
    %v645 = vadd.f32 %v531, %v644
    %646 = vmatprep.mubr.f32.mxu0 0.0
    %647 = vmatmul.mubr.f32.gmra.mxu0 %v450
    %v648 = vpop.f32.mrf.mxu0
    %v649 = vadd.f32 %v527, %v648
    %v650 = vpop.f32.mrf.mxu0
    %v651 = vadd.f32 %v531, %v650
    %652 = vmatprep.mubr.f32.mxu0 0.0
    %653 = vmatmul.mubr.f32.gmra.mxu0 %v451
    %v654 = vpop.f32.mrf.mxu0
    %v655 = vadd.f32 %v527, %v654
    %v656 = vpop.f32.mrf.mxu0
    %v657 = vadd.f32 %v531, %v656
    %658 = vmatprep.mubr.f32.mxu0 0.0
    %659 = vmatmul.mubr.f32.gmra.mxu0 %v452
    %v660 = vpop.f32.mrf.mxu0
    %v661 = vadd.f32 %v527, %v660
    %v662 = vpop.f32.mrf.mxu0
    %v663 = vadd.f32 %v531, %v662
    %664 = vmatprep.mubr.f32.mxu0 0.0
    %665 = vmatmul.mubr.f32.gmra.mxu0 %v453
    %v666 = vpop.f32.mrf.mxu0
    %v667 = vadd.f32 %v527, %v666
    %v668 = vpop.f32.mrf.mxu0
    %v669 = vadd.f32 %v531, %v668
    %670 = vmatprep.mubr.f32.mxu0 0.0
    %671 = vmatmul.mubr.f32.gmra.mxu0 %v454
    %v672 = vpop.f32.mrf.mxu0
    %v673 = vadd.f32 %v527, %v672
    %v674 = vpop.f32.mrf.mxu0
    %v675 = vadd.f32 %v531, %v674
    %676 = vmatprep.mubr.f32.mxu0 0.0
    %677 = vmatmul.mubr.f32.gmra.mxu0 %v455
    %v678 = vpop.f32.mrf.mxu0
    %v679 = vadd.f32 %v527, %v678
    %v680 = vpop.f32.mrf.mxu0
    %v681 = vadd.f32 %v531, %v680
    %682 = vmatprep.mubr.f32.mxu0 0.0
    %683 = vmatmul.mubr.f32.gmra.mxu0 %v456
    %v684 = vpop.f32.mrf.mxu0
    %v685 = vadd.f32 %v527, %v684
    %v686 = vpop.f32.mrf.mxu0
    %v687 = vadd.f32 %v531, %v686
    %688 = vmatprep.mubr.f32.mxu0 0.0
    %689 = vmatmul.mubr.f32.gmra.mxu0 %v457
    %v690 = vpop.f32.mrf.mxu0
    %v691 = vadd.f32 %v527, %v690
    %v692 = vpop.f32.mrf.mxu0
    %v693 = vadd.f32 %v531, %v692
    %694 = vmatprep.mubr.f32.mxu0 0.0
    %695 = vmatmul.mubr.f32.gmra.mxu0 %v458
    %v696 = vpop.f32.mrf.mxu0
    %v697 = vadd.f32 %v527, %v696
    %v698 = vpop.f32.mrf.mxu0
    %v699 = vadd.f32 %v531, %v698
    %700 = vmatprep.mubr.f32.mxu0 0.0
    %701 = vmatmul.mubr.f32.gmra.mxu0 %v459
    %v702 = vpop.f32.mrf.mxu0
    %v703 = vadd.f32 %v527, %v702
    %v704 = vpop.f32.mrf.mxu0
    %v705 = vadd.f32 %v531, %v704
    %706 = vmatprep.mubr.f32.mxu0 0.0
    %707 = vmatmul.mubr.f32.gmra.mxu0 %v460
    %v708 = vpop.f32.mrf.mxu0
    %v709 = vadd.f32 %v527, %v708
    %v710 = vpop.f32.mrf.mxu0
    %v711 = vadd.f32 %v531, %v710
    %712 = vmatprep.mubr.f32.mxu0 0.0
    %713 = vmatmul.mubr.f32.gmra.mxu0 %v461
    %v714 = vpop.f32.mrf.mxu0
    %v715 = vadd.f32 %v527, %v714
    %v716 = vpop.f32.mrf.mxu0
    %v717 = vadd.f32 %v531, %v716
    %718 = vmatprep.mubr.f32.mxu0 0.0
    %719 = vmatmul.mubr.f32.gmra.mxu0 %v462
    %v720 = vpop.f32.mrf.mxu0
    %v721 = vadd.f32 %v527, %v720
    %v722 = vpop.f32.mrf.mxu0
    %v723 = vadd.f32 %v531, %v722
    %724 = vmatprep.mubr.f32.mxu0 0.0
    %725 = vmatmul.mubr.f32.gmra.mxu0 %v463
    %v726 = vpop.f32.mrf.mxu0
    %v727 = vadd.f32 %v527, %v726
    %v728 = vpop.f32.mrf.mxu0
    %v729 = vadd.f32 %v531, %v728
    %730 = vmatprep.mubr.f32.mxu0 0.0
    %731 = vmatmul.mubr.f32.gmra.mxu0 %v464
    %v732 = vpop.f32.mrf.mxu0
    %v733 = vadd.f32 %v527, %v732
    %v734 = vpop.f32.mrf.mxu0
    %v735 = vadd.f32 %v531, %v734
    %736 = vmatprep.mubr.f32.mxu0 0.0
    %737 = vmatmul.mubr.f32.gmra.mxu0 %v465
    %v738 = vpop.f32.mrf.mxu0
    %v739 = vadd.f32 %v527, %v738
    %v740 = vpop.f32.mrf.mxu0
    %v741 = vadd.f32 %v531, %v740
    %742 = vmatprep.mubr.f32.mxu0 0.0
    %743 = vmatmul.mubr.f32.gmra.mxu0 %v466
    %v744 = vpop.f32.mrf.mxu0
    %v745 = vadd.f32 %v527, %v744
    %v746 = vpop.f32.mrf.mxu0
    %v747 = vadd.f32 %v531, %v746
    %748 = vmatprep.mubr.f32.mxu0 0.0
    %749 = vmatmul.mubr.f32.gmra.mxu0 %v467
    %v750 = vpop.f32.mrf.mxu0
    %v751 = vadd.f32 %v527, %v750
    %v752 = vpop.f32.mrf.mxu0
    %v753 = vadd.f32 %v531, %v752
    %754 = vmatprep.mubr.f32.mxu0 0.0
    %755 = vmatmul.mubr.f32.gmra.mxu0 %v468
    %v756 = vpop.f32.mrf.mxu0
    %v757 = vadd.f32 %v527, %v756
    %v758 = vpop.f32.mrf.mxu0
    %v759 = vadd.f32 %v531, %v758
    %760 = vmatprep.mubr.f32.mxu0 0.0
    %761 = vmatmul.mubr.f32.gmra.mxu0 %v469
    %v762 = vpop.f32.mrf.mxu0
    %v763 = vadd.f32 %v527, %v762
    %v764 = vpop.f32.mrf.mxu0
    %v765 = vadd.f32 %v531, %v764
    %766 = vmatprep.mubr.f32.mxu0 0.0
    %767 = vmatmul.mubr.f32.gmra.mxu0 %v470
    %v768 = vpop.f32.mrf.mxu0
    %v769 = vadd.f32 %v527, %v768
    %v770 = vpop.f32.mrf.mxu0
    %v771 = vadd.f32 %v531, %v770
    %772 = vmatprep.mubr.f32.mxu0 0.0
    %773 = vmatmul.mubr.f32.gmra.mxu0 %v471
    %v774 = vpop.f32.mrf.mxu0
    %v775 = vadd.f32 %v527, %v774
    %v776 = vpop.f32.mrf.mxu0
    %v777 = vadd.f32 %v531, %v776
    %778 = vmatprep.mubr.f32.mxu0 0.0
    %779 = vmatmul.mubr.f32.gmra.mxu0 %v472
    %v780 = vpop.f32.mrf.mxu0
    %v781 = vadd.f32 %v527, %v780
    %v782 = vpop.f32.mrf.mxu0
    %v783 = vadd.f32 %v531, %v782
    %784 = vmatprep.mubr.f32.mxu0 0.0
    %785 = vmatmul.mubr.f32.gmra.mxu0 %v473
    %v786 = vpop.f32.mrf.mxu0
    %v787 = vadd.f32 %v527, %v786
    %v788 = vpop.f32.mrf.mxu0
    %v789 = vadd.f32 %v531, %v788
    %790 = vdwg.mxu0
    %v791 = vmax.f32 %v601, 0.0
    %v792 = vmax.f32 %v603, 0.0
    %v793 = vmax.f32 %v607, 0.0
    %v794 = vmax.f32 %v609, 0.0
    %v795 = vmax.f32 %v613, 0.0
    %v796 = vmax.f32 %v615, 0.0
    %v797 = vmax.f32 %v619, 0.0
    %v798 = vmax.f32 %v621, 0.0
    %v799 = vmax.f32 %v625, 0.0
    %v800 = vmax.f32 %v627, 0.0
    %v801 = vmax.f32 %v631, 0.0
    %v802 = vmax.f32 %v633, 0.0
    %v803 = vmax.f32 %v637, 0.0
    %v804 = vmax.f32 %v639, 0.0
    %v805 = vmax.f32 %v643, 0.0
    %v806 = vmax.f32 %v645, 0.0
    %v807 = vmax.f32 %v649, 0.0
    %v808 = vmax.f32 %v651, 0.0
    %v809 = vmax.f32 %v655, 0.0
    %v810 = vmax.f32 %v657, 0.0
    %v811 = vmax.f32 %v661, 0.0
    %v812 = vmax.f32 %v663, 0.0
    %v813 = vmax.f32 %v667, 0.0
    %v814 = vmax.f32 %v669, 0.0
    %v815 = vmax.f32 %v673, 0.0
    %v816 = vmax.f32 %v675, 0.0
    %v817 = vmax.f32 %v679, 0.0
    %v818 = vmax.f32 %v681, 0.0
    %v819 = vmax.f32 %v685, 0.0
    %v820 = vmax.f32 %v687, 0.0
    %v821 = vmax.f32 %v691, 0.0
    %v822 = vmax.f32 %v693, 0.0
    %v823 = vmax.f32 %v697, 0.0
    %v824 = vmax.f32 %v699, 0.0
    %v825 = vmax.f32 %v703, 0.0
    %v826 = vmax.f32 %v705, 0.0
    %v827 = vmax.f32 %v709, 0.0
    %v828 = vmax.f32 %v711, 0.0
    %v829 = vmax.f32 %v715, 0.0
    %v830 = vmax.f32 %v717, 0.0
    %v831 = vmax.f32 %v721, 0.0
    %v832 = vmax.f32 %v723, 0.0
    %v833 = vmax.f32 %v727, 0.0
    %v834 = vmax.f32 %v729, 0.0
    %v835 = vmax.f32 %v733, 0.0
    %v836 = vmax.f32 %v735, 0.0
    %v837 = vmax.f32 %v739, 0.0
    %v838 = vmax.f32 %v741, 0.0
    %v839 = vmax.f32 %v745, 0.0
    %v840 = vmax.f32 %v747, 0.0
    %v841 = vmax.f32 %v751, 0.0
    %v842 = vmax.f32 %v753, 0.0
    %v843 = vmax.f32 %v757, 0.0
    %v844 = vmax.f32 %v759, 0.0
    %v845 = vmax.f32 %v763, 0.0
    %v846 = vmax.f32 %v765, 0.0
    %v847 = vmax.f32 %v769, 0.0
    %v848 = vmax.f32 %v771, 0.0
    %v849 = vmax.f32 %v775, 0.0
    %v850 = vmax.f32 %v777, 0.0
    %v851 = vmax.f32 %v781, 0.0
    %v852 = vmax.f32 %v783, 0.0
    %v853 = vmax.f32 %v787, 0.0
    %v854 = vmax.f32 %v789, 0.0
    %v855 = vld [vmem:[%s5] sm:$0xff]
    %v856 = vld [vmem:[%s5 + $0x8] sm:$0xff]
    %v857 = vld [vmem:[%s5 + $0x10] sm:$0xff]
    %v858 = vld [vmem:[%s5 + $0x18] sm:$0xff]
    %v859 = vld [vmem:[%s5 + $0x20] sm:$0xff]
    %v860 = vld [vmem:[%s5 + $0x28] sm:$0xff]
    %v861 = vld [vmem:[%s5 + $0x30] sm:$0xff]
    %v862 = vld [vmem:[%s5 + $0x38] sm:$0xff]
    %v863 = vld [vmem:[%s5 + $0x40] sm:$0xff]
    %v864 = vld [vmem:[%s5 + $0x48] sm:$0xff]
    %v865 = vld [vmem:[%s5 + $0x50] sm:$0xff]
    %v866 = vld [vmem:[%s5 + $0x58] sm:$0xff]
    %v867 = vld [vmem:[%s5 + $0x60] sm:$0xff]
    %v868 = vld [vmem:[%s5 + $0x68] sm:$0xff]
    %v869 = vld [vmem:[%s5 + $0x70] sm:$0xff]
    %v870 = vld [vmem:[%s5 + $0x78] sm:$0xff]
    %v871 = vld [vmem:[%s5 + $0x80] sm:$0xff]
    %v872 = vld [vmem:[%s5 + $0x88] sm:$0xff]
    %v873 = vld [vmem:[%s5 + $0x90] sm:$0xff]
    %v874 = vld [vmem:[%s5 + $0x98] sm:$0xff]
    %v875 = vld [vmem:[%s5 + $0xa0] sm:$0xff]
    %v876 = vld [vmem:[%s5 + $0xa8] sm:$0xff]
    %v877 = vld [vmem:[%s5 + $0xb0] sm:$0xff]
    %v878 = vld [vmem:[%s5 + $0xb8] sm:$0xff]
    %v879 = vld [vmem:[%s5 + $0xc0] sm:$0xff]
    %v880 = vld [vmem:[%s5 + $0xc8] sm:$0xff]
    %v881 = vld [vmem:[%s5 + $0xd0] sm:$0xff]
    %v882 = vld [vmem:[%s5 + $0xd8] sm:$0xff]
    %v883 = vld [vmem:[%s5 + $0xe0] sm:$0xff]
    %v884 = vld [vmem:[%s5 + $0xe8] sm:$0xff]
    %v885 = vld [vmem:[%s5 + $0xf0] sm:$0xff]
    %v886 = vld [vmem:[%s5 + $0xf8] sm:$0xff]
    %v887 = vunpack.c.l.bf16 %v855
    %v888 = vunpack.c.h.bf16 %v855
    %v889 = vunpack.c.l.bf16 %v856
    %v890 = vunpack.c.h.bf16 %v856
    %v891 = vunpack.c.l.bf16 %v857
    %v892 = vunpack.c.h.bf16 %v857
    %v893 = vunpack.c.l.bf16 %v858
    %v894 = vunpack.c.h.bf16 %v858
    %v895 = vunpack.c.l.bf16 %v859
    %v896 = vunpack.c.h.bf16 %v859
    %v897 = vunpack.c.l.bf16 %v860
    %v898 = vunpack.c.h.bf16 %v860
    %v899 = vunpack.c.l.bf16 %v861
    %v900 = vunpack.c.h.bf16 %v861
    %v901 = vunpack.c.l.bf16 %v862
    %v902 = vunpack.c.h.bf16 %v862
    %v903 = vunpack.c.l.bf16 %v863
    %v904 = vunpack.c.h.bf16 %v863
    %v905 = vunpack.c.l.bf16 %v864
    %v906 = vunpack.c.h.bf16 %v864
    %v907 = vunpack.c.l.bf16 %v865
    %v908 = vunpack.c.h.bf16 %v865
    %v909 = vunpack.c.l.bf16 %v866
    %v910 = vunpack.c.h.bf16 %v866
    %v911 = vunpack.c.l.bf16 %v867
    %v912 = vunpack.c.h.bf16 %v867
    %v913 = vunpack.c.l.bf16 %v868
    %v914 = vunpack.c.h.bf16 %v868
    %v915 = vunpack.c.l.bf16 %v869
    %v916 = vunpack.c.h.bf16 %v869
    %v917 = vunpack.c.l.bf16 %v870
    %v918 = vunpack.c.h.bf16 %v870
    %v919 = vunpack.c.l.bf16 %v871
    %v920 = vunpack.c.h.bf16 %v871
    %v921 = vunpack.c.l.bf16 %v872
    %v922 = vunpack.c.h.bf16 %v872
    %v923 = vunpack.c.l.bf16 %v873
    %v924 = vunpack.c.h.bf16 %v873
    %v925 = vunpack.c.l.bf16 %v874
    %v926 = vunpack.c.h.bf16 %v874
    %v927 = vunpack.c.l.bf16 %v875
    %v928 = vunpack.c.h.bf16 %v875
    %v929 = vunpack.c.l.bf16 %v876
    %v930 = vunpack.c.h.bf16 %v876
    %v931 = vunpack.c.l.bf16 %v877
    %v932 = vunpack.c.h.bf16 %v877
    %v933 = vunpack.c.l.bf16 %v878
    %v934 = vunpack.c.h.bf16 %v878
    %v935 = vunpack.c.l.bf16 %v879
    %v936 = vunpack.c.h.bf16 %v879
    %v937 = vunpack.c.l.bf16 %v880
    %v938 = vunpack.c.h.bf16 %v880
    %v939 = vunpack.c.l.bf16 %v881
    %v940 = vunpack.c.h.bf16 %v881
    %v941 = vunpack.c.l.bf16 %v882
    %v942 = vunpack.c.h.bf16 %v882
    %v943 = vunpack.c.l.bf16 %v883
    %v944 = vunpack.c.h.bf16 %v883
    %v945 = vunpack.c.l.bf16 %v884
    %v946 = vunpack.c.h.bf16 %v884
    %v947 = vunpack.c.l.bf16 %v885
    %v948 = vunpack.c.h.bf16 %v885
    %v949 = vunpack.c.l.bf16 %v886
    %v950 = vunpack.c.h.bf16 %v886
    %v951 = vld [vmem:[%s6] sm:$0x3]
    %v953 = vlaneseq
    %v954 = vshrl.u32 %v953, 7
    %v955 = vsub.s32 0, %v954
    %v956 = vrot.slane %v951, %v955
    %v957 = vlaneseq
    %v958 = vshrl.u32 %v957, 7
    %v959 = vsub.s32 1, %v958
    %v960 = vrot.slane %v951, %v959
    %963 = vmatprep.subr.mxu0 %v918
    %964 = vmatpush1.msra.mxu0 %v917
    %965 = vmatprep.subr.mxu0 %v916
    %966 = vmatpush1.msra.mxu0 %v915
    %967 = vmatprep.subr.mxu0 %v914
    %968 = vmatpush1.msra.mxu0 %v913
    %969 = vmatprep.subr.mxu0 %v912
    %970 = vmatpush1.msra.mxu0 %v911
    %971 = vmatprep.subr.mxu0 %v910
    %972 = vmatpush1.msra.mxu0 %v909
    %973 = vmatprep.subr.mxu0 %v908
    %974 = vmatpush1.msra.mxu0 %v907
    %975 = vmatprep.subr.mxu0 %v906
    %976 = vmatpush1.msra.mxu0 %v905
    %977 = vmatprep.subr.mxu0 %v904
    %978 = vmatpush1.msra.mxu0 %v903
    %979 = vmatprep.subr.mxu0 %v902
    %980 = vmatpush1.msra.mxu0 %v901
    %981 = vmatprep.subr.mxu0 %v900
    %982 = vmatpush1.msra.mxu0 %v899
    %983 = vmatprep.subr.mxu0 %v898
    %984 = vmatpush1.msra.mxu0 %v897
    %985 = vmatprep.subr.mxu0 %v896
    %986 = vmatpush1.msra.mxu0 %v895
    %987 = vmatprep.subr.mxu0 %v894
    %988 = vmatpush1.msra.mxu0 %v893
    %989 = vmatprep.subr.mxu0 %v892
    %990 = vmatpush1.msra.mxu0 %v891
    %991 = vmatprep.subr.mxu0 %v890
    %992 = vmatpush1.msra.mxu0 %v889
    %993 = vmatprep.subr.mxu0 %v888
    %994 = vmatpush1.msra.mxu0 %v887
    %995 = vmatprep.subr.mxu0 %v950
    %996 = vmatpush2.msra.mxu0 %v949
    %997 = vmatprep.subr.mxu0 %v948
    %998 = vmatpush2.msra.mxu0 %v947
    %999 = vmatprep.subr.mxu0 %v946
    %1000 = vmatpush2.msra.mxu0 %v945
    %1001 = vmatprep.subr.mxu0 %v944
    %1002 = vmatpush2.msra.mxu0 %v943
    %1003 = vmatprep.subr.mxu0 %v942
    %1004 = vmatpush2.msra.mxu0 %v941
    %1005 = vmatprep.subr.mxu0 %v940
    %1006 = vmatpush2.msra.mxu0 %v939
    %1007 = vmatprep.subr.mxu0 %v938
    %1008 = vmatpush2.msra.mxu0 %v937
    %1009 = vmatprep.subr.mxu0 %v936
    %1010 = vmatpush2.msra.mxu0 %v935
    %1011 = vmatprep.subr.mxu0 %v934
    %1012 = vmatpush2.msra.mxu0 %v933
    %1013 = vmatprep.subr.mxu0 %v932
    %1014 = vmatpush2.msra.mxu0 %v931
    %1015 = vmatprep.subr.mxu0 %v930
    %1016 = vmatpush2.msra.mxu0 %v929
    %1017 = vmatprep.subr.mxu0 %v928
    %1018 = vmatpush2.msra.mxu0 %v927
    %1019 = vmatprep.subr.mxu0 %v926
    %1020 = vmatpush2.msra.mxu0 %v925
    %1021 = vmatprep.subr.mxu0 %v924
    %1022 = vmatpush2.msra.mxu0 %v923
    %1023 = vmatprep.subr.mxu0 %v922
    %1024 = vmatpush2.msra.mxu0 %v921
    %1025 = vmatprep.subr.mxu0 %v920
    %1026 = vmatpush2.msra.mxu0 %v919
    %1027 = vmatprep.mubr.f32.mxu0 %v792
    %1028 = vmatmul.mubr.f32.gmra.mxu0 %v791
    %v1029 = vpop.f32.mrf.mxu0
    %v1030 = vadd.f32 %v956, %v1029
    %v1031 = vpop.f32.mrf.mxu0
    %v1032 = vadd.f32 %v960, %v1031
    %1033 = vmatprep.mubr.f32.mxu0 %v794
    %1034 = vmatmul.mubr.f32.gmra.mxu0 %v793
    %v1035 = vpop.f32.mrf.mxu0
    %v1036 = vadd.f32 %v956, %v1035
    %v1037 = vpop.f32.mrf.mxu0
    %v1038 = vadd.f32 %v960, %v1037
    %1039 = vmatprep.mubr.f32.mxu0 %v796
    %1040 = vmatmul.mubr.f32.gmra.mxu0 %v795
    %v1041 = vpop.f32.mrf.mxu0
    %v1042 = vadd.f32 %v956, %v1041
    %v1043 = vpop.f32.mrf.mxu0
    %v1044 = vadd.f32 %v960, %v1043
    %1045 = vmatprep.mubr.f32.mxu0 %v798
    %1046 = vmatmul.mubr.f32.gmra.mxu0 %v797
    %v1047 = vpop.f32.mrf.mxu0
    %v1048 = vadd.f32 %v956, %v1047
    %v1049 = vpop.f32.mrf.mxu0
    %v1050 = vadd.f32 %v960, %v1049
    %1051 = vmatprep.mubr.f32.mxu0 %v800
    %1052 = vmatmul.mubr.f32.gmra.mxu0 %v799
    %v1053 = vpop.f32.mrf.mxu0
    %v1054 = vadd.f32 %v956, %v1053
    %v1055 = vpop.f32.mrf.mxu0
    %v1056 = vadd.f32 %v960, %v1055
    %1057 = vmatprep.mubr.f32.mxu0 %v802
    %1058 = vmatmul.mubr.f32.gmra.mxu0 %v801
    %v1059 = vpop.f32.mrf.mxu0
    %v1060 = vadd.f32 %v956, %v1059
    %v1061 = vpop.f32.mrf.mxu0
    %v1062 = vadd.f32 %v960, %v1061
    %1063 = vmatprep.mubr.f32.mxu0 %v804
    %1064 = vmatmul.mubr.f32.gmra.mxu0 %v803
    %v1065 = vpop.f32.mrf.mxu0
    %v1066 = vadd.f32 %v956, %v1065
    %v1067 = vpop.f32.mrf.mxu0
    %v1068 = vadd.f32 %v960, %v1067
    %1069 = vmatprep.mubr.f32.mxu0 %v806
    %1070 = vmatmul.mubr.f32.gmra.mxu0 %v805
    %v1071 = vpop.f32.mrf.mxu0
    %v1072 = vadd.f32 %v956, %v1071
    %v1073 = vpop.f32.mrf.mxu0
    %v1074 = vadd.f32 %v960, %v1073
    %1075 = vmatprep.mubr.f32.mxu0 %v808
    %1076 = vmatmul.mubr.f32.gmra.mxu0 %v807
    %v1077 = vpop.f32.mrf.mxu0
    %v1078 = vadd.f32 %v956, %v1077
    %v1079 = vpop.f32.mrf.mxu0
    %v1080 = vadd.f32 %v960, %v1079
    %1081 = vmatprep.mubr.f32.mxu0 %v810
    %1082 = vmatmul.mubr.f32.gmra.mxu0 %v809
    %v1083 = vpop.f32.mrf.mxu0
    %v1084 = vadd.f32 %v956, %v1083
    %v1085 = vpop.f32.mrf.mxu0
    %v1086 = vadd.f32 %v960, %v1085
    %1087 = vmatprep.mubr.f32.mxu0 %v812
    %1088 = vmatmul.mubr.f32.gmra.mxu0 %v811
    %v1089 = vpop.f32.mrf.mxu0
    %v1090 = vadd.f32 %v956, %v1089
    %v1091 = vpop.f32.mrf.mxu0
    %v1092 = vadd.f32 %v960, %v1091
    %1093 = vmatprep.mubr.f32.mxu0 %v814
    %1094 = vmatmul.mubr.f32.gmra.mxu0 %v813
    %v1095 = vpop.f32.mrf.mxu0
    %v1096 = vadd.f32 %v956, %v1095
    %v1097 = vpop.f32.mrf.mxu0
    %v1098 = vadd.f32 %v960, %v1097
    %1099 = vmatprep.mubr.f32.mxu0 %v816
    %1100 = vmatmul.mubr.f32.gmra.mxu0 %v815
    %v1101 = vpop.f32.mrf.mxu0
    %v1102 = vadd.f32 %v956, %v1101
    %v1103 = vpop.f32.mrf.mxu0
    %v1104 = vadd.f32 %v960, %v1103
    %1105 = vmatprep.mubr.f32.mxu0 %v818
    %1106 = vmatmul.mubr.f32.gmra.mxu0 %v817
    %v1107 = vpop.f32.mrf.mxu0
    %v1108 = vadd.f32 %v956, %v1107
    %v1109 = vpop.f32.mrf.mxu0
    %v1110 = vadd.f32 %v960, %v1109
    %1111 = vmatprep.mubr.f32.mxu0 %v820
    %1112 = vmatmul.mubr.f32.gmra.mxu0 %v819
    %v1113 = vpop.f32.mrf.mxu0
    %v1114 = vadd.f32 %v956, %v1113
    %v1115 = vpop.f32.mrf.mxu0
    %v1116 = vadd.f32 %v960, %v1115
    %1117 = vmatprep.mubr.f32.mxu0 %v822
    %1118 = vmatmul.mubr.f32.gmra.mxu0 %v821
    %v1119 = vpop.f32.mrf.mxu0
    %v1120 = vadd.f32 %v956, %v1119
    %v1121 = vpop.f32.mrf.mxu0
    %v1122 = vadd.f32 %v960, %v1121
    %1123 = vmatprep.mubr.f32.mxu0 %v824
    %1124 = vmatmul.mubr.f32.gmra.mxu0 %v823
    %v1125 = vpop.f32.mrf.mxu0
    %v1126 = vadd.f32 %v956, %v1125
    %v1127 = vpop.f32.mrf.mxu0
    %v1128 = vadd.f32 %v960, %v1127
    %1129 = vmatprep.mubr.f32.mxu0 %v826
    %1130 = vmatmul.mubr.f32.gmra.mxu0 %v825
    %v1131 = vpop.f32.mrf.mxu0
    %v1132 = vadd.f32 %v956, %v1131
    %v1133 = vpop.f32.mrf.mxu0
    %v1134 = vadd.f32 %v960, %v1133
    %1135 = vmatprep.mubr.f32.mxu0 %v828
    %1136 = vmatmul.mubr.f32.gmra.mxu0 %v827
    %v1137 = vpop.f32.mrf.mxu0
    %v1138 = vadd.f32 %v956, %v1137
    %v1139 = vpop.f32.mrf.mxu0
    %v1140 = vadd.f32 %v960, %v1139
    %1141 = vmatprep.mubr.f32.mxu0 %v830
    %1142 = vmatmul.mubr.f32.gmra.mxu0 %v829
    %v1143 = vpop.f32.mrf.mxu0
    %v1144 = vadd.f32 %v956, %v1143
    %v1145 = vpop.f32.mrf.mxu0
    %v1146 = vadd.f32 %v960, %v1145
    %1147 = vmatprep.mubr.f32.mxu0 %v832
    %1148 = vmatmul.mubr.f32.gmra.mxu0 %v831
    %v1149 = vpop.f32.mrf.mxu0
    %v1150 = vadd.f32 %v956, %v1149
    %v1151 = vpop.f32.mrf.mxu0
    %v1152 = vadd.f32 %v960, %v1151
    %1153 = vmatprep.mubr.f32.mxu0 %v834
    %1154 = vmatmul.mubr.f32.gmra.mxu0 %v833
    %v1155 = vpop.f32.mrf.mxu0
    %v1156 = vadd.f32 %v956, %v1155
    %v1157 = vpop.f32.mrf.mxu0
    %v1158 = vadd.f32 %v960, %v1157
    %1159 = vmatprep.mubr.f32.mxu0 %v836
    %1160 = vmatmul.mubr.f32.gmra.mxu0 %v835
    %v1161 = vpop.f32.mrf.mxu0
    %v1162 = vadd.f32 %v956, %v1161
    %v1163 = vpop.f32.mrf.mxu0
    %v1164 = vadd.f32 %v960, %v1163
    %1165 = vmatprep.mubr.f32.mxu0 %v838
    %1166 = vmatmul.mubr.f32.gmra.mxu0 %v837
    %v1167 = vpop.f32.mrf.mxu0
    %v1168 = vadd.f32 %v956, %v1167
    %v1169 = vpop.f32.mrf.mxu0
    %v1170 = vadd.f32 %v960, %v1169
    %1171 = vmatprep.mubr.f32.mxu0 %v840
    %1172 = vmatmul.mubr.f32.gmra.mxu0 %v839
    %v1173 = vpop.f32.mrf.mxu0
    %v1174 = vadd.f32 %v956, %v1173
    %v1175 = vpop.f32.mrf.mxu0
    %v1176 = vadd.f32 %v960, %v1175
    %1177 = vmatprep.mubr.f32.mxu0 %v842
    %1178 = vmatmul.mubr.f32.gmra.mxu0 %v841
    %v1179 = vpop.f32.mrf.mxu0
    %v1180 = vadd.f32 %v956, %v1179
    %v1181 = vpop.f32.mrf.mxu0
    %v1182 = vadd.f32 %v960, %v1181
    %1183 = vmatprep.mubr.f32.mxu0 %v844
    %1184 = vmatmul.mubr.f32.gmra.mxu0 %v843
    %v1185 = vpop.f32.mrf.mxu0
    %v1186 = vadd.f32 %v956, %v1185
    %v1187 = vpop.f32.mrf.mxu0
    %v1188 = vadd.f32 %v960, %v1187
    %1189 = vmatprep.mubr.f32.mxu0 %v846
    %1190 = vmatmul.mubr.f32.gmra.mxu0 %v845
    %v1191 = vpop.f32.mrf.mxu0
    %v1192 = vadd.f32 %v956, %v1191
    %v1193 = vpop.f32.mrf.mxu0
    %v1194 = vadd.f32 %v960, %v1193
    %1195 = vmatprep.mubr.f32.mxu0 %v848
    %1196 = vmatmul.mubr.f32.gmra.mxu0 %v847
    %v1197 = vpop.f32.mrf.mxu0
    %v1198 = vadd.f32 %v956, %v1197
    %v1199 = vpop.f32.mrf.mxu0
    %v1200 = vadd.f32 %v960, %v1199
    %1201 = vmatprep.mubr.f32.mxu0 %v850
    %1202 = vmatmul.mubr.f32.gmra.mxu0 %v849
    %v1203 = vpop.f32.mrf.mxu0
    %v1204 = vadd.f32 %v956, %v1203
    %v1205 = vpop.f32.mrf.mxu0
    %v1206 = vadd.f32 %v960, %v1205
    %1207 = vmatprep.mubr.f32.mxu0 %v852
    %1208 = vmatmul.mubr.f32.gmra.mxu0 %v851
    %v1209 = vpop.f32.mrf.mxu0
    %v1210 = vadd.f32 %v956, %v1209
    %v1211 = vpop.f32.mrf.mxu0
    %v1212 = vadd.f32 %v960, %v1211
    %1213 = vmatprep.mubr.f32.mxu0 %v854
    %1214 = vmatmul.mubr.f32.gmra.mxu0 %v853
    %v1215 = vpop.f32.mrf.mxu0
    %v1216 = vadd.f32 %v956, %v1215
    %v1217 = vpop.f32.mrf.mxu0
    %v1218 = vadd.f32 %v960, %v1217
    %1219 = vdwg.mxu0
    %v1220 = vmax.f32 %v1030, 0.0
    %v1221 = vmax.f32 %v1032, 0.0
    %v1222 = vmax.f32 %v1036, 0.0
    %v1223 = vmax.f32 %v1038, 0.0
    %v1224 = vmax.f32 %v1042, 0.0
    %v1225 = vmax.f32 %v1044, 0.0
    %v1226 = vmax.f32 %v1048, 0.0
    %v1227 = vmax.f32 %v1050, 0.0
    %v1228 = vmax.f32 %v1054, 0.0
    %v1229 = vmax.f32 %v1056, 0.0
    %v1230 = vmax.f32 %v1060, 0.0
    %v1231 = vmax.f32 %v1062, 0.0
    %v1232 = vmax.f32 %v1066, 0.0
    %v1233 = vmax.f32 %v1068, 0.0
    %v1234 = vmax.f32 %v1072, 0.0
    %v1235 = vmax.f32 %v1074, 0.0
    %v1236 = vmax.f32 %v1078, 0.0
    %v1237 = vmax.f32 %v1080, 0.0
    %v1238 = vmax.f32 %v1084, 0.0
    %v1239 = vmax.f32 %v1086, 0.0
    %v1240 = vmax.f32 %v1090, 0.0
    %v1241 = vmax.f32 %v1092, 0.0
    %v1242 = vmax.f32 %v1096, 0.0
    %v1243 = vmax.f32 %v1098, 0.0
    %v1244 = vmax.f32 %v1102, 0.0
    %v1245 = vmax.f32 %v1104, 0.0
    %v1246 = vmax.f32 %v1108, 0.0
    %v1247 = vmax.f32 %v1110, 0.0
    %v1248 = vmax.f32 %v1114, 0.0
    %v1249 = vmax.f32 %v1116, 0.0
    %v1250 = vmax.f32 %v1120, 0.0
    %v1251 = vmax.f32 %v1122, 0.0
    %v1252 = vmax.f32 %v1126, 0.0
    %v1253 = vmax.f32 %v1128, 0.0
    %v1254 = vmax.f32 %v1132, 0.0
    %v1255 = vmax.f32 %v1134, 0.0
    %v1256 = vmax.f32 %v1138, 0.0
    %v1257 = vmax.f32 %v1140, 0.0
    %v1258 = vmax.f32 %v1144, 0.0
    %v1259 = vmax.f32 %v1146, 0.0
    %v1260 = vmax.f32 %v1150, 0.0
    %v1261 = vmax.f32 %v1152, 0.0
    %v1262 = vmax.f32 %v1156, 0.0
    %v1263 = vmax.f32 %v1158, 0.0
    %v1264 = vmax.f32 %v1162, 0.0
    %v1265 = vmax.f32 %v1164, 0.0
    %v1266 = vmax.f32 %v1168, 0.0
    %v1267 = vmax.f32 %v1170, 0.0
    %v1268 = vmax.f32 %v1174, 0.0
    %v1269 = vmax.f32 %v1176, 0.0
    %v1270 = vmax.f32 %v1180, 0.0
    %v1271 = vmax.f32 %v1182, 0.0
    %v1272 = vmax.f32 %v1186, 0.0
    %v1273 = vmax.f32 %v1188, 0.0
    %v1274 = vmax.f32 %v1192, 0.0
    %v1275 = vmax.f32 %v1194, 0.0
    %v1276 = vmax.f32 %v1198, 0.0
    %v1277 = vmax.f32 %v1200, 0.0
    %v1278 = vmax.f32 %v1204, 0.0
    %v1279 = vmax.f32 %v1206, 0.0
    %v1280 = vmax.f32 %v1210, 0.0
    %v1281 = vmax.f32 %v1212, 0.0
    %v1282 = vmax.f32 %v1216, 0.0
    %v1283 = vmax.f32 %v1218, 0.0
    %v1284 = vld [vmem:[#allocation2] sm:$0xff]
    %v1285 = vld [vmem:[#allocation2 + $0x8] sm:$0xff]
    %v1286 = vld [vmem:[#allocation2 + $0x10] sm:$0xff]
    %v1287 = vld [vmem:[#allocation2 + $0x18] sm:$0xff]
    %v1288 = vld [vmem:[#allocation2 + $0x20] sm:$0xff]
    %v1289 = vld [vmem:[#allocation2 + $0x28] sm:$0xff]
    %v1290 = vld [vmem:[#allocation2 + $0x30] sm:$0xff]
    %v1291 = vld [vmem:[#allocation2 + $0x38] sm:$0xff]
    %v1292 = vld [vmem:[#allocation2 + $0x40] sm:$0xff]
    %v1293 = vld [vmem:[#allocation2 + $0x48] sm:$0xff]
    %v1294 = vld [vmem:[#allocation2 + $0x50] sm:$0xff]
    %v1295 = vld [vmem:[#allocation2 + $0x58] sm:$0xff]
    %v1296 = vld [vmem:[#allocation2 + $0x60] sm:$0xff]
    %v1297 = vld [vmem:[#allocation2 + $0x68] sm:$0xff]
    %v1298 = vld [vmem:[#allocation2 + $0x70] sm:$0xff]
    %v1299 = vld [vmem:[#allocation2 + $0x78] sm:$0xff]
    %v1300 = vld [vmem:[#allocation2 + $0x80] sm:$0xff]
    %v1301 = vld [vmem:[#allocation2 + $0x88] sm:$0xff]
    %v1302 = vld [vmem:[#allocation2 + $0x90] sm:$0xff]
    %v1303 = vld [vmem:[#allocation2 + $0x98] sm:$0xff]
    %v1304 = vld [vmem:[#allocation2 + $0xa0] sm:$0xff]
    %v1305 = vld [vmem:[#allocation2 + $0xa8] sm:$0xff]
    %v1306 = vld [vmem:[#allocation2 + $0xb0] sm:$0xff]
    %v1307 = vld [vmem:[#allocation2 + $0xb8] sm:$0xff]
    %v1308 = vld [vmem:[#allocation2 + $0xc0] sm:$0xff]
    %v1309 = vld [vmem:[#allocation2 + $0xc8] sm:$0xff]
    %v1310 = vld [vmem:[#allocation2 + $0xd0] sm:$0xff]
    %v1311 = vld [vmem:[#allocation2 + $0xd8] sm:$0xff]
    %v1312 = vld [vmem:[#allocation2 + $0xe0] sm:$0xff]
    %v1313 = vld [vmem:[#allocation2 + $0xe8] sm:$0xff]
    %v1314 = vld [vmem:[#allocation2 + $0xf0] sm:$0xff]
    %v1315 = vld [vmem:[#allocation2 + $0xf8] sm:$0xff]
    %v1316 = vld [vmem:[#allocation2 + $0x100] sm:$0xff]
    %v1317 = vld [vmem:[#allocation2 + $0x108] sm:$0xff]
    %v1318 = vld [vmem:[#allocation2 + $0x110] sm:$0xff]
    %v1319 = vld [vmem:[#allocation2 + $0x118] sm:$0xff]
    %v1320 = vld [vmem:[#allocation2 + $0x120] sm:$0xff]
    %v1321 = vld [vmem:[#allocation2 + $0x128] sm:$0xff]
    %v1322 = vld [vmem:[#allocation2 + $0x130] sm:$0xff]
    %v1323 = vld [vmem:[#allocation2 + $0x138] sm:$0xff]
    %v1324 = vld [vmem:[#allocation2 + $0x140] sm:$0xff]
    %v1325 = vld [vmem:[#allocation2 + $0x148] sm:$0xff]
    %v1326 = vld [vmem:[#allocation2 + $0x150] sm:$0xff]
    %v1327 = vld [vmem:[#allocation2 + $0x158] sm:$0xff]
    %v1328 = vld [vmem:[#allocation2 + $0x160] sm:$0xff]
    %v1329 = vld [vmem:[#allocation2 + $0x168] sm:$0xff]
    %v1330 = vld [vmem:[#allocation2 + $0x170] sm:$0xff]
    %v1331 = vld [vmem:[#allocation2 + $0x178] sm:$0xff]
    %v1332 = vld [vmem:[#allocation2 + $0x180] sm:$0xff]
    %v1333 = vld [vmem:[#allocation2 + $0x188] sm:$0xff]
    %v1334 = vld [vmem:[#allocation2 + $0x190] sm:$0xff]
    %v1335 = vld [vmem:[#allocation2 + $0x198] sm:$0xff]
    %v1336 = vld [vmem:[#allocation2 + $0x1a0] sm:$0xff]
    %v1337 = vld [vmem:[#allocation2 + $0x1a8] sm:$0xff]
    %v1338 = vld [vmem:[#allocation2 + $0x1b0] sm:$0xff]
    %v1339 = vld [vmem:[#allocation2 + $0x1b8] sm:$0xff]
    %v1340 = vld [vmem:[#allocation2 + $0x1c0] sm:$0xff]
    %v1341 = vld [vmem:[#allocation2 + $0x1c8] sm:$0xff]
    %v1342 = vld [vmem:[#allocation2 + $0x1d0] sm:$0xff]
    %v1343 = vld [vmem:[#allocation2 + $0x1d8] sm:$0xff]
    %v1344 = vld [vmem:[#allocation2 + $0x1e0] sm:$0xff]
    %v1345 = vld [vmem:[#allocation2 + $0x1e8] sm:$0xff]
    %v1346 = vld [vmem:[#allocation2 + $0x1f0] sm:$0xff]
    %v1347 = vld [vmem:[#allocation2 + $0x1f8] sm:$0xff]
    %v1348 = vld [vmem:[#allocation2 + $0x200] sm:$0xff]
    %v1349 = vld [vmem:[#allocation2 + $0x208] sm:$0xff]
    %v1350 = vld [vmem:[#allocation2 + $0x210] sm:$0xff]
    %v1351 = vld [vmem:[#allocation2 + $0x218] sm:$0xff]
    %v1352 = vld [vmem:[#allocation2 + $0x220] sm:$0xff]
    %v1353 = vld [vmem:[#allocation2 + $0x228] sm:$0xff]
    %v1354 = vld [vmem:[#allocation2 + $0x230] sm:$0xff]
    %v1355 = vld [vmem:[#allocation2 + $0x238] sm:$0xff]
    %v1356 = vld [vmem:[#allocation2 + $0x240] sm:$0xff]
    %v1357 = vld [vmem:[#allocation2 + $0x248] sm:$0xff]
    %v1358 = vld [vmem:[#allocation2 + $0x250] sm:$0xff]
    %v1359 = vld [vmem:[#allocation2 + $0x258] sm:$0xff]
    %v1360 = vld [vmem:[#allocation2 + $0x260] sm:$0xff]
    %v1361 = vld [vmem:[#allocation2 + $0x268] sm:$0xff]
    %v1362 = vld [vmem:[#allocation2 + $0x270] sm:$0xff]
    %v1363 = vld [vmem:[#allocation2 + $0x278] sm:$0xff]
    %v1364 = vld [vmem:[#allocation2 + $0x280] sm:$0xff]
    %v1365 = vld [vmem:[#allocation2 + $0x288] sm:$0xff]
    %v1366 = vld [vmem:[#allocation2 + $0x290] sm:$0xff]
    %v1367 = vld [vmem:[#allocation2 + $0x298] sm:$0xff]
    %v1368 = vld [vmem:[#allocation2 + $0x2a0] sm:$0xff]
    %v1369 = vld [vmem:[#allocation2 + $0x2a8] sm:$0xff]
    %v1370 = vld [vmem:[#allocation2 + $0x2b0] sm:$0xff]
    %v1371 = vld [vmem:[#allocation2 + $0x2b8] sm:$0xff]
    %v1372 = vld [vmem:[#allocation2 + $0x2c0] sm:$0xff]
    %v1373 = vld [vmem:[#allocation2 + $0x2c8] sm:$0xff]
    %v1374 = vld [vmem:[#allocation2 + $0x2d0] sm:$0xff]
    %v1375 = vld [vmem:[#allocation2 + $0x2d8] sm:$0xff]
    %v1376 = vld [vmem:[#allocation2 + $0x2e0] sm:$0xff]
    %v1377 = vld [vmem:[#allocation2 + $0x2e8] sm:$0xff]
    %v1378 = vld [vmem:[#allocation2 + $0x2f0] sm:$0xff]
    %v1379 = vld [vmem:[#allocation2 + $0x2f8] sm:$0xff]
    %v1380 = vld [vmem:[#allocation2 + $0x300] sm:$0xff]
    %v1381 = vld [vmem:[#allocation2 + $0x308] sm:$0xff]
    %v1382 = vld [vmem:[#allocation2 + $0x310] sm:$0xff]
    %v1383 = vld [vmem:[#allocation2 + $0x318] sm:$0xff]
    %v1384 = vld [vmem:[#allocation2 + $0x320] sm:$0xff]
    %v1385 = vld [vmem:[#allocation2 + $0x328] sm:$0xff]
    %v1386 = vld [vmem:[#allocation2 + $0x330] sm:$0xff]
    %v1387 = vld [vmem:[#allocation2 + $0x338] sm:$0xff]
    %v1388 = vld [vmem:[#allocation2 + $0x340] sm:$0xff]
    %v1389 = vld [vmem:[#allocation2 + $0x348] sm:$0xff]
    %v1390 = vld [vmem:[#allocation2 + $0x350] sm:$0xff]
    %v1391 = vld [vmem:[#allocation2 + $0x358] sm:$0xff]
    %v1392 = vld [vmem:[#allocation2 + $0x360] sm:$0xff]
    %v1393 = vld [vmem:[#allocation2 + $0x368] sm:$0xff]
    %v1394 = vld [vmem:[#allocation2 + $0x370] sm:$0xff]
    %v1395 = vld [vmem:[#allocation2 + $0x378] sm:$0xff]
    %v1396 = vld [vmem:[#allocation2 + $0x380] sm:$0xff]
    %v1397 = vld [vmem:[#allocation2 + $0x388] sm:$0xff]
    %v1398 = vld [vmem:[#allocation2 + $0x390] sm:$0xff]
    %v1399 = vld [vmem:[#allocation2 + $0x398] sm:$0xff]
    %v1400 = vld [vmem:[#allocation2 + $0x3a0] sm:$0xff]
    %v1401 = vld [vmem:[#allocation2 + $0x3a8] sm:$0xff]
    %v1402 = vld [vmem:[#allocation2 + $0x3b0] sm:$0xff]
    %v1403 = vld [vmem:[#allocation2 + $0x3b8] sm:$0xff]
    %v1404 = vld [vmem:[#allocation2 + $0x3c0] sm:$0xff]
    %v1405 = vld [vmem:[#allocation2 + $0x3c8] sm:$0xff]
    %v1406 = vld [vmem:[#allocation2 + $0x3d0] sm:$0xff]
    %v1407 = vld [vmem:[#allocation2 + $0x3d8] sm:$0xff]
    %v1408 = vld [vmem:[#allocation2 + $0x3e0] sm:$0xff]
    %v1409 = vld [vmem:[#allocation2 + $0x3e8] sm:$0xff]
    %v1410 = vld [vmem:[#allocation2 + $0x3f0] sm:$0xff]
    %v1411 = vld [vmem:[#allocation2 + $0x3f8] sm:$0xff]
    %v1412 = vunpack.c.l.bf16 %v1284
    %v1413 = vunpack.c.h.bf16 %v1284
    %v1414 = vunpack.c.l.bf16 %v1285
    %v1415 = vunpack.c.h.bf16 %v1285
    %v1416 = vunpack.c.l.bf16 %v1286
    %v1417 = vunpack.c.h.bf16 %v1286
    %v1418 = vunpack.c.l.bf16 %v1287
    %v1419 = vunpack.c.h.bf16 %v1287
    %v1420 = vunpack.c.l.bf16 %v1288
    %v1421 = vunpack.c.h.bf16 %v1288
    %v1422 = vunpack.c.l.bf16 %v1289
    %v1423 = vunpack.c.h.bf16 %v1289
    %v1424 = vunpack.c.l.bf16 %v1290
    %v1425 = vunpack.c.h.bf16 %v1290
    %v1426 = vunpack.c.l.bf16 %v1291
    %v1427 = vunpack.c.h.bf16 %v1291
    %v1428 = vunpack.c.l.bf16 %v1292
    %v1429 = vunpack.c.h.bf16 %v1292
    %v1430 = vunpack.c.l.bf16 %v1293
    %v1431 = vunpack.c.h.bf16 %v1293
    %v1432 = vunpack.c.l.bf16 %v1294
    %v1433 = vunpack.c.h.bf16 %v1294
    %v1434 = vunpack.c.l.bf16 %v1295
    %v1435 = vunpack.c.h.bf16 %v1295
    %v1436 = vunpack.c.l.bf16 %v1296
    %v1437 = vunpack.c.h.bf16 %v1296
    %v1438 = vunpack.c.l.bf16 %v1297
    %v1439 = vunpack.c.h.bf16 %v1297
    %v1440 = vunpack.c.l.bf16 %v1298
    %v1441 = vunpack.c.h.bf16 %v1298
    %v1442 = vunpack.c.l.bf16 %v1299
    %v1443 = vunpack.c.h.bf16 %v1299
    %v1444 = vunpack.c.l.bf16 %v1300
    %v1445 = vunpack.c.h.bf16 %v1300
    %v1446 = vunpack.c.l.bf16 %v1301
    %v1447 = vunpack.c.h.bf16 %v1301
    %v1448 = vunpack.c.l.bf16 %v1302
    %v1449 = vunpack.c.h.bf16 %v1302
    %v1450 = vunpack.c.l.bf16 %v1303
    %v1451 = vunpack.c.h.bf16 %v1303
    %v1452 = vunpack.c.l.bf16 %v1304
    %v1453 = vunpack.c.h.bf16 %v1304
    %v1454 = vunpack.c.l.bf16 %v1305
    %v1455 = vunpack.c.h.bf16 %v1305
    %v1456 = vunpack.c.l.bf16 %v1306
    %v1457 = vunpack.c.h.bf16 %v1306
    %v1458 = vunpack.c.l.bf16 %v1307
    %v1459 = vunpack.c.h.bf16 %v1307
    %v1460 = vunpack.c.l.bf16 %v1308
    %v1461 = vunpack.c.h.bf16 %v1308
    %v1462 = vunpack.c.l.bf16 %v1309
    %v1463 = vunpack.c.h.bf16 %v1309
    %v1464 = vunpack.c.l.bf16 %v1310
    %v1465 = vunpack.c.h.bf16 %v1310
    %v1466 = vunpack.c.l.bf16 %v1311
    %v1467 = vunpack.c.h.bf16 %v1311
    %v1468 = vunpack.c.l.bf16 %v1312
    %v1469 = vunpack.c.h.bf16 %v1312
    %v1470 = vunpack.c.l.bf16 %v1313
    %v1471 = vunpack.c.h.bf16 %v1313
    %v1472 = vunpack.c.l.bf16 %v1314
    %v1473 = vunpack.c.h.bf16 %v1314
    %v1474 = vunpack.c.l.bf16 %v1315
    %v1475 = vunpack.c.h.bf16 %v1315
    %v1476 = vunpack.c.l.bf16 %v1316
    %v1477 = vunpack.c.h.bf16 %v1316
    %v1478 = vunpack.c.l.bf16 %v1317
    %v1479 = vunpack.c.h.bf16 %v1317
    %v1480 = vunpack.c.l.bf16 %v1318
    %v1481 = vunpack.c.h.bf16 %v1318
    %v1482 = vunpack.c.l.bf16 %v1319
    %v1483 = vunpack.c.h.bf16 %v1319
    %v1484 = vunpack.c.l.bf16 %v1320
    %v1485 = vunpack.c.h.bf16 %v1320
    %v1486 = vunpack.c.l.bf16 %v1321
    %v1487 = vunpack.c.h.bf16 %v1321
    %v1488 = vunpack.c.l.bf16 %v1322
    %v1489 = vunpack.c.h.bf16 %v1322
    %v1490 = vunpack.c.l.bf16 %v1323
    %v1491 = vunpack.c.h.bf16 %v1323
    %v1492 = vunpack.c.l.bf16 %v1324
    %v1493 = vunpack.c.h.bf16 %v1324
    %v1494 = vunpack.c.l.bf16 %v1325
    %v1495 = vunpack.c.h.bf16 %v1325
    %v1496 = vunpack.c.l.bf16 %v1326
    %v1497 = vunpack.c.h.bf16 %v1326
    %v1498 = vunpack.c.l.bf16 %v1327
    %v1499 = vunpack.c.h.bf16 %v1327
    %v1500 = vunpack.c.l.bf16 %v1328
    %v1501 = vunpack.c.h.bf16 %v1328
    %v1502 = vunpack.c.l.bf16 %v1329
    %v1503 = vunpack.c.h.bf16 %v1329
    %v1504 = vunpack.c.l.bf16 %v1330
    %v1505 = vunpack.c.h.bf16 %v1330
    %v1506 = vunpack.c.l.bf16 %v1331
    %v1507 = vunpack.c.h.bf16 %v1331
    %v1508 = vunpack.c.l.bf16 %v1332
    %v1509 = vunpack.c.h.bf16 %v1332
    %v1510 = vunpack.c.l.bf16 %v1333
    %v1511 = vunpack.c.h.bf16 %v1333
    %v1512 = vunpack.c.l.bf16 %v1334
    %v1513 = vunpack.c.h.bf16 %v1334
    %v1514 = vunpack.c.l.bf16 %v1335
    %v1515 = vunpack.c.h.bf16 %v1335
    %v1516 = vunpack.c.l.bf16 %v1336
    %v1517 = vunpack.c.h.bf16 %v1336
    %v1518 = vunpack.c.l.bf16 %v1337
    %v1519 = vunpack.c.h.bf16 %v1337
    %v1520 = vunpack.c.l.bf16 %v1338
    %v1521 = vunpack.c.h.bf16 %v1338
    %v1522 = vunpack.c.l.bf16 %v1339
    %v1523 = vunpack.c.h.bf16 %v1339
    %v1524 = vunpack.c.l.bf16 %v1340
    %v1525 = vunpack.c.h.bf16 %v1340
    %v1526 = vunpack.c.l.bf16 %v1341
    %v1527 = vunpack.c.h.bf16 %v1341
    %v1528 = vunpack.c.l.bf16 %v1342
    %v1529 = vunpack.c.h.bf16 %v1342
    %v1530 = vunpack.c.l.bf16 %v1343
    %v1531 = vunpack.c.h.bf16 %v1343
    %v1532 = vunpack.c.l.bf16 %v1344
    %v1533 = vunpack.c.h.bf16 %v1344
    %v1534 = vunpack.c.l.bf16 %v1345
    %v1535 = vunpack.c.h.bf16 %v1345
    %v1536 = vunpack.c.l.bf16 %v1346
    %v1537 = vunpack.c.h.bf16 %v1346
    %v1538 = vunpack.c.l.bf16 %v1347
    %v1539 = vunpack.c.h.bf16 %v1347
    %v1540 = vunpack.c.l.bf16 %v1348
    %v1541 = vunpack.c.h.bf16 %v1348
    %v1542 = vunpack.c.l.bf16 %v1349
    %v1543 = vunpack.c.h.bf16 %v1349
    %v1544 = vunpack.c.l.bf16 %v1350
    %v1545 = vunpack.c.h.bf16 %v1350
    %v1546 = vunpack.c.l.bf16 %v1351
    %v1547 = vunpack.c.h.bf16 %v1351
    %v1548 = vunpack.c.l.bf16 %v1352
    %v1549 = vunpack.c.h.bf16 %v1352
    %v1550 = vunpack.c.l.bf16 %v1353
    %v1551 = vunpack.c.h.bf16 %v1353
    %v1552 = vunpack.c.l.bf16 %v1354
    %v1553 = vunpack.c.h.bf16 %v1354
    %v1554 = vunpack.c.l.bf16 %v1355
    %v1555 = vunpack.c.h.bf16 %v1355
    %v1556 = vunpack.c.l.bf16 %v1356
    %v1557 = vunpack.c.h.bf16 %v1356
    %v1558 = vunpack.c.l.bf16 %v1357
    %v1559 = vunpack.c.h.bf16 %v1357
    %v1560 = vunpack.c.l.bf16 %v1358
    %v1561 = vunpack.c.h.bf16 %v1358
    %v1562 = vunpack.c.l.bf16 %v1359
    %v1563 = vunpack.c.h.bf16 %v1359
    %v1564 = vunpack.c.l.bf16 %v1360
    %v1565 = vunpack.c.h.bf16 %v1360
    %v1566 = vunpack.c.l.bf16 %v1361
    %v1567 = vunpack.c.h.bf16 %v1361
    %v1568 = vunpack.c.l.bf16 %v1362
    %v1569 = vunpack.c.h.bf16 %v1362
    %v1570 = vunpack.c.l.bf16 %v1363
    %v1571 = vunpack.c.h.bf16 %v1363
    %v1572 = vunpack.c.l.bf16 %v1364
    %v1573 = vunpack.c.h.bf16 %v1364
    %v1574 = vunpack.c.l.bf16 %v1365
    %v1575 = vunpack.c.h.bf16 %v1365
    %v1576 = vunpack.c.l.bf16 %v1366
    %v1577 = vunpack.c.h.bf16 %v1366
    %v1578 = vunpack.c.l.bf16 %v1367
    %v1579 = vunpack.c.h.bf16 %v1367
    %v1580 = vunpack.c.l.bf16 %v1368
    %v1581 = vunpack.c.h.bf16 %v1368
    %v1582 = vunpack.c.l.bf16 %v1369
    %v1583 = vunpack.c.h.bf16 %v1369
    %v1584 = vunpack.c.l.bf16 %v1370
    %v1585 = vunpack.c.h.bf16 %v1370
    %v1586 = vunpack.c.l.bf16 %v1371
    %v1587 = vunpack.c.h.bf16 %v1371
    %v1588 = vunpack.c.l.bf16 %v1372
    %v1589 = vunpack.c.h.bf16 %v1372
    %v1590 = vunpack.c.l.bf16 %v1373
    %v1591 = vunpack.c.h.bf16 %v1373
    %v1592 = vunpack.c.l.bf16 %v1374
    %v1593 = vunpack.c.h.bf16 %v1374
    %v1594 = vunpack.c.l.bf16 %v1375
    %v1595 = vunpack.c.h.bf16 %v1375
    %v1596 = vunpack.c.l.bf16 %v1376
    %v1597 = vunpack.c.h.bf16 %v1376
    %v1598 = vunpack.c.l.bf16 %v1377
    %v1599 = vunpack.c.h.bf16 %v1377
    %v1600 = vunpack.c.l.bf16 %v1378
    %v1601 = vunpack.c.h.bf16 %v1378
    %v1602 = vunpack.c.l.bf16 %v1379
    %v1603 = vunpack.c.h.bf16 %v1379
    %v1604 = vunpack.c.l.bf16 %v1380
    %v1605 = vunpack.c.h.bf16 %v1380
    %v1606 = vunpack.c.l.bf16 %v1381
    %v1607 = vunpack.c.h.bf16 %v1381
    %v1608 = vunpack.c.l.bf16 %v1382
    %v1609 = vunpack.c.h.bf16 %v1382
    %v1610 = vunpack.c.l.bf16 %v1383
    %v1611 = vunpack.c.h.bf16 %v1383
    %v1612 = vunpack.c.l.bf16 %v1384
    %v1613 = vunpack.c.h.bf16 %v1384
    %v1614 = vunpack.c.l.bf16 %v1385
    %v1615 = vunpack.c.h.bf16 %v1385
    %v1616 = vunpack.c.l.bf16 %v1386
    %v1617 = vunpack.c.h.bf16 %v1386
    %v1618 = vunpack.c.l.bf16 %v1387
    %v1619 = vunpack.c.h.bf16 %v1387
    %v1620 = vunpack.c.l.bf16 %v1388
    %v1621 = vunpack.c.h.bf16 %v1388
    %v1622 = vunpack.c.l.bf16 %v1389
    %v1623 = vunpack.c.h.bf16 %v1389
    %v1624 = vunpack.c.l.bf16 %v1390
    %v1625 = vunpack.c.h.bf16 %v1390
    %v1626 = vunpack.c.l.bf16 %v1391
    %v1627 = vunpack.c.h.bf16 %v1391
    %v1628 = vunpack.c.l.bf16 %v1392
    %v1629 = vunpack.c.h.bf16 %v1392
    %v1630 = vunpack.c.l.bf16 %v1393
    %v1631 = vunpack.c.h.bf16 %v1393
    %v1632 = vunpack.c.l.bf16 %v1394
    %v1633 = vunpack.c.h.bf16 %v1394
    %v1634 = vunpack.c.l.bf16 %v1395
    %v1635 = vunpack.c.h.bf16 %v1395
    %v1636 = vunpack.c.l.bf16 %v1396
    %v1637 = vunpack.c.h.bf16 %v1396
    %v1638 = vunpack.c.l.bf16 %v1397
    %v1639 = vunpack.c.h.bf16 %v1397
    %v1640 = vunpack.c.l.bf16 %v1398
    %v1641 = vunpack.c.h.bf16 %v1398
    %v1642 = vunpack.c.l.bf16 %v1399
    %v1643 = vunpack.c.h.bf16 %v1399
    %v1644 = vunpack.c.l.bf16 %v1400
    %v1645 = vunpack.c.h.bf16 %v1400
    %v1646 = vunpack.c.l.bf16 %v1401
    %v1647 = vunpack.c.h.bf16 %v1401
    %v1648 = vunpack.c.l.bf16 %v1402
    %v1649 = vunpack.c.h.bf16 %v1402
    %v1650 = vunpack.c.l.bf16 %v1403
    %v1651 = vunpack.c.h.bf16 %v1403
    %v1652 = vunpack.c.l.bf16 %v1404
    %v1653 = vunpack.c.h.bf16 %v1404
    %v1654 = vunpack.c.l.bf16 %v1405
    %v1655 = vunpack.c.h.bf16 %v1405
    %v1656 = vunpack.c.l.bf16 %v1406
    %v1657 = vunpack.c.h.bf16 %v1406
    %v1658 = vunpack.c.l.bf16 %v1407
    %v1659 = vunpack.c.h.bf16 %v1407
    %v1660 = vunpack.c.l.bf16 %v1408
    %v1661 = vunpack.c.h.bf16 %v1408
    %v1662 = vunpack.c.l.bf16 %v1409
    %v1663 = vunpack.c.h.bf16 %v1409
    %v1664 = vunpack.c.l.bf16 %v1410
    %v1665 = vunpack.c.h.bf16 %v1410
    %v1666 = vunpack.c.l.bf16 %v1411
    %v1667 = vunpack.c.h.bf16 %v1411
    %v1668 = vld [vmem:[%s8] sm:$0xff]
    %v1670 = vlaneseq
    %v1671 = vshrl.u32 %v1670, 7
    %v1672 = vsub.s32 0, %v1671
    %v1673 = vrot.slane %v1668, %v1672
    %v1674 = vlaneseq
    %v1675 = vshrl.u32 %v1674, 7
    %v1676 = vsub.s32 1, %v1675
    %v1677 = vrot.slane %v1668, %v1676
    %v1678 = vlaneseq
    %v1679 = vshrl.u32 %v1678, 7
    %v1680 = vsub.s32 2, %v1679
    %v1681 = vrot.slane %v1668, %v1680
    %v1682 = vlaneseq
    %v1683 = vshrl.u32 %v1682, 7
    %v1684 = vsub.s32 3, %v1683
    %v1685 = vrot.slane %v1668, %v1684
    %v1686 = vlaneseq
    %v1687 = vshrl.u32 %v1686, 7
    %v1688 = vsub.s32 4, %v1687
    %v1689 = vrot.slane %v1668, %v1688
    %v1690 = vlaneseq
    %v1691 = vshrl.u32 %v1690, 7
    %v1692 = vsub.s32 5, %v1691
    %v1693 = vrot.slane %v1668, %v1692
    %v1694 = vlaneseq
    %v1695 = vshrl.u32 %v1694, 7
    %v1696 = vsub.s32 6, %v1695
    %v1697 = vrot.slane %v1668, %v1696
    %v1698 = vlaneseq
    %v1699 = vshrl.u32 %v1698, 7
    %v1700 = vsub.s32 7, %v1699
    %v1701 = vrot.slane %v1668, %v1700
    %1710 = vmatprep.subr.mxu0 %v1533
    %1711 = vmatpush1.msra.mxu0 %v1532
    %1712 = vmatprep.subr.mxu0 %v1525
    %1713 = vmatpush1.msra.mxu0 %v1524
    %1714 = vmatprep.subr.mxu0 %v1517
    %1715 = vmatpush1.msra.mxu0 %v1516
    %1716 = vmatprep.subr.mxu0 %v1509
    %1717 = vmatpush1.msra.mxu0 %v1508
    %1718 = vmatprep.subr.mxu0 %v1501
    %1719 = vmatpush1.msra.mxu0 %v1500
    %1720 = vmatprep.subr.mxu0 %v1493
    %1721 = vmatpush1.msra.mxu0 %v1492
    %1722 = vmatprep.subr.mxu0 %v1485
    %1723 = vmatpush1.msra.mxu0 %v1484
    %1724 = vmatprep.subr.mxu0 %v1477
    %1725 = vmatpush1.msra.mxu0 %v1476
    %1726 = vmatprep.subr.mxu0 %v1469
    %1727 = vmatpush1.msra.mxu0 %v1468
    %1728 = vmatprep.subr.mxu0 %v1461
    %1729 = vmatpush1.msra.mxu0 %v1460
    %1730 = vmatprep.subr.mxu0 %v1453
    %1731 = vmatpush1.msra.mxu0 %v1452
    %1732 = vmatprep.subr.mxu0 %v1445
    %1733 = vmatpush1.msra.mxu0 %v1444
    %1734 = vmatprep.subr.mxu0 %v1437
    %1735 = vmatpush1.msra.mxu0 %v1436
    %1736 = vmatprep.subr.mxu0 %v1429
    %1737 = vmatpush1.msra.mxu0 %v1428
    %1738 = vmatprep.subr.mxu0 %v1421
    %1739 = vmatpush1.msra.mxu0 %v1420
    %1740 = vmatprep.subr.mxu0 %v1413
    %1741 = vmatpush1.msra.mxu0 %v1412
    %1742 = vmatprep.subr.mxu0 %v1661
    %1743 = vmatpush2.msra.mxu0 %v1660
    %1744 = vmatprep.subr.mxu0 %v1653
    %1745 = vmatpush2.msra.mxu0 %v1652
    %1746 = vmatprep.subr.mxu0 %v1645
    %1747 = vmatpush2.msra.mxu0 %v1644
    %1748 = vmatprep.subr.mxu0 %v1637
    %1749 = vmatpush2.msra.mxu0 %v1636
    %1750 = vmatprep.subr.mxu0 %v1629
    %1751 = vmatpush2.msra.mxu0 %v1628
    %1752 = vmatprep.subr.mxu0 %v1621
    %1753 = vmatpush2.msra.mxu0 %v1620
    %1754 = vmatprep.subr.mxu0 %v1613
    %1755 = vmatpush2.msra.mxu0 %v1612
    %1756 = vmatprep.subr.mxu0 %v1605
    %1757 = vmatpush2.msra.mxu0 %v1604
    %1758 = vmatprep.subr.mxu0 %v1597
    %1759 = vmatpush2.msra.mxu0 %v1596
    %1760 = vmatprep.subr.mxu0 %v1589
    %1761 = vmatpush2.msra.mxu0 %v1588
    %1762 = vmatprep.subr.mxu0 %v1581
    %1763 = vmatpush2.msra.mxu0 %v1580
    %1764 = vmatprep.subr.mxu0 %v1573
    %1765 = vmatpush2.msra.mxu0 %v1572
    %1766 = vmatprep.subr.mxu0 %v1565
    %1767 = vmatpush2.msra.mxu0 %v1564
    %1768 = vmatprep.subr.mxu0 %v1557
    %1769 = vmatpush2.msra.mxu0 %v1556
    %1770 = vmatprep.subr.mxu0 %v1549
    %1771 = vmatpush2.msra.mxu0 %v1548
    %1772 = vmatprep.subr.mxu0 %v1541
    %1773 = vmatpush2.msra.mxu0 %v1540
    %1774 = vmatprep.mubr.f32.mxu0 %v1221
    %1775 = vmatmul.mubr.f32.gmra.mxu0 %v1220
    %v1776 = vpop.f32.mrf.mxu0
    %v1777 = vadd.f32 %v1673, %v1776
    %v1778 = vpop.f32.mrf.mxu0
    %v1779 = vadd.f32 %v1677, %v1778
    %1780 = vmatprep.mubr.f32.mxu0 %v1223
    %1781 = vmatmul.mubr.f32.gmra.mxu0 %v1222
    %v1782 = vpop.f32.mrf.mxu0
    %v1783 = vadd.f32 %v1673, %v1782
    %v1784 = vpop.f32.mrf.mxu0
    %v1785 = vadd.f32 %v1677, %v1784
    %1786 = vmatprep.mubr.f32.mxu0 %v1225
    %1787 = vmatmul.mubr.f32.gmra.mxu0 %v1224
    %v1788 = vpop.f32.mrf.mxu0
    %v1789 = vadd.f32 %v1673, %v1788
    %v1790 = vpop.f32.mrf.mxu0
    %v1791 = vadd.f32 %v1677, %v1790
    %1792 = vmatprep.mubr.f32.mxu0 %v1227
    %1793 = vmatmul.mubr.f32.gmra.mxu0 %v1226
    %v1794 = vpop.f32.mrf.mxu0
    %v1795 = vadd.f32 %v1673, %v1794
    %v1796 = vpop.f32.mrf.mxu0
    %v1797 = vadd.f32 %v1677, %v1796
    %1798 = vmatprep.mubr.f32.mxu0 %v1229
    %1799 = vmatmul.mubr.f32.gmra.mxu0 %v1228
    %v1800 = vpop.f32.mrf.mxu0
    %v1801 = vadd.f32 %v1673, %v1800
    %v1802 = vpop.f32.mrf.mxu0
    %v1803 = vadd.f32 %v1677, %v1802
    %1804 = vmatprep.mubr.f32.mxu0 %v1231
    %1805 = vmatmul.mubr.f32.gmra.mxu0 %v1230
    %v1806 = vpop.f32.mrf.mxu0
    %v1807 = vadd.f32 %v1673, %v1806
    %v1808 = vpop.f32.mrf.mxu0
    %v1809 = vadd.f32 %v1677, %v1808
    %1810 = vmatprep.mubr.f32.mxu0 %v1233
    %1811 = vmatmul.mubr.f32.gmra.mxu0 %v1232
    %v1812 = vpop.f32.mrf.mxu0
    %v1813 = vadd.f32 %v1673, %v1812
    %v1814 = vpop.f32.mrf.mxu0
    %v1815 = vadd.f32 %v1677, %v1814
    %1816 = vmatprep.mubr.f32.mxu0 %v1235
    %1817 = vmatmul.mubr.f32.gmra.mxu0 %v1234
    %v1818 = vpop.f32.mrf.mxu0
    %v1819 = vadd.f32 %v1673, %v1818
    %v1820 = vpop.f32.mrf.mxu0
    %v1821 = vadd.f32 %v1677, %v1820
    %1822 = vmatprep.mubr.f32.mxu0 %v1237
    %1823 = vmatmul.mubr.f32.gmra.mxu0 %v1236
    %v1824 = vpop.f32.mrf.mxu0
    %v1825 = vadd.f32 %v1673, %v1824
    %v1826 = vpop.f32.mrf.mxu0
    %v1827 = vadd.f32 %v1677, %v1826
    %1828 = vmatprep.mubr.f32.mxu0 %v1239
    %1829 = vmatmul.mubr.f32.gmra.mxu0 %v1238
    %v1830 = vpop.f32.mrf.mxu0
    %v1831 = vadd.f32 %v1673, %v1830
    %v1832 = vpop.f32.mrf.mxu0
    %v1833 = vadd.f32 %v1677, %v1832
    %1834 = vmatprep.mubr.f32.mxu0 %v1241
    %1835 = vmatmul.mubr.f32.gmra.mxu0 %v1240
    %v1836 = vpop.f32.mrf.mxu0
    %v1837 = vadd.f32 %v1673, %v1836
    %v1838 = vpop.f32.mrf.mxu0
    %v1839 = vadd.f32 %v1677, %v1838
    %1840 = vmatprep.mubr.f32.mxu0 %v1243
    %1841 = vmatmul.mubr.f32.gmra.mxu0 %v1242
    %v1842 = vpop.f32.mrf.mxu0
    %v1843 = vadd.f32 %v1673, %v1842
    %v1844 = vpop.f32.mrf.mxu0
    %v1845 = vadd.f32 %v1677, %v1844
    %1846 = vmatprep.mubr.f32.mxu0 %v1245
    %1847 = vmatmul.mubr.f32.gmra.mxu0 %v1244
    %v1848 = vpop.f32.mrf.mxu0
    %v1849 = vadd.f32 %v1673, %v1848
    %v1850 = vpop.f32.mrf.mxu0
    %v1851 = vadd.f32 %v1677, %v1850
    %1852 = vmatprep.mubr.f32.mxu0 %v1247
    %1853 = vmatmul.mubr.f32.gmra.mxu0 %v1246
    %v1854 = vpop.f32.mrf.mxu0
    %v1855 = vadd.f32 %v1673, %v1854
    %v1856 = vpop.f32.mrf.mxu0
    %v1857 = vadd.f32 %v1677, %v1856
    %1858 = vmatprep.mubr.f32.mxu0 %v1249
    %1859 = vmatmul.mubr.f32.gmra.mxu0 %v1248
    %v1860 = vpop.f32.mrf.mxu0
    %v1861 = vadd.f32 %v1673, %v1860
    %v1862 = vpop.f32.mrf.mxu0
    %v1863 = vadd.f32 %v1677, %v1862
    %1864 = vmatprep.mubr.f32.mxu0 %v1251
    %1865 = vmatmul.mubr.f32.gmra.mxu0 %v1250
    %v1866 = vpop.f32.mrf.mxu0
    %v1867 = vadd.f32 %v1673, %v1866
    %v1868 = vpop.f32.mrf.mxu0
    %v1869 = vadd.f32 %v1677, %v1868
    %1870 = vmatprep.mubr.f32.mxu0 %v1253
    %1871 = vmatmul.mubr.f32.gmra.mxu0 %v1252
    %v1872 = vpop.f32.mrf.mxu0
    %v1873 = vadd.f32 %v1673, %v1872
    %v1874 = vpop.f32.mrf.mxu0
    %v1875 = vadd.f32 %v1677, %v1874
    %1876 = vmatprep.mubr.f32.mxu0 %v1255
    %1877 = vmatmul.mubr.f32.gmra.mxu0 %v1254
    %v1878 = vpop.f32.mrf.mxu0
    %v1879 = vadd.f32 %v1673, %v1878
    %v1880 = vpop.f32.mrf.mxu0
    %v1881 = vadd.f32 %v1677, %v1880
    %1882 = vmatprep.mubr.f32.mxu0 %v1257
    %1883 = vmatmul.mubr.f32.gmra.mxu0 %v1256
    %v1884 = vpop.f32.mrf.mxu0
    %v1885 = vadd.f32 %v1673, %v1884
    %v1886 = vpop.f32.mrf.mxu0
    %v1887 = vadd.f32 %v1677, %v1886
    %1888 = vmatprep.mubr.f32.mxu0 %v1259
    %1889 = vmatmul.mubr.f32.gmra.mxu0 %v1258
    %v1890 = vpop.f32.mrf.mxu0
    %v1891 = vadd.f32 %v1673, %v1890
    %v1892 = vpop.f32.mrf.mxu0
    %v1893 = vadd.f32 %v1677, %v1892
    %1894 = vmatprep.mubr.f32.mxu0 %v1261
    %1895 = vmatmul.mubr.f32.gmra.mxu0 %v1260
    %v1896 = vpop.f32.mrf.mxu0
    %v1897 = vadd.f32 %v1673, %v1896
    %v1898 = vpop.f32.mrf.mxu0
    %v1899 = vadd.f32 %v1677, %v1898
    %1900 = vmatprep.mubr.f32.mxu0 %v1263
    %1901 = vmatmul.mubr.f32.gmra.mxu0 %v1262
    %v1902 = vpop.f32.mrf.mxu0
    %v1903 = vadd.f32 %v1673, %v1902
    %v1904 = vpop.f32.mrf.mxu0
    %v1905 = vadd.f32 %v1677, %v1904
    %1906 = vmatprep.mubr.f32.mxu0 %v1265
    %1907 = vmatmul.mubr.f32.gmra.mxu0 %v1264
    %v1908 = vpop.f32.mrf.mxu0
    %v1909 = vadd.f32 %v1673, %v1908
    %v1910 = vpop.f32.mrf.mxu0
    %v1911 = vadd.f32 %v1677, %v1910
    %1912 = vmatprep.mubr.f32.mxu0 %v1267
    %1913 = vmatmul.mubr.f32.gmra.mxu0 %v1266
    %v1914 = vpop.f32.mrf.mxu0
    %v1915 = vadd.f32 %v1673, %v1914
    %v1916 = vpop.f32.mrf.mxu0
    %v1917 = vadd.f32 %v1677, %v1916
    %1918 = vmatprep.mubr.f32.mxu0 %v1269
    %1919 = vmatmul.mubr.f32.gmra.mxu0 %v1268
    %v1920 = vpop.f32.mrf.mxu0
    %v1921 = vadd.f32 %v1673, %v1920
    %v1922 = vpop.f32.mrf.mxu0
    %v1923 = vadd.f32 %v1677, %v1922
    %1924 = vmatprep.mubr.f32.mxu0 %v1271
    %1925 = vmatmul.mubr.f32.gmra.mxu0 %v1270
    %v1926 = vpop.f32.mrf.mxu0
    %v1927 = vadd.f32 %v1673, %v1926
    %v1928 = vpop.f32.mrf.mxu0
    %v1929 = vadd.f32 %v1677, %v1928
    %1930 = vmatprep.mubr.f32.mxu0 %v1273
    %1931 = vmatmul.mubr.f32.gmra.mxu0 %v1272
    %v1932 = vpop.f32.mrf.mxu0
    %v1933 = vadd.f32 %v1673, %v1932
    %v1934 = vpop.f32.mrf.mxu0
    %v1935 = vadd.f32 %v1677, %v1934
    %1936 = vmatprep.mubr.f32.mxu0 %v1275
    %1937 = vmatmul.mubr.f32.gmra.mxu0 %v1274
    %v1938 = vpop.f32.mrf.mxu0
    %v1939 = vadd.f32 %v1673, %v1938
    %v1940 = vpop.f32.mrf.mxu0
    %v1941 = vadd.f32 %v1677, %v1940
    %1942 = vmatprep.mubr.f32.mxu0 %v1277
    %1943 = vmatmul.mubr.f32.gmra.mxu0 %v1276
    %v1944 = vpop.f32.mrf.mxu0
    %v1945 = vadd.f32 %v1673, %v1944
    %v1946 = vpop.f32.mrf.mxu0
    %v1947 = vadd.f32 %v1677, %v1946
    %1948 = vmatprep.mubr.f32.mxu0 %v1279
    %1949 = vmatmul.mubr.f32.gmra.mxu0 %v1278
    %v1950 = vpop.f32.mrf.mxu0
    %v1951 = vadd.f32 %v1673, %v1950
    %v1952 = vpop.f32.mrf.mxu0
    %v1953 = vadd.f32 %v1677, %v1952
    %1954 = vmatprep.mubr.f32.mxu0 %v1281
    %1955 = vmatmul.mubr.f32.gmra.mxu0 %v1280
    %v1956 = vpop.f32.mrf.mxu0
    %v1957 = vadd.f32 %v1673, %v1956
    %v1958 = vpop.f32.mrf.mxu0
    %v1959 = vadd.f32 %v1677, %v1958
    %1960 = vmatprep.mubr.f32.mxu0 %v1283
    %1961 = vmatmul.mubr.f32.gmra.mxu0 %v1282
    %v1962 = vpop.f32.mrf.mxu0
    %v1963 = vadd.f32 %v1673, %v1962
    %v1964 = vpop.f32.mrf.mxu0
    %v1965 = vadd.f32 %v1677, %v1964
    %1966 = vdwg.mxu0
    %1967 = vmatprep.subr.mxu0 %v1535
    %1968 = vmatpush1.msra.mxu0 %v1534
    %1969 = vmatprep.subr.mxu0 %v1527
    %1970 = vmatpush1.msra.mxu0 %v1526
    %1971 = vmatprep.subr.mxu0 %v1519
    %1972 = vmatpush1.msra.mxu0 %v1518
    %1973 = vmatprep.subr.mxu0 %v1511
    %1974 = vmatpush1.msra.mxu0 %v1510
    %1975 = vmatprep.subr.mxu0 %v1503
    %1976 = vmatpush1.msra.mxu0 %v1502
    %1977 = vmatprep.subr.mxu0 %v1495
    %1978 = vmatpush1.msra.mxu0 %v1494
    %1979 = vmatprep.subr.mxu0 %v1487
    %1980 = vmatpush1.msra.mxu0 %v1486
    %1981 = vmatprep.subr.mxu0 %v1479
    %1982 = vmatpush1.msra.mxu0 %v1478
    %1983 = vmatprep.subr.mxu0 %v1471
    %1984 = vmatpush1.msra.mxu0 %v1470
    %1985 = vmatprep.subr.mxu0 %v1463
    %1986 = vmatpush1.msra.mxu0 %v1462
    %1987 = vmatprep.subr.mxu0 %v1455
    %1988 = vmatpush1.msra.mxu0 %v1454
    %1989 = vmatprep.subr.mxu0 %v1447
    %1990 = vmatpush1.msra.mxu0 %v1446
    %1991 = vmatprep.subr.mxu0 %v1439
    %1992 = vmatpush1.msra.mxu0 %v1438
    %1993 = vmatprep.subr.mxu0 %v1431
    %1994 = vmatpush1.msra.mxu0 %v1430
    %1995 = vmatprep.subr.mxu0 %v1423
    %1996 = vmatpush1.msra.mxu0 %v1422
    %1997 = vmatprep.subr.mxu0 %v1415
    %1998 = vmatpush1.msra.mxu0 %v1414
    %1999 = vmatprep.subr.mxu0 %v1663
    %2000 = vmatpush2.msra.mxu0 %v1662
    %2001 = vmatprep.subr.mxu0 %v1655
    %2002 = vmatpush2.msra.mxu0 %v1654
    %2003 = vmatprep.subr.mxu0 %v1647
    %2004 = vmatpush2.msra.mxu0 %v1646
    %2005 = vmatprep.subr.mxu0 %v1639
    %2006 = vmatpush2.msra.mxu0 %v1638
    %2007 = vmatprep.subr.mxu0 %v1631
    %2008 = vmatpush2.msra.mxu0 %v1630
    %2009 = vmatprep.subr.mxu0 %v1623
    %2010 = vmatpush2.msra.mxu0 %v1622
    %2011 = vmatprep.subr.mxu0 %v1615
    %2012 = vmatpush2.msra.mxu0 %v1614
    %2013 = vmatprep.subr.mxu0 %v1607
    %2014 = vmatpush2.msra.mxu0 %v1606
    %2015 = vmatprep.subr.mxu0 %v1599
    %2016 = vmatpush2.msra.mxu0 %v1598
    %2017 = vmatprep.subr.mxu0 %v1591
    %2018 = vmatpush2.msra.mxu0 %v1590
    %2019 = vmatprep.subr.mxu0 %v1583
    %2020 = vmatpush2.msra.mxu0 %v1582
    %2021 = vmatprep.subr.mxu0 %v1575
    %2022 = vmatpush2.msra.mxu0 %v1574
    %2023 = vmatprep.subr.mxu0 %v1567
    %2024 = vmatpush2.msra.mxu0 %v1566
    %2025 = vmatprep.subr.mxu0 %v1559
    %2026 = vmatpush2.msra.mxu0 %v1558
    %2027 = vmatprep.subr.mxu0 %v1551
    %2028 = vmatpush2.msra.mxu0 %v1550
    %2029 = vmatprep.subr.mxu0 %v1543
    %2030 = vmatpush2.msra.mxu0 %v1542
    %2031 = vmatprep.mubr.f32.mxu0 %v1221
    %2032 = vmatmul.mubr.f32.gmra.mxu0 %v1220
    %v2033 = vpop.f32.mrf.mxu0
    %v2034 = vadd.f32 %v1681, %v2033
    %v2035 = vpop.f32.mrf.mxu0
    %v2036 = vadd.f32 %v1685, %v2035
    %2037 = vmatprep.mubr.f32.mxu0 %v1223
    %2038 = vmatmul.mubr.f32.gmra.mxu0 %v1222
    %v2039 = vpop.f32.mrf.mxu0
    %v2040 = vadd.f32 %v1681, %v2039
    %v2041 = vpop.f32.mrf.mxu0
    %v2042 = vadd.f32 %v1685, %v2041
    %2043 = vmatprep.mubr.f32.mxu0 %v1225
    %2044 = vmatmul.mubr.f32.gmra.mxu0 %v1224
    %v2045 = vpop.f32.mrf.mxu0
    %v2046 = vadd.f32 %v1681, %v2045
    %v2047 = vpop.f32.mrf.mxu0
    %v2048 = vadd.f32 %v1685, %v2047
    %2049 = vmatprep.mubr.f32.mxu0 %v1227
    %2050 = vmatmul.mubr.f32.gmra.mxu0 %v1226
    %v2051 = vpop.f32.mrf.mxu0
    %v2052 = vadd.f32 %v1681, %v2051
    %v2053 = vpop.f32.mrf.mxu0
    %v2054 = vadd.f32 %v1685, %v2053
    %2055 = vmatprep.mubr.f32.mxu0 %v1229
    %2056 = vmatmul.mubr.f32.gmra.mxu0 %v1228
    %v2057 = vpop.f32.mrf.mxu0
    %v2058 = vadd.f32 %v1681, %v2057
    %v2059 = vpop.f32.mrf.mxu0
    %v2060 = vadd.f32 %v1685, %v2059
    %2061 = vmatprep.mubr.f32.mxu0 %v1231
    %2062 = vmatmul.mubr.f32.gmra.mxu0 %v1230
    %v2063 = vpop.f32.mrf.mxu0
    %v2064 = vadd.f32 %v1681, %v2063
    %v2065 = vpop.f32.mrf.mxu0
    %v2066 = vadd.f32 %v1685, %v2065
    %2067 = vmatprep.mubr.f32.mxu0 %v1233
    %2068 = vmatmul.mubr.f32.gmra.mxu0 %v1232
    %v2069 = vpop.f32.mrf.mxu0
    %v2070 = vadd.f32 %v1681, %v2069
    %v2071 = vpop.f32.mrf.mxu0
    %v2072 = vadd.f32 %v1685, %v2071
    %2073 = vmatprep.mubr.f32.mxu0 %v1235
    %2074 = vmatmul.mubr.f32.gmra.mxu0 %v1234
    %v2075 = vpop.f32.mrf.mxu0
    %v2076 = vadd.f32 %v1681, %v2075
    %v2077 = vpop.f32.mrf.mxu0
    %v2078 = vadd.f32 %v1685, %v2077
    %2079 = vmatprep.mubr.f32.mxu0 %v1237
    %2080 = vmatmul.mubr.f32.gmra.mxu0 %v1236
    %v2081 = vpop.f32.mrf.mxu0
    %v2082 = vadd.f32 %v1681, %v2081
    %v2083 = vpop.f32.mrf.mxu0
    %v2084 = vadd.f32 %v1685, %v2083
    %2085 = vmatprep.mubr.f32.mxu0 %v1239
    %2086 = vmatmul.mubr.f32.gmra.mxu0 %v1238
    %v2087 = vpop.f32.mrf.mxu0
    %v2088 = vadd.f32 %v1681, %v2087
    %v2089 = vpop.f32.mrf.mxu0
    %v2090 = vadd.f32 %v1685, %v2089
    %2091 = vmatprep.mubr.f32.mxu0 %v1241
    %2092 = vmatmul.mubr.f32.gmra.mxu0 %v1240
    %v2093 = vpop.f32.mrf.mxu0
    %v2094 = vadd.f32 %v1681, %v2093
    %v2095 = vpop.f32.mrf.mxu0
    %v2096 = vadd.f32 %v1685, %v2095
    %2097 = vmatprep.mubr.f32.mxu0 %v1243
    %2098 = vmatmul.mubr.f32.gmra.mxu0 %v1242
    %v2099 = vpop.f32.mrf.mxu0
    %v2100 = vadd.f32 %v1681, %v2099
    %v2101 = vpop.f32.mrf.mxu0
    %v2102 = vadd.f32 %v1685, %v2101
    %2103 = vmatprep.mubr.f32.mxu0 %v1245
    %2104 = vmatmul.mubr.f32.gmra.mxu0 %v1244
    %v2105 = vpop.f32.mrf.mxu0
    %v2106 = vadd.f32 %v1681, %v2105
    %v2107 = vpop.f32.mrf.mxu0
    %v2108 = vadd.f32 %v1685, %v2107
    %2109 = vmatprep.mubr.f32.mxu0 %v1247
    %2110 = vmatmul.mubr.f32.gmra.mxu0 %v1246
    %v2111 = vpop.f32.mrf.mxu0
    %v2112 = vadd.f32 %v1681, %v2111
    %v2113 = vpop.f32.mrf.mxu0
    %v2114 = vadd.f32 %v1685, %v2113
    %2115 = vmatprep.mubr.f32.mxu0 %v1249
    %2116 = vmatmul.mubr.f32.gmra.mxu0 %v1248
    %v2117 = vpop.f32.mrf.mxu0
    %v2118 = vadd.f32 %v1681, %v2117
    %v2119 = vpop.f32.mrf.mxu0
    %v2120 = vadd.f32 %v1685, %v2119
    %2121 = vmatprep.mubr.f32.mxu0 %v1251
    %2122 = vmatmul.mubr.f32.gmra.mxu0 %v1250
    %v2123 = vpop.f32.mrf.mxu0
    %v2124 = vadd.f32 %v1681, %v2123
    %v2125 = vpop.f32.mrf.mxu0
    %v2126 = vadd.f32 %v1685, %v2125
    %2127 = vmatprep.mubr.f32.mxu0 %v1253
    %2128 = vmatmul.mubr.f32.gmra.mxu0 %v1252
    %v2129 = vpop.f32.mrf.mxu0
    %v2130 = vadd.f32 %v1681, %v2129
    %v2131 = vpop.f32.mrf.mxu0
    %v2132 = vadd.f32 %v1685, %v2131
    %2133 = vmatprep.mubr.f32.mxu0 %v1255
    %2134 = vmatmul.mubr.f32.gmra.mxu0 %v1254
    %v2135 = vpop.f32.mrf.mxu0
    %v2136 = vadd.f32 %v1681, %v2135
    %v2137 = vpop.f32.mrf.mxu0
    %v2138 = vadd.f32 %v1685, %v2137
    %2139 = vmatprep.mubr.f32.mxu0 %v1257
    %2140 = vmatmul.mubr.f32.gmra.mxu0 %v1256
    %v2141 = vpop.f32.mrf.mxu0
    %v2142 = vadd.f32 %v1681, %v2141
    %v2143 = vpop.f32.mrf.mxu0
    %v2144 = vadd.f32 %v1685, %v2143
    %2145 = vmatprep.mubr.f32.mxu0 %v1259
    %2146 = vmatmul.mubr.f32.gmra.mxu0 %v1258
    %v2147 = vpop.f32.mrf.mxu0
    %v2148 = vadd.f32 %v1681, %v2147
    %v2149 = vpop.f32.mrf.mxu0
    %v2150 = vadd.f32 %v1685, %v2149
    %2151 = vmatprep.mubr.f32.mxu0 %v1261
    %2152 = vmatmul.mubr.f32.gmra.mxu0 %v1260
    %v2153 = vpop.f32.mrf.mxu0
    %v2154 = vadd.f32 %v1681, %v2153
    %v2155 = vpop.f32.mrf.mxu0
    %v2156 = vadd.f32 %v1685, %v2155
    %2157 = vmatprep.mubr.f32.mxu0 %v1263
    %2158 = vmatmul.mubr.f32.gmra.mxu0 %v1262
    %v2159 = vpop.f32.mrf.mxu0
    %v2160 = vadd.f32 %v1681, %v2159
    %v2161 = vpop.f32.mrf.mxu0
    %v2162 = vadd.f32 %v1685, %v2161
    %2163 = vmatprep.mubr.f32.mxu0 %v1265
    %2164 = vmatmul.mubr.f32.gmra.mxu0 %v1264
    %v2165 = vpop.f32.mrf.mxu0
    %v2166 = vadd.f32 %v1681, %v2165
    %v2167 = vpop.f32.mrf.mxu0
    %v2168 = vadd.f32 %v1685, %v2167
    %2169 = vmatprep.mubr.f32.mxu0 %v1267
    %2170 = vmatmul.mubr.f32.gmra.mxu0 %v1266
    %v2171 = vpop.f32.mrf.mxu0
    %v2172 = vadd.f32 %v1681, %v2171
    %v2173 = vpop.f32.mrf.mxu0
    %v2174 = vadd.f32 %v1685, %v2173
    %2175 = vmatprep.mubr.f32.mxu0 %v1269
    %2176 = vmatmul.mubr.f32.gmra.mxu0 %v1268
    %v2177 = vpop.f32.mrf.mxu0
    %v2178 = vadd.f32 %v1681, %v2177
    %v2179 = vpop.f32.mrf.mxu0
    %v2180 = vadd.f32 %v1685, %v2179
    %2181 = vmatprep.mubr.f32.mxu0 %v1271
    %2182 = vmatmul.mubr.f32.gmra.mxu0 %v1270
    %v2183 = vpop.f32.mrf.mxu0
    %v2184 = vadd.f32 %v1681, %v2183
    %v2185 = vpop.f32.mrf.mxu0
    %v2186 = vadd.f32 %v1685, %v2185
    %2187 = vmatprep.mubr.f32.mxu0 %v1273
    %2188 = vmatmul.mubr.f32.gmra.mxu0 %v1272
    %v2189 = vpop.f32.mrf.mxu0
    %v2190 = vadd.f32 %v1681, %v2189
    %v2191 = vpop.f32.mrf.mxu0
    %v2192 = vadd.f32 %v1685, %v2191
    %2193 = vmatprep.mubr.f32.mxu0 %v1275
    %2194 = vmatmul.mubr.f32.gmra.mxu0 %v1274
    %v2195 = vpop.f32.mrf.mxu0
    %v2196 = vadd.f32 %v1681, %v2195
    %v2197 = vpop.f32.mrf.mxu0
    %v2198 = vadd.f32 %v1685, %v2197
    %2199 = vmatprep.mubr.f32.mxu0 %v1277
    %2200 = vmatmul.mubr.f32.gmra.mxu0 %v1276
    %v2201 = vpop.f32.mrf.mxu0
    %v2202 = vadd.f32 %v1681, %v2201
    %v2203 = vpop.f32.mrf.mxu0
    %v2204 = vadd.f32 %v1685, %v2203
    %2205 = vmatprep.mubr.f32.mxu0 %v1279
    %2206 = vmatmul.mubr.f32.gmra.mxu0 %v1278
    %v2207 = vpop.f32.mrf.mxu0
    %v2208 = vadd.f32 %v1681, %v2207
    %v2209 = vpop.f32.mrf.mxu0
    %v2210 = vadd.f32 %v1685, %v2209
    %2211 = vmatprep.mubr.f32.mxu0 %v1281
    %2212 = vmatmul.mubr.f32.gmra.mxu0 %v1280
    %v2213 = vpop.f32.mrf.mxu0
    %v2214 = vadd.f32 %v1681, %v2213
    %v2215 = vpop.f32.mrf.mxu0
    %v2216 = vadd.f32 %v1685, %v2215
    %2217 = vmatprep.mubr.f32.mxu0 %v1283
    %2218 = vmatmul.mubr.f32.gmra.mxu0 %v1282
    %v2219 = vpop.f32.mrf.mxu0
    %v2220 = vadd.f32 %v1681, %v2219
    %v2221 = vpop.f32.mrf.mxu0
    %v2222 = vadd.f32 %v1685, %v2221
    %2223 = vdwg.mxu0
    %2224 = vmatprep.subr.mxu0 %v1537
    %2225 = vmatpush1.msra.mxu0 %v1536
    %2226 = vmatprep.subr.mxu0 %v1529
    %2227 = vmatpush1.msra.mxu0 %v1528
    %2228 = vmatprep.subr.mxu0 %v1521
    %2229 = vmatpush1.msra.mxu0 %v1520
    %2230 = vmatprep.subr.mxu0 %v1513
    %2231 = vmatpush1.msra.mxu0 %v1512
    %2232 = vmatprep.subr.mxu0 %v1505
    %2233 = vmatpush1.msra.mxu0 %v1504
    %2234 = vmatprep.subr.mxu0 %v1497
    %2235 = vmatpush1.msra.mxu0 %v1496
    %2236 = vmatprep.subr.mxu0 %v1489
    %2237 = vmatpush1.msra.mxu0 %v1488
    %2238 = vmatprep.subr.mxu0 %v1481
    %2239 = vmatpush1.msra.mxu0 %v1480
    %2240 = vmatprep.subr.mxu0 %v1473
    %2241 = vmatpush1.msra.mxu0 %v1472
    %2242 = vmatprep.subr.mxu0 %v1465
    %2243 = vmatpush1.msra.mxu0 %v1464
    %2244 = vmatprep.subr.mxu0 %v1457
    %2245 = vmatpush1.msra.mxu0 %v1456
    %2246 = vmatprep.subr.mxu0 %v1449
    %2247 = vmatpush1.msra.mxu0 %v1448
    %2248 = vmatprep.subr.mxu0 %v1441
    %2249 = vmatpush1.msra.mxu0 %v1440
    %2250 = vmatprep.subr.mxu0 %v1433
    %2251 = vmatpush1.msra.mxu0 %v1432
    %2252 = vmatprep.subr.mxu0 %v1425
    %2253 = vmatpush1.msra.mxu0 %v1424
    %2254 = vmatprep.subr.mxu0 %v1417
    %2255 = vmatpush1.msra.mxu0 %v1416
    %2256 = vmatprep.subr.mxu0 %v1665
    %2257 = vmatpush2.msra.mxu0 %v1664
    %2258 = vmatprep.subr.mxu0 %v1657
    %2259 = vmatpush2.msra.mxu0 %v1656
    %2260 = vmatprep.subr.mxu0 %v1649
    %2261 = vmatpush2.msra.mxu0 %v1648
    %2262 = vmatprep.subr.mxu0 %v1641
    %2263 = vmatpush2.msra.mxu0 %v1640
    %2264 = vmatprep.subr.mxu0 %v1633
    %2265 = vmatpush2.msra.mxu0 %v1632
    %2266 = vmatprep.subr.mxu0 %v1625
    %2267 = vmatpush2.msra.mxu0 %v1624
    %2268 = vmatprep.subr.mxu0 %v1617
    %2269 = vmatpush2.msra.mxu0 %v1616
    %2270 = vmatprep.subr.mxu0 %v1609
    %2271 = vmatpush2.msra.mxu0 %v1608
    %2272 = vmatprep.subr.mxu0 %v1601
    %2273 = vmatpush2.msra.mxu0 %v1600
    %2274 = vmatprep.subr.mxu0 %v1593
    %2275 = vmatpush2.msra.mxu0 %v1592
    %2276 = vmatprep.subr.mxu0 %v1585
    %2277 = vmatpush2.msra.mxu0 %v1584
    %2278 = vmatprep.subr.mxu0 %v1577
    %2279 = vmatpush2.msra.mxu0 %v1576
    %2280 = vmatprep.subr.mxu0 %v1569
    %2281 = vmatpush2.msra.mxu0 %v1568
    %2282 = vmatprep.subr.mxu0 %v1561
    %2283 = vmatpush2.msra.mxu0 %v1560
    %2284 = vmatprep.subr.mxu0 %v1553
    %2285 = vmatpush2.msra.mxu0 %v1552
    %2286 = vmatprep.subr.mxu0 %v1545
    %2287 = vmatpush2.msra.mxu0 %v1544
    %2288 = vmatprep.mubr.f32.mxu0 %v1221
    %2289 = vmatmul.mubr.f32.gmra.mxu0 %v1220
    %v2290 = vpop.f32.mrf.mxu0
    %v2291 = vadd.f32 %v1689, %v2290
    %v2292 = vpop.f32.mrf.mxu0
    %v2293 = vadd.f32 %v1693, %v2292
    %2294 = vmatprep.mubr.f32.mxu0 %v1223
    %2295 = vmatmul.mubr.f32.gmra.mxu0 %v1222
    %v2296 = vpop.f32.mrf.mxu0
    %v2297 = vadd.f32 %v1689, %v2296
    %v2298 = vpop.f32.mrf.mxu0
    %v2299 = vadd.f32 %v1693, %v2298
    %2300 = vmatprep.mubr.f32.mxu0 %v1225
    %2301 = vmatmul.mubr.f32.gmra.mxu0 %v1224
    %v2302 = vpop.f32.mrf.mxu0
    %v2303 = vadd.f32 %v1689, %v2302
    %v2304 = vpop.f32.mrf.mxu0
    %v2305 = vadd.f32 %v1693, %v2304
    %2306 = vmatprep.mubr.f32.mxu0 %v1227
    %2307 = vmatmul.mubr.f32.gmra.mxu0 %v1226
    %v2308 = vpop.f32.mrf.mxu0
    %v2309 = vadd.f32 %v1689, %v2308
    %v2310 = vpop.f32.mrf.mxu0
    %v2311 = vadd.f32 %v1693, %v2310
    %2312 = vmatprep.mubr.f32.mxu0 %v1229
    %2313 = vmatmul.mubr.f32.gmra.mxu0 %v1228
    %v2314 = vpop.f32.mrf.mxu0
    %v2315 = vadd.f32 %v1689, %v2314
    %v2316 = vpop.f32.mrf.mxu0
    %v2317 = vadd.f32 %v1693, %v2316
    %2318 = vmatprep.mubr.f32.mxu0 %v1231
    %2319 = vmatmul.mubr.f32.gmra.mxu0 %v1230
    %v2320 = vpop.f32.mrf.mxu0
    %v2321 = vadd.f32 %v1689, %v2320
    %v2322 = vpop.f32.mrf.mxu0
    %v2323 = vadd.f32 %v1693, %v2322
    %2324 = vmatprep.mubr.f32.mxu0 %v1233
    %2325 = vmatmul.mubr.f32.gmra.mxu0 %v1232
    %v2326 = vpop.f32.mrf.mxu0
    %v2327 = vadd.f32 %v1689, %v2326
    %v2328 = vpop.f32.mrf.mxu0
    %v2329 = vadd.f32 %v1693, %v2328
    %2330 = vmatprep.mubr.f32.mxu0 %v1235
    %2331 = vmatmul.mubr.f32.gmra.mxu0 %v1234
    %v2332 = vpop.f32.mrf.mxu0
    %v2333 = vadd.f32 %v1689, %v2332
    %v2334 = vpop.f32.mrf.mxu0
    %v2335 = vadd.f32 %v1693, %v2334
    %2336 = vmatprep.mubr.f32.mxu0 %v1237
    %2337 = vmatmul.mubr.f32.gmra.mxu0 %v1236
    %v2338 = vpop.f32.mrf.mxu0
    %v2339 = vadd.f32 %v1689, %v2338
    %v2340 = vpop.f32.mrf.mxu0
    %v2341 = vadd.f32 %v1693, %v2340
    %2342 = vmatprep.mubr.f32.mxu0 %v1239
    %2343 = vmatmul.mubr.f32.gmra.mxu0 %v1238
    %v2344 = vpop.f32.mrf.mxu0
    %v2345 = vadd.f32 %v1689, %v2344
    %v2346 = vpop.f32.mrf.mxu0
    %v2347 = vadd.f32 %v1693, %v2346
    %2348 = vmatprep.mubr.f32.mxu0 %v1241
    %2349 = vmatmul.mubr.f32.gmra.mxu0 %v1240
    %v2350 = vpop.f32.mrf.mxu0
    %v2351 = vadd.f32 %v1689, %v2350
    %v2352 = vpop.f32.mrf.mxu0
    %v2353 = vadd.f32 %v1693, %v2352
    %2354 = vmatprep.mubr.f32.mxu0 %v1243
    %2355 = vmatmul.mubr.f32.gmra.mxu0 %v1242
    %v2356 = vpop.f32.mrf.mxu0
    %v2357 = vadd.f32 %v1689, %v2356
    %v2358 = vpop.f32.mrf.mxu0
    %v2359 = vadd.f32 %v1693, %v2358
    %2360 = vmatprep.mubr.f32.mxu0 %v1245
    %2361 = vmatmul.mubr.f32.gmra.mxu0 %v1244
    %v2362 = vpop.f32.mrf.mxu0
    %v2363 = vadd.f32 %v1689, %v2362
    %v2364 = vpop.f32.mrf.mxu0
    %v2365 = vadd.f32 %v1693, %v2364
    %2366 = vmatprep.mubr.f32.mxu0 %v1247
    %2367 = vmatmul.mubr.f32.gmra.mxu0 %v1246
    %v2368 = vpop.f32.mrf.mxu0
    %v2369 = vadd.f32 %v1689, %v2368
    %v2370 = vpop.f32.mrf.mxu0
    %v2371 = vadd.f32 %v1693, %v2370
    %2372 = vmatprep.mubr.f32.mxu0 %v1249
    %2373 = vmatmul.mubr.f32.gmra.mxu0 %v1248
    %v2374 = vpop.f32.mrf.mxu0
    %v2375 = vadd.f32 %v1689, %v2374
    %v2376 = vpop.f32.mrf.mxu0
    %v2377 = vadd.f32 %v1693, %v2376
    %2378 = vmatprep.mubr.f32.mxu0 %v1251
    %2379 = vmatmul.mubr.f32.gmra.mxu0 %v1250
    %v2380 = vpop.f32.mrf.mxu0
    %v2381 = vadd.f32 %v1689, %v2380
    %v2382 = vpop.f32.mrf.mxu0
    %v2383 = vadd.f32 %v1693, %v2382
    %2384 = vmatprep.mubr.f32.mxu0 %v1253
    %2385 = vmatmul.mubr.f32.gmra.mxu0 %v1252
    %v2386 = vpop.f32.mrf.mxu0
    %v2387 = vadd.f32 %v1689, %v2386
    %v2388 = vpop.f32.mrf.mxu0
    %v2389 = vadd.f32 %v1693, %v2388
    %2390 = vmatprep.mubr.f32.mxu0 %v1255
    %2391 = vmatmul.mubr.f32.gmra.mxu0 %v1254
    %v2392 = vpop.f32.mrf.mxu0
    %v2393 = vadd.f32 %v1689, %v2392
    %v2394 = vpop.f32.mrf.mxu0
    %v2395 = vadd.f32 %v1693, %v2394
    %2396 = vmatprep.mubr.f32.mxu0 %v1257
    %2397 = vmatmul.mubr.f32.gmra.mxu0 %v1256
    %v2398 = vpop.f32.mrf.mxu0
    %v2399 = vadd.f32 %v1689, %v2398
    %v2400 = vpop.f32.mrf.mxu0
    %v2401 = vadd.f32 %v1693, %v2400
    %2402 = vmatprep.mubr.f32.mxu0 %v1259
    %2403 = vmatmul.mubr.f32.gmra.mxu0 %v1258
    %v2404 = vpop.f32.mrf.mxu0
    %v2405 = vadd.f32 %v1689, %v2404
    %v2406 = vpop.f32.mrf.mxu0
    %v2407 = vadd.f32 %v1693, %v2406
    %2408 = vmatprep.mubr.f32.mxu0 %v1261
    %2409 = vmatmul.mubr.f32.gmra.mxu0 %v1260
    %v2410 = vpop.f32.mrf.mxu0
    %v2411 = vadd.f32 %v1689, %v2410
    %v2412 = vpop.f32.mrf.mxu0
    %v2413 = vadd.f32 %v1693, %v2412
    %2414 = vmatprep.mubr.f32.mxu0 %v1263
    %2415 = vmatmul.mubr.f32.gmra.mxu0 %v1262
    %v2416 = vpop.f32.mrf.mxu0
    %v2417 = vadd.f32 %v1689, %v2416
    %v2418 = vpop.f32.mrf.mxu0
    %v2419 = vadd.f32 %v1693, %v2418
    %2420 = vmatprep.mubr.f32.mxu0 %v1265
    %2421 = vmatmul.mubr.f32.gmra.mxu0 %v1264
    %v2422 = vpop.f32.mrf.mxu0
    %v2423 = vadd.f32 %v1689, %v2422
    %v2424 = vpop.f32.mrf.mxu0
    %v2425 = vadd.f32 %v1693, %v2424
    %2426 = vmatprep.mubr.f32.mxu0 %v1267
    %2427 = vmatmul.mubr.f32.gmra.mxu0 %v1266
    %v2428 = vpop.f32.mrf.mxu0
    %v2429 = vadd.f32 %v1689, %v2428
    %v2430 = vpop.f32.mrf.mxu0
    %v2431 = vadd.f32 %v1693, %v2430
    %2432 = vmatprep.mubr.f32.mxu0 %v1269
    %2433 = vmatmul.mubr.f32.gmra.mxu0 %v1268
    %v2434 = vpop.f32.mrf.mxu0
    %v2435 = vadd.f32 %v1689, %v2434
    %v2436 = vpop.f32.mrf.mxu0
    %v2437 = vadd.f32 %v1693, %v2436
    %2438 = vmatprep.mubr.f32.mxu0 %v1271
    %2439 = vmatmul.mubr.f32.gmra.mxu0 %v1270
    %v2440 = vpop.f32.mrf.mxu0
    %v2441 = vadd.f32 %v1689, %v2440
    %v2442 = vpop.f32.mrf.mxu0
    %v2443 = vadd.f32 %v1693, %v2442
    %2444 = vmatprep.mubr.f32.mxu0 %v1273
    %2445 = vmatmul.mubr.f32.gmra.mxu0 %v1272
    %v2446 = vpop.f32.mrf.mxu0
    %v2447 = vadd.f32 %v1689, %v2446
    %v2448 = vpop.f32.mrf.mxu0
    %v2449 = vadd.f32 %v1693, %v2448
    %2450 = vmatprep.mubr.f32.mxu0 %v1275
    %2451 = vmatmul.mubr.f32.gmra.mxu0 %v1274
    %v2452 = vpop.f32.mrf.mxu0
    %v2453 = vadd.f32 %v1689, %v2452
    %v2454 = vpop.f32.mrf.mxu0
    %v2455 = vadd.f32 %v1693, %v2454
    %2456 = vmatprep.mubr.f32.mxu0 %v1277
    %2457 = vmatmul.mubr.f32.gmra.mxu0 %v1276
    %v2458 = vpop.f32.mrf.mxu0
    %v2459 = vadd.f32 %v1689, %v2458
    %v2460 = vpop.f32.mrf.mxu0
    %v2461 = vadd.f32 %v1693, %v2460
    %2462 = vmatprep.mubr.f32.mxu0 %v1279
    %2463 = vmatmul.mubr.f32.gmra.mxu0 %v1278
    %v2464 = vpop.f32.mrf.mxu0
    %v2465 = vadd.f32 %v1689, %v2464
    %v2466 = vpop.f32.mrf.mxu0
    %v2467 = vadd.f32 %v1693, %v2466
    %2468 = vmatprep.mubr.f32.mxu0 %v1281
    %2469 = vmatmul.mubr.f32.gmra.mxu0 %v1280
    %v2470 = vpop.f32.mrf.mxu0
    %v2471 = vadd.f32 %v1689, %v2470
    %v2472 = vpop.f32.mrf.mxu0
    %v2473 = vadd.f32 %v1693, %v2472
    %2474 = vmatprep.mubr.f32.mxu0 %v1283
    %2475 = vmatmul.mubr.f32.gmra.mxu0 %v1282
    %v2476 = vpop.f32.mrf.mxu0
    %v2477 = vadd.f32 %v1689, %v2476
    %v2478 = vpop.f32.mrf.mxu0
    %v2479 = vadd.f32 %v1693, %v2478
    %2480 = vdwg.mxu0
    %2481 = vmatprep.subr.mxu0 %v1539
    %2482 = vmatpush1.msra.mxu0 %v1538
    %2483 = vmatprep.subr.mxu0 %v1531
    %2484 = vmatpush1.msra.mxu0 %v1530
    %2485 = vmatprep.subr.mxu0 %v1523
    %2486 = vmatpush1.msra.mxu0 %v1522
    %2487 = vmatprep.subr.mxu0 %v1515
    %2488 = vmatpush1.msra.mxu0 %v1514
    %2489 = vmatprep.subr.mxu0 %v1507
    %2490 = vmatpush1.msra.mxu0 %v1506
    %2491 = vmatprep.subr.mxu0 %v1499
    %2492 = vmatpush1.msra.mxu0 %v1498
    %2493 = vmatprep.subr.mxu0 %v1491
    %2494 = vmatpush1.msra.mxu0 %v1490
    %2495 = vmatprep.subr.mxu0 %v1483
    %2496 = vmatpush1.msra.mxu0 %v1482
    %2497 = vmatprep.subr.mxu0 %v1475
    %2498 = vmatpush1.msra.mxu0 %v1474
    %2499 = vmatprep.subr.mxu0 %v1467
    %2500 = vmatpush1.msra.mxu0 %v1466
    %2501 = vmatprep.subr.mxu0 %v1459
    %2502 = vmatpush1.msra.mxu0 %v1458
    %2503 = vmatprep.subr.mxu0 %v1451
    %2504 = vmatpush1.msra.mxu0 %v1450
    %2505 = vmatprep.subr.mxu0 %v1443
    %2506 = vmatpush1.msra.mxu0 %v1442
    %2507 = vmatprep.subr.mxu0 %v1435
    %2508 = vmatpush1.msra.mxu0 %v1434
    %2509 = vmatprep.subr.mxu0 %v1427
    %2510 = vmatpush1.msra.mxu0 %v1426
    %2511 = vmatprep.subr.mxu0 %v1419
    %2512 = vmatpush1.msra.mxu0 %v1418
    %2513 = vmatprep.subr.mxu0 %v1667
    %2514 = vmatpush2.msra.mxu0 %v1666
    %2515 = vmatprep.subr.mxu0 %v1659
    %2516 = vmatpush2.msra.mxu0 %v1658
    %2517 = vmatprep.subr.mxu0 %v1651
    %2518 = vmatpush2.msra.mxu0 %v1650
    %2519 = vmatprep.subr.mxu0 %v1643
    %2520 = vmatpush2.msra.mxu0 %v1642
    %2521 = vmatprep.subr.mxu0 %v1635
    %2522 = vmatpush2.msra.mxu0 %v1634
    %2523 = vmatprep.subr.mxu0 %v1627
    %2524 = vmatpush2.msra.mxu0 %v1626
    %2525 = vmatprep.subr.mxu0 %v1619
    %2526 = vmatpush2.msra.mxu0 %v1618
    %2527 = vmatprep.subr.mxu0 %v1611
    %2528 = vmatpush2.msra.mxu0 %v1610
    %2529 = vmatprep.subr.mxu0 %v1603
    %2530 = vmatpush2.msra.mxu0 %v1602
    %2531 = vmatprep.subr.mxu0 %v1595
    %2532 = vmatpush2.msra.mxu0 %v1594
    %2533 = vmatprep.subr.mxu0 %v1587
    %2534 = vmatpush2.msra.mxu0 %v1586
    %2535 = vmatprep.subr.mxu0 %v1579
    %2536 = vmatpush2.msra.mxu0 %v1578
    %2537 = vmatprep.subr.mxu0 %v1571
    %2538 = vmatpush2.msra.mxu0 %v1570
    %2539 = vmatprep.subr.mxu0 %v1563
    %2540 = vmatpush2.msra.mxu0 %v1562
    %2541 = vmatprep.subr.mxu0 %v1555
    %2542 = vmatpush2.msra.mxu0 %v1554
    %2543 = vmatprep.subr.mxu0 %v1547
    %2544 = vmatpush2.msra.mxu0 %v1546
    %2545 = vmatprep.mubr.f32.mxu0 %v1221
    %2546 = vmatmul.mubr.f32.gmra.mxu0 %v1220
    %v2547 = vpop.f32.mrf.mxu0
    %v2548 = vadd.f32 %v1697, %v2547
    %v2549 = vpop.f32.mrf.mxu0
    %v2550 = vadd.f32 %v1701, %v2549
    %2551 = vmatprep.mubr.f32.mxu0 %v1223
    %2552 = vmatmul.mubr.f32.gmra.mxu0 %v1222
    %v2553 = vpop.f32.mrf.mxu0
    %v2554 = vadd.f32 %v1697, %v2553
    %v2555 = vpop.f32.mrf.mxu0
    %v2556 = vadd.f32 %v1701, %v2555
    %2557 = vmatprep.mubr.f32.mxu0 %v1225
    %2558 = vmatmul.mubr.f32.gmra.mxu0 %v1224
    %v2559 = vpop.f32.mrf.mxu0
    %v2560 = vadd.f32 %v1697, %v2559
    %v2561 = vpop.f32.mrf.mxu0
    %v2562 = vadd.f32 %v1701, %v2561
    %2563 = vmatprep.mubr.f32.mxu0 %v1227
    %2564 = vmatmul.mubr.f32.gmra.mxu0 %v1226
    %v2565 = vpop.f32.mrf.mxu0
    %v2566 = vadd.f32 %v1697, %v2565
    %v2567 = vpop.f32.mrf.mxu0
    %v2568 = vadd.f32 %v1701, %v2567
    %2569 = vmatprep.mubr.f32.mxu0 %v1229
    %2570 = vmatmul.mubr.f32.gmra.mxu0 %v1228
    %v2571 = vpop.f32.mrf.mxu0
    %v2572 = vadd.f32 %v1697, %v2571
    %v2573 = vpop.f32.mrf.mxu0
    %v2574 = vadd.f32 %v1701, %v2573
    %2575 = vmatprep.mubr.f32.mxu0 %v1231
    %2576 = vmatmul.mubr.f32.gmra.mxu0 %v1230
    %v2577 = vpop.f32.mrf.mxu0
    %v2578 = vadd.f32 %v1697, %v2577
    %v2579 = vpop.f32.mrf.mxu0
    %v2580 = vadd.f32 %v1701, %v2579
    %2581 = vmatprep.mubr.f32.mxu0 %v1233
    %2582 = vmatmul.mubr.f32.gmra.mxu0 %v1232
    %v2583 = vpop.f32.mrf.mxu0
    %v2584 = vadd.f32 %v1697, %v2583
    %v2585 = vpop.f32.mrf.mxu0
    %v2586 = vadd.f32 %v1701, %v2585
    %2587 = vmatprep.mubr.f32.mxu0 %v1235
    %2588 = vmatmul.mubr.f32.gmra.mxu0 %v1234
    %v2589 = vpop.f32.mrf.mxu0
    %v2590 = vadd.f32 %v1697, %v2589
    %v2591 = vpop.f32.mrf.mxu0
    %v2592 = vadd.f32 %v1701, %v2591
    %2593 = vmatprep.mubr.f32.mxu0 %v1237
    %2594 = vmatmul.mubr.f32.gmra.mxu0 %v1236
    %v2595 = vpop.f32.mrf.mxu0
    %v2596 = vadd.f32 %v1697, %v2595
    %v2597 = vpop.f32.mrf.mxu0
    %v2598 = vadd.f32 %v1701, %v2597
    %2599 = vmatprep.mubr.f32.mxu0 %v1239
    %2600 = vmatmul.mubr.f32.gmra.mxu0 %v1238
    %v2601 = vpop.f32.mrf.mxu0
    %v2602 = vadd.f32 %v1697, %v2601
    %v2603 = vpop.f32.mrf.mxu0
    %v2604 = vadd.f32 %v1701, %v2603
    %2605 = vmatprep.mubr.f32.mxu0 %v1241
    %2606 = vmatmul.mubr.f32.gmra.mxu0 %v1240
    %v2607 = vpop.f32.mrf.mxu0
    %v2608 = vadd.f32 %v1697, %v2607
    %v2609 = vpop.f32.mrf.mxu0
    %v2610 = vadd.f32 %v1701, %v2609
    %2611 = vmatprep.mubr.f32.mxu0 %v1243
    %2612 = vmatmul.mubr.f32.gmra.mxu0 %v1242
    %v2613 = vpop.f32.mrf.mxu0
    %v2614 = vadd.f32 %v1697, %v2613
    %v2615 = vpop.f32.mrf.mxu0
    %v2616 = vadd.f32 %v1701, %v2615
    %2617 = vmatprep.mubr.f32.mxu0 %v1245
    %2618 = vmatmul.mubr.f32.gmra.mxu0 %v1244
    %v2619 = vpop.f32.mrf.mxu0
    %v2620 = vadd.f32 %v1697, %v2619
    %v2621 = vpop.f32.mrf.mxu0
    %v2622 = vadd.f32 %v1701, %v2621
    %2623 = vmatprep.mubr.f32.mxu0 %v1247
    %2624 = vmatmul.mubr.f32.gmra.mxu0 %v1246
    %v2625 = vpop.f32.mrf.mxu0
    %v2626 = vadd.f32 %v1697, %v2625
    %v2627 = vpop.f32.mrf.mxu0
    %v2628 = vadd.f32 %v1701, %v2627
    %2629 = vmatprep.mubr.f32.mxu0 %v1249
    %2630 = vmatmul.mubr.f32.gmra.mxu0 %v1248
    %v2631 = vpop.f32.mrf.mxu0
    %v2632 = vadd.f32 %v1697, %v2631
    %v2633 = vpop.f32.mrf.mxu0
    %v2634 = vadd.f32 %v1701, %v2633
    %2635 = vmatprep.mubr.f32.mxu0 %v1251
    %2636 = vmatmul.mubr.f32.gmra.mxu0 %v1250
    %v2637 = vpop.f32.mrf.mxu0
    %v2638 = vadd.f32 %v1697, %v2637
    %v2639 = vpop.f32.mrf.mxu0
    %v2640 = vadd.f32 %v1701, %v2639
    %2641 = vmatprep.mubr.f32.mxu0 %v1253
    %2642 = vmatmul.mubr.f32.gmra.mxu0 %v1252
    %v2643 = vpop.f32.mrf.mxu0
    %v2644 = vadd.f32 %v1697, %v2643
    %v2645 = vpop.f32.mrf.mxu0
    %v2646 = vadd.f32 %v1701, %v2645
    %2647 = vmatprep.mubr.f32.mxu0 %v1255
    %2648 = vmatmul.mubr.f32.gmra.mxu0 %v1254
    %v2649 = vpop.f32.mrf.mxu0
    %v2650 = vadd.f32 %v1697, %v2649
    %v2651 = vpop.f32.mrf.mxu0
    %v2652 = vadd.f32 %v1701, %v2651
    %2653 = vmatprep.mubr.f32.mxu0 %v1257
    %2654 = vmatmul.mubr.f32.gmra.mxu0 %v1256
    %v2655 = vpop.f32.mrf.mxu0
    %v2656 = vadd.f32 %v1697, %v2655
    %v2657 = vpop.f32.mrf.mxu0
    %v2658 = vadd.f32 %v1701, %v2657
    %2659 = vmatprep.mubr.f32.mxu0 %v1259
    %2660 = vmatmul.mubr.f32.gmra.mxu0 %v1258
    %v2661 = vpop.f32.mrf.mxu0
    %v2662 = vadd.f32 %v1697, %v2661
    %v2663 = vpop.f32.mrf.mxu0
    %v2664 = vadd.f32 %v1701, %v2663
    %2665 = vmatprep.mubr.f32.mxu0 %v1261
    %2666 = vmatmul.mubr.f32.gmra.mxu0 %v1260
    %v2667 = vpop.f32.mrf.mxu0
    %v2668 = vadd.f32 %v1697, %v2667
    %v2669 = vpop.f32.mrf.mxu0
    %v2670 = vadd.f32 %v1701, %v2669
    %2671 = vmatprep.mubr.f32.mxu0 %v1263
    %2672 = vmatmul.mubr.f32.gmra.mxu0 %v1262
    %v2673 = vpop.f32.mrf.mxu0
    %v2674 = vadd.f32 %v1697, %v2673
    %v2675 = vpop.f32.mrf.mxu0
    %v2676 = vadd.f32 %v1701, %v2675
    %2677 = vmatprep.mubr.f32.mxu0 %v1265
    %2678 = vmatmul.mubr.f32.gmra.mxu0 %v1264
    %v2679 = vpop.f32.mrf.mxu0
    %v2680 = vadd.f32 %v1697, %v2679
    %v2681 = vpop.f32.mrf.mxu0
    %v2682 = vadd.f32 %v1701, %v2681
    %2683 = vmatprep.mubr.f32.mxu0 %v1267
    %2684 = vmatmul.mubr.f32.gmra.mxu0 %v1266
    %v2685 = vpop.f32.mrf.mxu0
    %v2686 = vadd.f32 %v1697, %v2685
    %v2687 = vpop.f32.mrf.mxu0
    %v2688 = vadd.f32 %v1701, %v2687
    %2689 = vmatprep.mubr.f32.mxu0 %v1269
    %2690 = vmatmul.mubr.f32.gmra.mxu0 %v1268
    %v2691 = vpop.f32.mrf.mxu0
    %v2692 = vadd.f32 %v1697, %v2691
    %v2693 = vpop.f32.mrf.mxu0
    %v2694 = vadd.f32 %v1701, %v2693
    %2695 = vmatprep.mubr.f32.mxu0 %v1271
    %2696 = vmatmul.mubr.f32.gmra.mxu0 %v1270
    %v2697 = vpop.f32.mrf.mxu0
    %v2698 = vadd.f32 %v1697, %v2697
    %v2699 = vpop.f32.mrf.mxu0
    %v2700 = vadd.f32 %v1701, %v2699
    %2701 = vmatprep.mubr.f32.mxu0 %v1273
    %2702 = vmatmul.mubr.f32.gmra.mxu0 %v1272
    %v2703 = vpop.f32.mrf.mxu0
    %v2704 = vadd.f32 %v1697, %v2703
    %v2705 = vpop.f32.mrf.mxu0
    %v2706 = vadd.f32 %v1701, %v2705
    %2707 = vmatprep.mubr.f32.mxu0 %v1275
    %2708 = vmatmul.mubr.f32.gmra.mxu0 %v1274
    %v2709 = vpop.f32.mrf.mxu0
    %v2710 = vadd.f32 %v1697, %v2709
    %v2711 = vpop.f32.mrf.mxu0
    %v2712 = vadd.f32 %v1701, %v2711
    %2713 = vmatprep.mubr.f32.mxu0 %v1277
    %2714 = vmatmul.mubr.f32.gmra.mxu0 %v1276
    %v2715 = vpop.f32.mrf.mxu0
    %v2716 = vadd.f32 %v1697, %v2715
    %v2717 = vpop.f32.mrf.mxu0
    %v2718 = vadd.f32 %v1701, %v2717
    %2719 = vmatprep.mubr.f32.mxu0 %v1279
    %2720 = vmatmul.mubr.f32.gmra.mxu0 %v1278
    %v2721 = vpop.f32.mrf.mxu0
    %v2722 = vadd.f32 %v1697, %v2721
    %v2723 = vpop.f32.mrf.mxu0
    %v2724 = vadd.f32 %v1701, %v2723
    %2725 = vmatprep.mubr.f32.mxu0 %v1281
    %2726 = vmatmul.mubr.f32.gmra.mxu0 %v1280
    %v2727 = vpop.f32.mrf.mxu0
    %v2728 = vadd.f32 %v1697, %v2727
    %v2729 = vpop.f32.mrf.mxu0
    %v2730 = vadd.f32 %v1701, %v2729
    %2731 = vmatprep.mubr.f32.mxu0 %v1283
    %2732 = vmatmul.mubr.f32.gmra.mxu0 %v1282
    %v2733 = vpop.f32.mrf.mxu0
    %v2734 = vadd.f32 %v1697, %v2733
    %v2735 = vpop.f32.mrf.mxu0
    %v2736 = vadd.f32 %v1701, %v2735
    %2737 = vdwg.mxu0
    %v2738 = vmax.f32 %v1777, 0.0
    %v2739 = vmax.f32 %v1779, 0.0
    %v2740 = vmax.f32 %v2034, 0.0
    %v2741 = vmax.f32 %v2036, 0.0
    %v2742 = vmax.f32 %v2291, 0.0
    %v2743 = vmax.f32 %v2293, 0.0
    %v2744 = vmax.f32 %v2548, 0.0
    %v2745 = vmax.f32 %v2550, 0.0
    %v2746 = vmax.f32 %v1783, 0.0
    %v2747 = vmax.f32 %v1785, 0.0
    %v2748 = vmax.f32 %v2040, 0.0
    %v2749 = vmax.f32 %v2042, 0.0
    %v2750 = vmax.f32 %v2297, 0.0
    %v2751 = vmax.f32 %v2299, 0.0
    %v2752 = vmax.f32 %v2554, 0.0
    %v2753 = vmax.f32 %v2556, 0.0
    %v2754 = vmax.f32 %v1789, 0.0
    %v2755 = vmax.f32 %v1791, 0.0
    %v2756 = vmax.f32 %v2046, 0.0
    %v2757 = vmax.f32 %v2048, 0.0
    %v2758 = vmax.f32 %v2303, 0.0
    %v2759 = vmax.f32 %v2305, 0.0
    %v2760 = vmax.f32 %v2560, 0.0
    %v2761 = vmax.f32 %v2562, 0.0
    %v2762 = vmax.f32 %v1795, 0.0
    %v2763 = vmax.f32 %v1797, 0.0
    %v2764 = vmax.f32 %v2052, 0.0
    %v2765 = vmax.f32 %v2054, 0.0
    %v2766 = vmax.f32 %v2309, 0.0
    %v2767 = vmax.f32 %v2311, 0.0
    %v2768 = vmax.f32 %v2566, 0.0
    %v2769 = vmax.f32 %v2568, 0.0
    %v2770 = vmax.f32 %v1801, 0.0
    %v2771 = vmax.f32 %v1803, 0.0
    %v2772 = vmax.f32 %v2058, 0.0
    %v2773 = vmax.f32 %v2060, 0.0
    %v2774 = vmax.f32 %v2315, 0.0
    %v2775 = vmax.f32 %v2317, 0.0
    %v2776 = vmax.f32 %v2572, 0.0
    %v2777 = vmax.f32 %v2574, 0.0
    %v2778 = vmax.f32 %v1807, 0.0
    %v2779 = vmax.f32 %v1809, 0.0
    %v2780 = vmax.f32 %v2064, 0.0
    %v2781 = vmax.f32 %v2066, 0.0
    %v2782 = vmax.f32 %v2321, 0.0
    %v2783 = vmax.f32 %v2323, 0.0
    %v2784 = vmax.f32 %v2578, 0.0
    %v2785 = vmax.f32 %v2580, 0.0
    %v2786 = vmax.f32 %v1813, 0.0
    %v2787 = vmax.f32 %v1815, 0.0
    %v2788 = vmax.f32 %v2070, 0.0
    %v2789 = vmax.f32 %v2072, 0.0
    %v2790 = vmax.f32 %v2327, 0.0
    %v2791 = vmax.f32 %v2329, 0.0
    %v2792 = vmax.f32 %v2584, 0.0
    %v2793 = vmax.f32 %v2586, 0.0
    %v2794 = vmax.f32 %v1819, 0.0
    %v2795 = vmax.f32 %v1821, 0.0
    %v2796 = vmax.f32 %v2076, 0.0
    %v2797 = vmax.f32 %v2078, 0.0
    %v2798 = vmax.f32 %v2333, 0.0
    %v2799 = vmax.f32 %v2335, 0.0
    %v2800 = vmax.f32 %v2590, 0.0
    %v2801 = vmax.f32 %v2592, 0.0
    %v2802 = vmax.f32 %v1825, 0.0
    %v2803 = vmax.f32 %v1827, 0.0
    %v2804 = vmax.f32 %v2082, 0.0
    %v2805 = vmax.f32 %v2084, 0.0
    %v2806 = vmax.f32 %v2339, 0.0
    %v2807 = vmax.f32 %v2341, 0.0
    %v2808 = vmax.f32 %v2596, 0.0
    %v2809 = vmax.f32 %v2598, 0.0
    %v2810 = vmax.f32 %v1831, 0.0
    %v2811 = vmax.f32 %v1833, 0.0
    %v2812 = vmax.f32 %v2088, 0.0
    %v2813 = vmax.f32 %v2090, 0.0
    %v2814 = vmax.f32 %v2345, 0.0
    %v2815 = vmax.f32 %v2347, 0.0
    %v2816 = vmax.f32 %v2602, 0.0
    %v2817 = vmax.f32 %v2604, 0.0
    %v2818 = vmax.f32 %v1837, 0.0
    %v2819 = vmax.f32 %v1839, 0.0
    %v2820 = vmax.f32 %v2094, 0.0
    %v2821 = vmax.f32 %v2096, 0.0
    %v2822 = vmax.f32 %v2351, 0.0
    %v2823 = vmax.f32 %v2353, 0.0
    %v2824 = vmax.f32 %v2608, 0.0
    %v2825 = vmax.f32 %v2610, 0.0
    %v2826 = vmax.f32 %v1843, 0.0
    %v2827 = vmax.f32 %v1845, 0.0
    %v2828 = vmax.f32 %v2100, 0.0
    %v2829 = vmax.f32 %v2102, 0.0
    %v2830 = vmax.f32 %v2357, 0.0
    %v2831 = vmax.f32 %v2359, 0.0
    %v2832 = vmax.f32 %v2614, 0.0
    %v2833 = vmax.f32 %v2616, 0.0
    %v2834 = vmax.f32 %v1849, 0.0
    %v2835 = vmax.f32 %v1851, 0.0
    %v2836 = vmax.f32 %v2106, 0.0
    %v2837 = vmax.f32 %v2108, 0.0
    %v2838 = vmax.f32 %v2363, 0.0
    %v2839 = vmax.f32 %v2365, 0.0
    %v2840 = vmax.f32 %v2620, 0.0
    %v2841 = vmax.f32 %v2622, 0.0
    %v2842 = vmax.f32 %v1855, 0.0
    %v2843 = vmax.f32 %v1857, 0.0
    %v2844 = vmax.f32 %v2112, 0.0
    %v2845 = vmax.f32 %v2114, 0.0
    %v2846 = vmax.f32 %v2369, 0.0
    %v2847 = vmax.f32 %v2371, 0.0
    %v2848 = vmax.f32 %v2626, 0.0
    %v2849 = vmax.f32 %v2628, 0.0
    %v2850 = vmax.f32 %v1861, 0.0
    %v2851 = vmax.f32 %v1863, 0.0
    %v2852 = vmax.f32 %v2118, 0.0
    %v2853 = vmax.f32 %v2120, 0.0
    %v2854 = vmax.f32 %v2375, 0.0
    %v2855 = vmax.f32 %v2377, 0.0
    %v2856 = vmax.f32 %v2632, 0.0
    %v2857 = vmax.f32 %v2634, 0.0
    %v2858 = vmax.f32 %v1867, 0.0
    %v2859 = vmax.f32 %v1869, 0.0
    %v2860 = vmax.f32 %v2124, 0.0
    %v2861 = vmax.f32 %v2126, 0.0
    %v2862 = vmax.f32 %v2381, 0.0
    %v2863 = vmax.f32 %v2383, 0.0
    %v2864 = vmax.f32 %v2638, 0.0
    %v2865 = vmax.f32 %v2640, 0.0
    %v2866 = vmax.f32 %v1873, 0.0
    %v2867 = vmax.f32 %v1875, 0.0
    %v2868 = vmax.f32 %v2130, 0.0
    %v2869 = vmax.f32 %v2132, 0.0
    %v2870 = vmax.f32 %v2387, 0.0
    %v2871 = vmax.f32 %v2389, 0.0
    %v2872 = vmax.f32 %v2644, 0.0
    %v2873 = vmax.f32 %v2646, 0.0
    %v2874 = vmax.f32 %v1879, 0.0
    %v2875 = vmax.f32 %v1881, 0.0
    %v2876 = vmax.f32 %v2136, 0.0
    %v2877 = vmax.f32 %v2138, 0.0
    %v2878 = vmax.f32 %v2393, 0.0
    %v2879 = vmax.f32 %v2395, 0.0
    %v2880 = vmax.f32 %v2650, 0.0
    %v2881 = vmax.f32 %v2652, 0.0
    %v2882 = vmax.f32 %v1885, 0.0
    %v2883 = vmax.f32 %v1887, 0.0
    %v2884 = vmax.f32 %v2142, 0.0
    %v2885 = vmax.f32 %v2144, 0.0
    %v2886 = vmax.f32 %v2399, 0.0
    %v2887 = vmax.f32 %v2401, 0.0
    %v2888 = vmax.f32 %v2656, 0.0
    %v2889 = vmax.f32 %v2658, 0.0
    %v2890 = vmax.f32 %v1891, 0.0
    %v2891 = vmax.f32 %v1893, 0.0
    %v2892 = vmax.f32 %v2148, 0.0
    %v2893 = vmax.f32 %v2150, 0.0
    %v2894 = vmax.f32 %v2405, 0.0
    %v2895 = vmax.f32 %v2407, 0.0
    %v2896 = vmax.f32 %v2662, 0.0
    %v2897 = vmax.f32 %v2664, 0.0
    %v2898 = vmax.f32 %v1897, 0.0
    %v2899 = vmax.f32 %v1899, 0.0
    %v2900 = vmax.f32 %v2154, 0.0
    %v2901 = vmax.f32 %v2156, 0.0
    %v2902 = vmax.f32 %v2411, 0.0
    %v2903 = vmax.f32 %v2413, 0.0
    %v2904 = vmax.f32 %v2668, 0.0
    %v2905 = vmax.f32 %v2670, 0.0
    %v2906 = vmax.f32 %v1903, 0.0
    %v2907 = vmax.f32 %v1905, 0.0
    %v2908 = vmax.f32 %v2160, 0.0
    %v2909 = vmax.f32 %v2162, 0.0
    %v2910 = vmax.f32 %v2417, 0.0
    %v2911 = vmax.f32 %v2419, 0.0
    %v2912 = vmax.f32 %v2674, 0.0
    %v2913 = vmax.f32 %v2676, 0.0
    %v2914 = vmax.f32 %v1909, 0.0
    %v2915 = vmax.f32 %v1911, 0.0
    %v2916 = vmax.f32 %v2166, 0.0
    %v2917 = vmax.f32 %v2168, 0.0
    %v2918 = vmax.f32 %v2423, 0.0
    %v2919 = vmax.f32 %v2425, 0.0
    %v2920 = vmax.f32 %v2680, 0.0
    %v2921 = vmax.f32 %v2682, 0.0
    %v2922 = vmax.f32 %v1915, 0.0
    %v2923 = vmax.f32 %v1917, 0.0
    %v2924 = vmax.f32 %v2172, 0.0
    %v2925 = vmax.f32 %v2174, 0.0
    %v2926 = vmax.f32 %v2429, 0.0
    %v2927 = vmax.f32 %v2431, 0.0
    %v2928 = vmax.f32 %v2686, 0.0
    %v2929 = vmax.f32 %v2688, 0.0
    %v2930 = vmax.f32 %v1921, 0.0
    %v2931 = vmax.f32 %v1923, 0.0
    %v2932 = vmax.f32 %v2178, 0.0
    %v2933 = vmax.f32 %v2180, 0.0
    %v2934 = vmax.f32 %v2435, 0.0
    %v2935 = vmax.f32 %v2437, 0.0
    %v2936 = vmax.f32 %v2692, 0.0
    %v2937 = vmax.f32 %v2694, 0.0
    %v2938 = vmax.f32 %v1927, 0.0
    %v2939 = vmax.f32 %v1929, 0.0
    %v2940 = vmax.f32 %v2184, 0.0
    %v2941 = vmax.f32 %v2186, 0.0
    %v2942 = vmax.f32 %v2441, 0.0
    %v2943 = vmax.f32 %v2443, 0.0
    %v2944 = vmax.f32 %v2698, 0.0
    %v2945 = vmax.f32 %v2700, 0.0
    %v2946 = vmax.f32 %v1933, 0.0
    %v2947 = vmax.f32 %v1935, 0.0
    %v2948 = vmax.f32 %v2190, 0.0
    %v2949 = vmax.f32 %v2192, 0.0
    %v2950 = vmax.f32 %v2447, 0.0
    %v2951 = vmax.f32 %v2449, 0.0
    %v2952 = vmax.f32 %v2704, 0.0
    %v2953 = vmax.f32 %v2706, 0.0
    %v2954 = vmax.f32 %v1939, 0.0
    %v2955 = vmax.f32 %v1941, 0.0
    %v2956 = vmax.f32 %v2196, 0.0
    %v2957 = vmax.f32 %v2198, 0.0
    %v2958 = vmax.f32 %v2453, 0.0
    %v2959 = vmax.f32 %v2455, 0.0
    %v2960 = vmax.f32 %v2710, 0.0
    %v2961 = vmax.f32 %v2712, 0.0
    %v2962 = vmax.f32 %v1945, 0.0
    %v2963 = vmax.f32 %v1947, 0.0
    %v2964 = vmax.f32 %v2202, 0.0
    %v2965 = vmax.f32 %v2204, 0.0
    %v2966 = vmax.f32 %v2459, 0.0
    %v2967 = vmax.f32 %v2461, 0.0
    %v2968 = vmax.f32 %v2716, 0.0
    %v2969 = vmax.f32 %v2718, 0.0
    %v2970 = vmax.f32 %v1951, 0.0
    %v2971 = vmax.f32 %v1953, 0.0
    %v2972 = vmax.f32 %v2208, 0.0
    %v2973 = vmax.f32 %v2210, 0.0
    %v2974 = vmax.f32 %v2465, 0.0
    %v2975 = vmax.f32 %v2467, 0.0
    %v2976 = vmax.f32 %v2722, 0.0
    %v2977 = vmax.f32 %v2724, 0.0
    %v2978 = vmax.f32 %v1957, 0.0
    %v2979 = vmax.f32 %v1959, 0.0
    %v2980 = vmax.f32 %v2214, 0.0
    %v2981 = vmax.f32 %v2216, 0.0
    %v2982 = vmax.f32 %v2471, 0.0
    %v2983 = vmax.f32 %v2473, 0.0
    %v2984 = vmax.f32 %v2728, 0.0
    %v2985 = vmax.f32 %v2730, 0.0
    %v2986 = vmax.f32 %v1963, 0.0
    %v2987 = vmax.f32 %v1965, 0.0
    %v2988 = vmax.f32 %v2220, 0.0
    %v2989 = vmax.f32 %v2222, 0.0
    %v2990 = vmax.f32 %v2477, 0.0
    %v2991 = vmax.f32 %v2479, 0.0
    %v2992 = vmax.f32 %v2734, 0.0
    %v2993 = vmax.f32 %v2736, 0.0
    %v2994 = vld [vmem:[#allocation5] sm:$0xff]
    %v2995 = vld [vmem:[#allocation5 + $0x8] sm:$0xff]
    %v2996 = vld [vmem:[#allocation5 + $0x10] sm:$0xff]
    %v2997 = vld [vmem:[#allocation5 + $0x18] sm:$0xff]
    %v2998 = vld [vmem:[#allocation5 + $0x20] sm:$0xff]
    %v2999 = vld [vmem:[#allocation5 + $0x28] sm:$0xff]
    %v3000 = vld [vmem:[#allocation5 + $0x30] sm:$0xff]
    %v3001 = vld [vmem:[#allocation5 + $0x38] sm:$0xff]
    %v3002 = vld [vmem:[#allocation5 + $0x40] sm:$0xff]
    %v3003 = vld [vmem:[#allocation5 + $0x48] sm:$0xff]
    %v3004 = vld [vmem:[#allocation5 + $0x50] sm:$0xff]
    %v3005 = vld [vmem:[#allocation5 + $0x58] sm:$0xff]
    %v3006 = vld [vmem:[#allocation5 + $0x60] sm:$0xff]
    %v3007 = vld [vmem:[#allocation5 + $0x68] sm:$0xff]
    %v3008 = vld [vmem:[#allocation5 + $0x70] sm:$0xff]
    %v3009 = vld [vmem:[#allocation5 + $0x78] sm:$0xff]
    %v3010 = vld [vmem:[#allocation5 + $0x80] sm:$0xff]
    %v3011 = vld [vmem:[#allocation5 + $0x88] sm:$0xff]
    %v3012 = vld [vmem:[#allocation5 + $0x90] sm:$0xff]
    %v3013 = vld [vmem:[#allocation5 + $0x98] sm:$0xff]
    %v3014 = vld [vmem:[#allocation5 + $0xa0] sm:$0xff]
    %v3015 = vld [vmem:[#allocation5 + $0xa8] sm:$0xff]
    %v3016 = vld [vmem:[#allocation5 + $0xb0] sm:$0xff]
    %v3017 = vld [vmem:[#allocation5 + $0xb8] sm:$0xff]
    %v3018 = vld [vmem:[#allocation5 + $0xc0] sm:$0xff]
    %v3019 = vld [vmem:[#allocation5 + $0xc8] sm:$0xff]
    %v3020 = vld [vmem:[#allocation5 + $0xd0] sm:$0xff]
    %v3021 = vld [vmem:[#allocation5 + $0xd8] sm:$0xff]
    %v3022 = vld [vmem:[#allocation5 + $0xe0] sm:$0xff]
    %v3023 = vld [vmem:[#allocation5 + $0xe8] sm:$0xff]
    %v3024 = vld [vmem:[#allocation5 + $0xf0] sm:$0xff]
    %v3025 = vld [vmem:[#allocation5 + $0xf8] sm:$0xff]
    %v3026 = vld [vmem:[#allocation5 + $0x100] sm:$0xff]
    %v3027 = vld [vmem:[#allocation5 + $0x108] sm:$0xff]
    %v3028 = vld [vmem:[#allocation5 + $0x110] sm:$0xff]
    %v3029 = vld [vmem:[#allocation5 + $0x118] sm:$0xff]
    %v3030 = vld [vmem:[#allocation5 + $0x120] sm:$0xff]
    %v3031 = vld [vmem:[#allocation5 + $0x128] sm:$0xff]
    %v3032 = vld [vmem:[#allocation5 + $0x130] sm:$0xff]
    %v3033 = vld [vmem:[#allocation5 + $0x138] sm:$0xff]
    %v3034 = vld [vmem:[#allocation5 + $0x140] sm:$0xff]
    %v3035 = vld [vmem:[#allocation5 + $0x148] sm:$0xff]
    %v3036 = vld [vmem:[#allocation5 + $0x150] sm:$0xff]
    %v3037 = vld [vmem:[#allocation5 + $0x158] sm:$0xff]
    %v3038 = vld [vmem:[#allocation5 + $0x160] sm:$0xff]
    %v3039 = vld [vmem:[#allocation5 + $0x168] sm:$0xff]
    %v3040 = vld [vmem:[#allocation5 + $0x170] sm:$0xff]
    %v3041 = vld [vmem:[#allocation5 + $0x178] sm:$0xff]
    %v3042 = vld [vmem:[#allocation5 + $0x180] sm:$0xff]
    %v3043 = vld [vmem:[#allocation5 + $0x188] sm:$0xff]
    %v3044 = vld [vmem:[#allocation5 + $0x190] sm:$0xff]
    %v3045 = vld [vmem:[#allocation5 + $0x198] sm:$0xff]
    %v3046 = vld [vmem:[#allocation5 + $0x1a0] sm:$0xff]
    %v3047 = vld [vmem:[#allocation5 + $0x1a8] sm:$0xff]
    %v3048 = vld [vmem:[#allocation5 + $0x1b0] sm:$0xff]
    %v3049 = vld [vmem:[#allocation5 + $0x1b8] sm:$0xff]
    %v3050 = vld [vmem:[#allocation5 + $0x1c0] sm:$0xff]
    %v3051 = vld [vmem:[#allocation5 + $0x1c8] sm:$0xff]
    %v3052 = vld [vmem:[#allocation5 + $0x1d0] sm:$0xff]
    %v3053 = vld [vmem:[#allocation5 + $0x1d8] sm:$0xff]
    %v3054 = vld [vmem:[#allocation5 + $0x1e0] sm:$0xff]
    %v3055 = vld [vmem:[#allocation5 + $0x1e8] sm:$0xff]
    %v3056 = vld [vmem:[#allocation5 + $0x1f0] sm:$0xff]
    %v3057 = vld [vmem:[#allocation5 + $0x1f8] sm:$0xff]
    %v3058 = vld [vmem:[#allocation5 + $0x200] sm:$0xff]
    %v3059 = vld [vmem:[#allocation5 + $0x208] sm:$0xff]
    %v3060 = vld [vmem:[#allocation5 + $0x210] sm:$0xff]
    %v3061 = vld [vmem:[#allocation5 + $0x218] sm:$0xff]
    %v3062 = vld [vmem:[#allocation5 + $0x220] sm:$0xff]
    %v3063 = vld [vmem:[#allocation5 + $0x228] sm:$0xff]
    %v3064 = vld [vmem:[#allocation5 + $0x230] sm:$0xff]
    %v3065 = vld [vmem:[#allocation5 + $0x238] sm:$0xff]
    %v3066 = vld [vmem:[#allocation5 + $0x240] sm:$0xff]
    %v3067 = vld [vmem:[#allocation5 + $0x248] sm:$0xff]
    %v3068 = vld [vmem:[#allocation5 + $0x250] sm:$0xff]
    %v3069 = vld [vmem:[#allocation5 + $0x258] sm:$0xff]
    %v3070 = vld [vmem:[#allocation5 + $0x260] sm:$0xff]
    %v3071 = vld [vmem:[#allocation5 + $0x268] sm:$0xff]
    %v3072 = vld [vmem:[#allocation5 + $0x270] sm:$0xff]
    %v3073 = vld [vmem:[#allocation5 + $0x278] sm:$0xff]
    %v3074 = vld [vmem:[#allocation5 + $0x280] sm:$0xff]
    %v3075 = vld [vmem:[#allocation5 + $0x288] sm:$0xff]
    %v3076 = vld [vmem:[#allocation5 + $0x290] sm:$0xff]
    %v3077 = vld [vmem:[#allocation5 + $0x298] sm:$0xff]
    %v3078 = vld [vmem:[#allocation5 + $0x2a0] sm:$0xff]
    %v3079 = vld [vmem:[#allocation5 + $0x2a8] sm:$0xff]
    %v3080 = vld [vmem:[#allocation5 + $0x2b0] sm:$0xff]
    %v3081 = vld [vmem:[#allocation5 + $0x2b8] sm:$0xff]
    %v3082 = vld [vmem:[#allocation5 + $0x2c0] sm:$0xff]
    %v3083 = vld [vmem:[#allocation5 + $0x2c8] sm:$0xff]
    %v3084 = vld [vmem:[#allocation5 + $0x2d0] sm:$0xff]
    %v3085 = vld [vmem:[#allocation5 + $0x2d8] sm:$0xff]
    %v3086 = vld [vmem:[#allocation5 + $0x2e0] sm:$0xff]
    %v3087 = vld [vmem:[#allocation5 + $0x2e8] sm:$0xff]
    %v3088 = vld [vmem:[#allocation5 + $0x2f0] sm:$0xff]
    %v3089 = vld [vmem:[#allocation5 + $0x2f8] sm:$0xff]
    %v3090 = vld [vmem:[#allocation5 + $0x300] sm:$0xff]
    %v3091 = vld [vmem:[#allocation5 + $0x308] sm:$0xff]
    %v3092 = vld [vmem:[#allocation5 + $0x310] sm:$0xff]
    %v3093 = vld [vmem:[#allocation5 + $0x318] sm:$0xff]
    %v3094 = vld [vmem:[#allocation5 + $0x320] sm:$0xff]
    %v3095 = vld [vmem:[#allocation5 + $0x328] sm:$0xff]
    %v3096 = vld [vmem:[#allocation5 + $0x330] sm:$0xff]
    %v3097 = vld [vmem:[#allocation5 + $0x338] sm:$0xff]
    %v3098 = vld [vmem:[#allocation5 + $0x340] sm:$0xff]
    %v3099 = vld [vmem:[#allocation5 + $0x348] sm:$0xff]
    %v3100 = vld [vmem:[#allocation5 + $0x350] sm:$0xff]
    %v3101 = vld [vmem:[#allocation5 + $0x358] sm:$0xff]
    %v3102 = vld [vmem:[#allocation5 + $0x360] sm:$0xff]
    %v3103 = vld [vmem:[#allocation5 + $0x368] sm:$0xff]
    %v3104 = vld [vmem:[#allocation5 + $0x370] sm:$0xff]
    %v3105 = vld [vmem:[#allocation5 + $0x378] sm:$0xff]
    %v3106 = vld [vmem:[#allocation5 + $0x380] sm:$0xff]
    %v3107 = vld [vmem:[#allocation5 + $0x388] sm:$0xff]
    %v3108 = vld [vmem:[#allocation5 + $0x390] sm:$0xff]
    %v3109 = vld [vmem:[#allocation5 + $0x398] sm:$0xff]
    %v3110 = vld [vmem:[#allocation5 + $0x3a0] sm:$0xff]
    %v3111 = vld [vmem:[#allocation5 + $0x3a8] sm:$0xff]
    %v3112 = vld [vmem:[#allocation5 + $0x3b0] sm:$0xff]
    %v3113 = vld [vmem:[#allocation5 + $0x3b8] sm:$0xff]
    %v3114 = vld [vmem:[#allocation5 + $0x3c0] sm:$0xff]
    %v3115 = vld [vmem:[#allocation5 + $0x3c8] sm:$0xff]
    %v3116 = vld [vmem:[#allocation5 + $0x3d0] sm:$0xff]
    %v3117 = vld [vmem:[#allocation5 + $0x3d8] sm:$0xff]
    %v3118 = vld [vmem:[#allocation5 + $0x3e0] sm:$0xff]
    %v3119 = vld [vmem:[#allocation5 + $0x3e8] sm:$0xff]
    %v3120 = vld [vmem:[#allocation5 + $0x3f0] sm:$0xff]
    %v3121 = vld [vmem:[#allocation5 + $0x3f8] sm:$0xff]
    %v3122 = vunpack.c.l.bf16 %v2994
    %v3123 = vunpack.c.h.bf16 %v2994
    %v3124 = vunpack.c.l.bf16 %v2995
    %v3125 = vunpack.c.h.bf16 %v2995
    %v3126 = vunpack.c.l.bf16 %v2996
    %v3127 = vunpack.c.h.bf16 %v2996
    %v3128 = vunpack.c.l.bf16 %v2997
    %v3129 = vunpack.c.h.bf16 %v2997
    %v3130 = vunpack.c.l.bf16 %v2998
    %v3131 = vunpack.c.h.bf16 %v2998
    %v3132 = vunpack.c.l.bf16 %v2999
    %v3133 = vunpack.c.h.bf16 %v2999
    %v3134 = vunpack.c.l.bf16 %v3000
    %v3135 = vunpack.c.h.bf16 %v3000
    %v3136 = vunpack.c.l.bf16 %v3001
    %v3137 = vunpack.c.h.bf16 %v3001
    %v3138 = vunpack.c.l.bf16 %v3002
    %v3139 = vunpack.c.h.bf16 %v3002
    %v3140 = vunpack.c.l.bf16 %v3003
    %v3141 = vunpack.c.h.bf16 %v3003
    %v3142 = vunpack.c.l.bf16 %v3004
    %v3143 = vunpack.c.h.bf16 %v3004
    %v3144 = vunpack.c.l.bf16 %v3005
    %v3145 = vunpack.c.h.bf16 %v3005
    %v3146 = vunpack.c.l.bf16 %v3006
    %v3147 = vunpack.c.h.bf16 %v3006
    %v3148 = vunpack.c.l.bf16 %v3007
    %v3149 = vunpack.c.h.bf16 %v3007
    %v3150 = vunpack.c.l.bf16 %v3008
    %v3151 = vunpack.c.h.bf16 %v3008
    %v3152 = vunpack.c.l.bf16 %v3009
    %v3153 = vunpack.c.h.bf16 %v3009
    %v3154 = vunpack.c.l.bf16 %v3010
    %v3155 = vunpack.c.h.bf16 %v3010
    %v3156 = vunpack.c.l.bf16 %v3011
    %v3157 = vunpack.c.h.bf16 %v3011
    %v3158 = vunpack.c.l.bf16 %v3012
    %v3159 = vunpack.c.h.bf16 %v3012
    %v3160 = vunpack.c.l.bf16 %v3013
    %v3161 = vunpack.c.h.bf16 %v3013
    %v3162 = vunpack.c.l.bf16 %v3014
    %v3163 = vunpack.c.h.bf16 %v3014
    %v3164 = vunpack.c.l.bf16 %v3015
    %v3165 = vunpack.c.h.bf16 %v3015
    %v3166 = vunpack.c.l.bf16 %v3016
    %v3167 = vunpack.c.h.bf16 %v3016
    %v3168 = vunpack.c.l.bf16 %v3017
    %v3169 = vunpack.c.h.bf16 %v3017
    %v3170 = vunpack.c.l.bf16 %v3018
    %v3171 = vunpack.c.h.bf16 %v3018
    %v3172 = vunpack.c.l.bf16 %v3019
    %v3173 = vunpack.c.h.bf16 %v3019
    %v3174 = vunpack.c.l.bf16 %v3020
    %v3175 = vunpack.c.h.bf16 %v3020
    %v3176 = vunpack.c.l.bf16 %v3021
    %v3177 = vunpack.c.h.bf16 %v3021
    %v3178 = vunpack.c.l.bf16 %v3022
    %v3179 = vunpack.c.h.bf16 %v3022
    %v3180 = vunpack.c.l.bf16 %v3023
    %v3181 = vunpack.c.h.bf16 %v3023
    %v3182 = vunpack.c.l.bf16 %v3024
    %v3183 = vunpack.c.h.bf16 %v3024
    %v3184 = vunpack.c.l.bf16 %v3025
    %v3185 = vunpack.c.h.bf16 %v3025
    %v3186 = vunpack.c.l.bf16 %v3026
    %v3187 = vunpack.c.h.bf16 %v3026
    %v3188 = vunpack.c.l.bf16 %v3027
    %v3189 = vunpack.c.h.bf16 %v3027
    %v3190 = vunpack.c.l.bf16 %v3028
    %v3191 = vunpack.c.h.bf16 %v3028
    %v3192 = vunpack.c.l.bf16 %v3029
    %v3193 = vunpack.c.h.bf16 %v3029
    %v3194 = vunpack.c.l.bf16 %v3030
    %v3195 = vunpack.c.h.bf16 %v3030
    %v3196 = vunpack.c.l.bf16 %v3031
    %v3197 = vunpack.c.h.bf16 %v3031
    %v3198 = vunpack.c.l.bf16 %v3032
    %v3199 = vunpack.c.h.bf16 %v3032
    %v3200 = vunpack.c.l.bf16 %v3033
    %v3201 = vunpack.c.h.bf16 %v3033
    %v3202 = vunpack.c.l.bf16 %v3034
    %v3203 = vunpack.c.h.bf16 %v3034
    %v3204 = vunpack.c.l.bf16 %v3035
    %v3205 = vunpack.c.h.bf16 %v3035
    %v3206 = vunpack.c.l.bf16 %v3036
    %v3207 = vunpack.c.h.bf16 %v3036
    %v3208 = vunpack.c.l.bf16 %v3037
    %v3209 = vunpack.c.h.bf16 %v3037
    %v3210 = vunpack.c.l.bf16 %v3038
    %v3211 = vunpack.c.h.bf16 %v3038
    %v3212 = vunpack.c.l.bf16 %v3039
    %v3213 = vunpack.c.h.bf16 %v3039
    %v3214 = vunpack.c.l.bf16 %v3040
    %v3215 = vunpack.c.h.bf16 %v3040
    %v3216 = vunpack.c.l.bf16 %v3041
    %v3217 = vunpack.c.h.bf16 %v3041
    %v3218 = vunpack.c.l.bf16 %v3042
    %v3219 = vunpack.c.h.bf16 %v3042
    %v3220 = vunpack.c.l.bf16 %v3043
    %v3221 = vunpack.c.h.bf16 %v3043
    %v3222 = vunpack.c.l.bf16 %v3044
    %v3223 = vunpack.c.h.bf16 %v3044
    %v3224 = vunpack.c.l.bf16 %v3045
    %v3225 = vunpack.c.h.bf16 %v3045
    %v3226 = vunpack.c.l.bf16 %v3046
    %v3227 = vunpack.c.h.bf16 %v3046
    %v3228 = vunpack.c.l.bf16 %v3047
    %v3229 = vunpack.c.h.bf16 %v3047
    %v3230 = vunpack.c.l.bf16 %v3048
    %v3231 = vunpack.c.h.bf16 %v3048
    %v3232 = vunpack.c.l.bf16 %v3049
    %v3233 = vunpack.c.h.bf16 %v3049
    %v3234 = vunpack.c.l.bf16 %v3050
    %v3235 = vunpack.c.h.bf16 %v3050
    %v3236 = vunpack.c.l.bf16 %v3051
    %v3237 = vunpack.c.h.bf16 %v3051
    %v3238 = vunpack.c.l.bf16 %v3052
    %v3239 = vunpack.c.h.bf16 %v3052
    %v3240 = vunpack.c.l.bf16 %v3053
    %v3241 = vunpack.c.h.bf16 %v3053
    %v3242 = vunpack.c.l.bf16 %v3054
    %v3243 = vunpack.c.h.bf16 %v3054
    %v3244 = vunpack.c.l.bf16 %v3055
    %v3245 = vunpack.c.h.bf16 %v3055
    %v3246 = vunpack.c.l.bf16 %v3056
    %v3247 = vunpack.c.h.bf16 %v3056
    %v3248 = vunpack.c.l.bf16 %v3057
    %v3249 = vunpack.c.h.bf16 %v3057
    %v3250 = vunpack.c.l.bf16 %v3058
    %v3251 = vunpack.c.h.bf16 %v3058
    %v3252 = vunpack.c.l.bf16 %v3059
    %v3253 = vunpack.c.h.bf16 %v3059
    %v3254 = vunpack.c.l.bf16 %v3060
    %v3255 = vunpack.c.h.bf16 %v3060
    %v3256 = vunpack.c.l.bf16 %v3061
    %v3257 = vunpack.c.h.bf16 %v3061
    %v3258 = vunpack.c.l.bf16 %v3062
    %v3259 = vunpack.c.h.bf16 %v3062
    %v3260 = vunpack.c.l.bf16 %v3063
    %v3261 = vunpack.c.h.bf16 %v3063
    %v3262 = vunpack.c.l.bf16 %v3064
    %v3263 = vunpack.c.h.bf16 %v3064
    %v3264 = vunpack.c.l.bf16 %v3065
    %v3265 = vunpack.c.h.bf16 %v3065
    %v3266 = vunpack.c.l.bf16 %v3066
    %v3267 = vunpack.c.h.bf16 %v3066
    %v3268 = vunpack.c.l.bf16 %v3067
    %v3269 = vunpack.c.h.bf16 %v3067
    %v3270 = vunpack.c.l.bf16 %v3068
    %v3271 = vunpack.c.h.bf16 %v3068
    %v3272 = vunpack.c.l.bf16 %v3069
    %v3273 = vunpack.c.h.bf16 %v3069
    %v3274 = vunpack.c.l.bf16 %v3070
    %v3275 = vunpack.c.h.bf16 %v3070
    %v3276 = vunpack.c.l.bf16 %v3071
    %v3277 = vunpack.c.h.bf16 %v3071
    %v3278 = vunpack.c.l.bf16 %v3072
    %v3279 = vunpack.c.h.bf16 %v3072
    %v3280 = vunpack.c.l.bf16 %v3073
    %v3281 = vunpack.c.h.bf16 %v3073
    %v3282 = vunpack.c.l.bf16 %v3074
    %v3283 = vunpack.c.h.bf16 %v3074
    %v3284 = vunpack.c.l.bf16 %v3075
    %v3285 = vunpack.c.h.bf16 %v3075
    %v3286 = vunpack.c.l.bf16 %v3076
    %v3287 = vunpack.c.h.bf16 %v3076
    %v3288 = vunpack.c.l.bf16 %v3077
    %v3289 = vunpack.c.h.bf16 %v3077
    %v3290 = vunpack.c.l.bf16 %v3078
    %v3291 = vunpack.c.h.bf16 %v3078
    %v3292 = vunpack.c.l.bf16 %v3079
    %v3293 = vunpack.c.h.bf16 %v3079
    %v3294 = vunpack.c.l.bf16 %v3080
    %v3295 = vunpack.c.h.bf16 %v3080
    %v3296 = vunpack.c.l.bf16 %v3081
    %v3297 = vunpack.c.h.bf16 %v3081
    %v3298 = vunpack.c.l.bf16 %v3082
    %v3299 = vunpack.c.h.bf16 %v3082
    %v3300 = vunpack.c.l.bf16 %v3083
    %v3301 = vunpack.c.h.bf16 %v3083
    %v3302 = vunpack.c.l.bf16 %v3084
    %v3303 = vunpack.c.h.bf16 %v3084
    %v3304 = vunpack.c.l.bf16 %v3085
    %v3305 = vunpack.c.h.bf16 %v3085
    %v3306 = vunpack.c.l.bf16 %v3086
    %v3307 = vunpack.c.h.bf16 %v3086
    %v3308 = vunpack.c.l.bf16 %v3087
    %v3309 = vunpack.c.h.bf16 %v3087
    %v3310 = vunpack.c.l.bf16 %v3088
    %v3311 = vunpack.c.h.bf16 %v3088
    %v3312 = vunpack.c.l.bf16 %v3089
    %v3313 = vunpack.c.h.bf16 %v3089
    %v3314 = vunpack.c.l.bf16 %v3090
    %v3315 = vunpack.c.h.bf16 %v3090
    %v3316 = vunpack.c.l.bf16 %v3091
    %v3317 = vunpack.c.h.bf16 %v3091
    %v3318 = vunpack.c.l.bf16 %v3092
    %v3319 = vunpack.c.h.bf16 %v3092
    %v3320 = vunpack.c.l.bf16 %v3093
    %v3321 = vunpack.c.h.bf16 %v3093
    %v3322 = vunpack.c.l.bf16 %v3094
    %v3323 = vunpack.c.h.bf16 %v3094
    %v3324 = vunpack.c.l.bf16 %v3095
    %v3325 = vunpack.c.h.bf16 %v3095
    %v3326 = vunpack.c.l.bf16 %v3096
    %v3327 = vunpack.c.h.bf16 %v3096
    %v3328 = vunpack.c.l.bf16 %v3097
    %v3329 = vunpack.c.h.bf16 %v3097
    %v3330 = vunpack.c.l.bf16 %v3098
    %v3331 = vunpack.c.h.bf16 %v3098
    %v3332 = vunpack.c.l.bf16 %v3099
    %v3333 = vunpack.c.h.bf16 %v3099
    %v3334 = vunpack.c.l.bf16 %v3100
    %v3335 = vunpack.c.h.bf16 %v3100
    %v3336 = vunpack.c.l.bf16 %v3101
    %v3337 = vunpack.c.h.bf16 %v3101
    %v3338 = vunpack.c.l.bf16 %v3102
    %v3339 = vunpack.c.h.bf16 %v3102
    %v3340 = vunpack.c.l.bf16 %v3103
    %v3341 = vunpack.c.h.bf16 %v3103
    %v3342 = vunpack.c.l.bf16 %v3104
    %v3343 = vunpack.c.h.bf16 %v3104
    %v3344 = vunpack.c.l.bf16 %v3105
    %v3345 = vunpack.c.h.bf16 %v3105
    %v3346 = vunpack.c.l.bf16 %v3106
    %v3347 = vunpack.c.h.bf16 %v3106
    %v3348 = vunpack.c.l.bf16 %v3107
    %v3349 = vunpack.c.h.bf16 %v3107
    %v3350 = vunpack.c.l.bf16 %v3108
    %v3351 = vunpack.c.h.bf16 %v3108
    %v3352 = vunpack.c.l.bf16 %v3109
    %v3353 = vunpack.c.h.bf16 %v3109
    %v3354 = vunpack.c.l.bf16 %v3110
    %v3355 = vunpack.c.h.bf16 %v3110
    %v3356 = vunpack.c.l.bf16 %v3111
    %v3357 = vunpack.c.h.bf16 %v3111
    %v3358 = vunpack.c.l.bf16 %v3112
    %v3359 = vunpack.c.h.bf16 %v3112
    %v3360 = vunpack.c.l.bf16 %v3113
    %v3361 = vunpack.c.h.bf16 %v3113
    %v3362 = vunpack.c.l.bf16 %v3114
    %v3363 = vunpack.c.h.bf16 %v3114
    %v3364 = vunpack.c.l.bf16 %v3115
    %v3365 = vunpack.c.h.bf16 %v3115
    %v3366 = vunpack.c.l.bf16 %v3116
    %v3367 = vunpack.c.h.bf16 %v3116
    %v3368 = vunpack.c.l.bf16 %v3117
    %v3369 = vunpack.c.h.bf16 %v3117
    %v3370 = vunpack.c.l.bf16 %v3118
    %v3371 = vunpack.c.h.bf16 %v3118
    %v3372 = vunpack.c.l.bf16 %v3119
    %v3373 = vunpack.c.h.bf16 %v3119
    %v3374 = vunpack.c.l.bf16 %v3120
    %v3375 = vunpack.c.h.bf16 %v3120
    %v3376 = vunpack.c.l.bf16 %v3121
    %v3377 = vunpack.c.h.bf16 %v3121
    %v3378 = vld [vmem:[%s10] sm:$0x3]
    %v3380 = vlaneseq
    %v3381 = vshrl.u32 %v3380, 7
    %v3382 = vsub.s32 0, %v3381
    %v3383 = vrot.slane %v3378, %v3382
    %v3384 = vlaneseq
    %v3385 = vshrl.u32 %v3384, 7
    %v3386 = vsub.s32 1, %v3385
    %v3387 = vrot.slane %v3378, %v3386
    %3390 = vmatprep.subr.mxu0 %v3153
    %3391 = vmatpush1.msra.mxu0 %v3152
    %3392 = vmatprep.subr.mxu0 %v3151
    %3393 = vmatpush1.msra.mxu0 %v3150
    %3394 = vmatprep.subr.mxu0 %v3149
    %3395 = vmatpush1.msra.mxu0 %v3148
    %3396 = vmatprep.subr.mxu0 %v3147
    %3397 = vmatpush1.msra.mxu0 %v3146
    %3398 = vmatprep.subr.mxu0 %v3145
    %3399 = vmatpush1.msra.mxu0 %v3144
    %3400 = vmatprep.subr.mxu0 %v3143
    %3401 = vmatpush1.msra.mxu0 %v3142
    %3402 = vmatprep.subr.mxu0 %v3141
    %3403 = vmatpush1.msra.mxu0 %v3140
    %3404 = vmatprep.subr.mxu0 %v3139
    %3405 = vmatpush1.msra.mxu0 %v3138
    %3406 = vmatprep.subr.mxu0 %v3137
    %3407 = vmatpush1.msra.mxu0 %v3136
    %3408 = vmatprep.subr.mxu0 %v3135
    %3409 = vmatpush1.msra.mxu0 %v3134
    %3410 = vmatprep.subr.mxu0 %v3133
    %3411 = vmatpush1.msra.mxu0 %v3132
    %3412 = vmatprep.subr.mxu0 %v3131
    %3413 = vmatpush1.msra.mxu0 %v3130
    %3414 = vmatprep.subr.mxu0 %v3129
    %3415 = vmatpush1.msra.mxu0 %v3128
    %3416 = vmatprep.subr.mxu0 %v3127
    %3417 = vmatpush1.msra.mxu0 %v3126
    %3418 = vmatprep.subr.mxu0 %v3125
    %3419 = vmatpush1.msra.mxu0 %v3124
    %3420 = vmatprep.subr.mxu0 %v3123
    %3421 = vmatpush1.msra.mxu0 %v3122
    %3422 = vmatprep.subr.mxu0 %v3185
    %3423 = vmatpush2.msra.mxu0 %v3184
    %3424 = vmatprep.subr.mxu0 %v3183
    %3425 = vmatpush2.msra.mxu0 %v3182
    %3426 = vmatprep.subr.mxu0 %v3181
    %3427 = vmatpush2.msra.mxu0 %v3180
    %3428 = vmatprep.subr.mxu0 %v3179
    %3429 = vmatpush2.msra.mxu0 %v3178
    %3430 = vmatprep.subr.mxu0 %v3177
    %3431 = vmatpush2.msra.mxu0 %v3176
    %3432 = vmatprep.subr.mxu0 %v3175
    %3433 = vmatpush2.msra.mxu0 %v3174
    %3434 = vmatprep.subr.mxu0 %v3173
    %3435 = vmatpush2.msra.mxu0 %v3172
    %3436 = vmatprep.subr.mxu0 %v3171
    %3437 = vmatpush2.msra.mxu0 %v3170
    %3438 = vmatprep.subr.mxu0 %v3169
    %3439 = vmatpush2.msra.mxu0 %v3168
    %3440 = vmatprep.subr.mxu0 %v3167
    %3441 = vmatpush2.msra.mxu0 %v3166
    %3442 = vmatprep.subr.mxu0 %v3165
    %3443 = vmatpush2.msra.mxu0 %v3164
    %3444 = vmatprep.subr.mxu0 %v3163
    %3445 = vmatpush2.msra.mxu0 %v3162
    %3446 = vmatprep.subr.mxu0 %v3161
    %3447 = vmatpush2.msra.mxu0 %v3160
    %3448 = vmatprep.subr.mxu0 %v3159
    %3449 = vmatpush2.msra.mxu0 %v3158
    %3450 = vmatprep.subr.mxu0 %v3157
    %3451 = vmatpush2.msra.mxu0 %v3156
    %3452 = vmatprep.subr.mxu0 %v3155
    %3453 = vmatpush2.msra.mxu0 %v3154
    %3454 = vmatprep.mubr.f32.mxu0 %v2739
    %3455 = vmatmul.mubr.f32.gmra.mxu0 %v2738
    %v3456 = vpop.f32.mrf.mxu0
    %v3457 = vadd.f32 %v3383, %v3456
    %v3458 = vpop.f32.mrf.mxu0
    %v3459 = vadd.f32 %v3387, %v3458
    %3460 = vmatprep.mubr.f32.mxu0 %v2747
    %3461 = vmatmul.mubr.f32.gmra.mxu0 %v2746
    %v3462 = vpop.f32.mrf.mxu0
    %v3463 = vadd.f32 %v3383, %v3462
    %v3464 = vpop.f32.mrf.mxu0
    %v3465 = vadd.f32 %v3387, %v3464
    %3466 = vmatprep.mubr.f32.mxu0 %v2755
    %3467 = vmatmul.mubr.f32.gmra.mxu0 %v2754
    %v3468 = vpop.f32.mrf.mxu0
    %v3469 = vadd.f32 %v3383, %v3468
    %v3470 = vpop.f32.mrf.mxu0
    %v3471 = vadd.f32 %v3387, %v3470
    %3472 = vmatprep.mubr.f32.mxu0 %v2763
    %3473 = vmatmul.mubr.f32.gmra.mxu0 %v2762
    %v3474 = vpop.f32.mrf.mxu0
    %v3475 = vadd.f32 %v3383, %v3474
    %v3476 = vpop.f32.mrf.mxu0
    %v3477 = vadd.f32 %v3387, %v3476
    %3478 = vmatprep.mubr.f32.mxu0 %v2771
    %3479 = vmatmul.mubr.f32.gmra.mxu0 %v2770
    %v3480 = vpop.f32.mrf.mxu0
    %v3481 = vadd.f32 %v3383, %v3480
    %v3482 = vpop.f32.mrf.mxu0
    %v3483 = vadd.f32 %v3387, %v3482
    %3484 = vmatprep.mubr.f32.mxu0 %v2779
    %3485 = vmatmul.mubr.f32.gmra.mxu0 %v2778
    %v3486 = vpop.f32.mrf.mxu0
    %v3487 = vadd.f32 %v3383, %v3486
    %v3488 = vpop.f32.mrf.mxu0
    %v3489 = vadd.f32 %v3387, %v3488
    %3490 = vmatprep.mubr.f32.mxu0 %v2787
    %3491 = vmatmul.mubr.f32.gmra.mxu0 %v2786
    %v3492 = vpop.f32.mrf.mxu0
    %v3493 = vadd.f32 %v3383, %v3492
    %v3494 = vpop.f32.mrf.mxu0
    %v3495 = vadd.f32 %v3387, %v3494
    %3496 = vmatprep.mubr.f32.mxu0 %v2795
    %3497 = vmatmul.mubr.f32.gmra.mxu0 %v2794
    %v3498 = vpop.f32.mrf.mxu0
    %v3499 = vadd.f32 %v3383, %v3498
    %v3500 = vpop.f32.mrf.mxu0
    %v3501 = vadd.f32 %v3387, %v3500
    %3502 = vmatprep.mubr.f32.mxu0 %v2803
    %3503 = vmatmul.mubr.f32.gmra.mxu0 %v2802
    %v3504 = vpop.f32.mrf.mxu0
    %v3505 = vadd.f32 %v3383, %v3504
    %v3506 = vpop.f32.mrf.mxu0
    %v3507 = vadd.f32 %v3387, %v3506
    %3508 = vmatprep.mubr.f32.mxu0 %v2811
    %3509 = vmatmul.mubr.f32.gmra.mxu0 %v2810
    %v3510 = vpop.f32.mrf.mxu0
    %v3511 = vadd.f32 %v3383, %v3510
    %v3512 = vpop.f32.mrf.mxu0
    %v3513 = vadd.f32 %v3387, %v3512
    %3514 = vmatprep.mubr.f32.mxu0 %v2819
    %3515 = vmatmul.mubr.f32.gmra.mxu0 %v2818
    %v3516 = vpop.f32.mrf.mxu0
    %v3517 = vadd.f32 %v3383, %v3516
    %v3518 = vpop.f32.mrf.mxu0
    %v3519 = vadd.f32 %v3387, %v3518
    %3520 = vmatprep.mubr.f32.mxu0 %v2827
    %3521 = vmatmul.mubr.f32.gmra.mxu0 %v2826
    %v3522 = vpop.f32.mrf.mxu0
    %v3523 = vadd.f32 %v3383, %v3522
    %v3524 = vpop.f32.mrf.mxu0
    %v3525 = vadd.f32 %v3387, %v3524
    %3526 = vmatprep.mubr.f32.mxu0 %v2835
    %3527 = vmatmul.mubr.f32.gmra.mxu0 %v2834
    %v3528 = vpop.f32.mrf.mxu0
    %v3529 = vadd.f32 %v3383, %v3528
    %v3530 = vpop.f32.mrf.mxu0
    %v3531 = vadd.f32 %v3387, %v3530
    %3532 = vmatprep.mubr.f32.mxu0 %v2843
    %3533 = vmatmul.mubr.f32.gmra.mxu0 %v2842
    %v3534 = vpop.f32.mrf.mxu0
    %v3535 = vadd.f32 %v3383, %v3534
    %v3536 = vpop.f32.mrf.mxu0
    %v3537 = vadd.f32 %v3387, %v3536
    %3538 = vmatprep.mubr.f32.mxu0 %v2851
    %3539 = vmatmul.mubr.f32.gmra.mxu0 %v2850
    %v3540 = vpop.f32.mrf.mxu0
    %v3541 = vadd.f32 %v3383, %v3540
    %v3542 = vpop.f32.mrf.mxu0
    %v3543 = vadd.f32 %v3387, %v3542
    %3544 = vmatprep.mubr.f32.mxu0 %v2859
    %3545 = vmatmul.mubr.f32.gmra.mxu0 %v2858
    %v3546 = vpop.f32.mrf.mxu0
    %v3547 = vadd.f32 %v3383, %v3546
    %v3548 = vpop.f32.mrf.mxu0
    %v3549 = vadd.f32 %v3387, %v3548
    %3550 = vmatprep.mubr.f32.mxu0 %v2867
    %3551 = vmatmul.mubr.f32.gmra.mxu0 %v2866
    %v3552 = vpop.f32.mrf.mxu0
    %v3553 = vadd.f32 %v3383, %v3552
    %v3554 = vpop.f32.mrf.mxu0
    %v3555 = vadd.f32 %v3387, %v3554
    %3556 = vmatprep.mubr.f32.mxu0 %v2875
    %3557 = vmatmul.mubr.f32.gmra.mxu0 %v2874
    %v3558 = vpop.f32.mrf.mxu0
    %v3559 = vadd.f32 %v3383, %v3558
    %v3560 = vpop.f32.mrf.mxu0
    %v3561 = vadd.f32 %v3387, %v3560
    %3562 = vmatprep.mubr.f32.mxu0 %v2883
    %3563 = vmatmul.mubr.f32.gmra.mxu0 %v2882
    %v3564 = vpop.f32.mrf.mxu0
    %v3565 = vadd.f32 %v3383, %v3564
    %v3566 = vpop.f32.mrf.mxu0
    %v3567 = vadd.f32 %v3387, %v3566
    %3568 = vmatprep.mubr.f32.mxu0 %v2891
    %3569 = vmatmul.mubr.f32.gmra.mxu0 %v2890
    %v3570 = vpop.f32.mrf.mxu0
    %v3571 = vadd.f32 %v3383, %v3570
    %v3572 = vpop.f32.mrf.mxu0
    %v3573 = vadd.f32 %v3387, %v3572
    %3574 = vmatprep.mubr.f32.mxu0 %v2899
    %3575 = vmatmul.mubr.f32.gmra.mxu0 %v2898
    %v3576 = vpop.f32.mrf.mxu0
    %v3577 = vadd.f32 %v3383, %v3576
    %v3578 = vpop.f32.mrf.mxu0
    %v3579 = vadd.f32 %v3387, %v3578
    %3580 = vmatprep.mubr.f32.mxu0 %v2907
    %3581 = vmatmul.mubr.f32.gmra.mxu0 %v2906
    %v3582 = vpop.f32.mrf.mxu0
    %v3583 = vadd.f32 %v3383, %v3582
    %v3584 = vpop.f32.mrf.mxu0
    %v3585 = vadd.f32 %v3387, %v3584
    %3586 = vmatprep.mubr.f32.mxu0 %v2915
    %3587 = vmatmul.mubr.f32.gmra.mxu0 %v2914
    %v3588 = vpop.f32.mrf.mxu0
    %v3589 = vadd.f32 %v3383, %v3588
    %v3590 = vpop.f32.mrf.mxu0
    %v3591 = vadd.f32 %v3387, %v3590
    %3592 = vmatprep.mubr.f32.mxu0 %v2923
    %3593 = vmatmul.mubr.f32.gmra.mxu0 %v2922
    %v3594 = vpop.f32.mrf.mxu0
    %v3595 = vadd.f32 %v3383, %v3594
    %v3596 = vpop.f32.mrf.mxu0
    %v3597 = vadd.f32 %v3387, %v3596
    %3598 = vmatprep.mubr.f32.mxu0 %v2931
    %3599 = vmatmul.mubr.f32.gmra.mxu0 %v2930
    %v3600 = vpop.f32.mrf.mxu0
    %v3601 = vadd.f32 %v3383, %v3600
    %v3602 = vpop.f32.mrf.mxu0
    %v3603 = vadd.f32 %v3387, %v3602
    %3604 = vmatprep.mubr.f32.mxu0 %v2939
    %3605 = vmatmul.mubr.f32.gmra.mxu0 %v2938
    %v3606 = vpop.f32.mrf.mxu0
    %v3607 = vadd.f32 %v3383, %v3606
    %v3608 = vpop.f32.mrf.mxu0
    %v3609 = vadd.f32 %v3387, %v3608
    %3610 = vmatprep.mubr.f32.mxu0 %v2947
    %3611 = vmatmul.mubr.f32.gmra.mxu0 %v2946
    %v3612 = vpop.f32.mrf.mxu0
    %v3613 = vadd.f32 %v3383, %v3612
    %v3614 = vpop.f32.mrf.mxu0
    %v3615 = vadd.f32 %v3387, %v3614
    %3616 = vmatprep.mubr.f32.mxu0 %v2955
    %3617 = vmatmul.mubr.f32.gmra.mxu0 %v2954
    %v3618 = vpop.f32.mrf.mxu0
    %v3619 = vadd.f32 %v3383, %v3618
    %v3620 = vpop.f32.mrf.mxu0
    %v3621 = vadd.f32 %v3387, %v3620
    %3622 = vmatprep.mubr.f32.mxu0 %v2963
    %3623 = vmatmul.mubr.f32.gmra.mxu0 %v2962
    %v3624 = vpop.f32.mrf.mxu0
    %v3625 = vadd.f32 %v3383, %v3624
    %v3626 = vpop.f32.mrf.mxu0
    %v3627 = vadd.f32 %v3387, %v3626
    %3628 = vmatprep.mubr.f32.mxu0 %v2971
    %3629 = vmatmul.mubr.f32.gmra.mxu0 %v2970
    %v3630 = vpop.f32.mrf.mxu0
    %v3631 = vadd.f32 %v3383, %v3630
    %v3632 = vpop.f32.mrf.mxu0
    %v3633 = vadd.f32 %v3387, %v3632
    %3634 = vmatprep.mubr.f32.mxu0 %v2979
    %3635 = vmatmul.mubr.f32.gmra.mxu0 %v2978
    %v3636 = vpop.f32.mrf.mxu0
    %v3637 = vadd.f32 %v3383, %v3636
    %v3638 = vpop.f32.mrf.mxu0
    %v3639 = vadd.f32 %v3387, %v3638
    %3640 = vmatprep.mubr.f32.mxu0 %v2987
    %3641 = vmatmul.mubr.f32.gmra.mxu0 %v2986
    %v3642 = vpop.f32.mrf.mxu0
    %v3643 = vadd.f32 %v3383, %v3642
    %v3644 = vpop.f32.mrf.mxu0
    %v3645 = vadd.f32 %v3387, %v3644
    %3646 = vdwg.mxu0
    %3647 = vmatprep.subr.mxu0 %v3217
    %3648 = vmatpush1.msra.mxu0 %v3216
    %3649 = vmatprep.subr.mxu0 %v3215
    %3650 = vmatpush1.msra.mxu0 %v3214
    %3651 = vmatprep.subr.mxu0 %v3213
    %3652 = vmatpush1.msra.mxu0 %v3212
    %3653 = vmatprep.subr.mxu0 %v3211
    %3654 = vmatpush1.msra.mxu0 %v3210
    %3655 = vmatprep.subr.mxu0 %v3209
    %3656 = vmatpush1.msra.mxu0 %v3208
    %3657 = vmatprep.subr.mxu0 %v3207
    %3658 = vmatpush1.msra.mxu0 %v3206
    %3659 = vmatprep.subr.mxu0 %v3205
    %3660 = vmatpush1.msra.mxu0 %v3204
    %3661 = vmatprep.subr.mxu0 %v3203
    %3662 = vmatpush1.msra.mxu0 %v3202
    %3663 = vmatprep.subr.mxu0 %v3201
    %3664 = vmatpush1.msra.mxu0 %v3200
    %3665 = vmatprep.subr.mxu0 %v3199
    %3666 = vmatpush1.msra.mxu0 %v3198
    %3667 = vmatprep.subr.mxu0 %v3197
    %3668 = vmatpush1.msra.mxu0 %v3196
    %3669 = vmatprep.subr.mxu0 %v3195
    %3670 = vmatpush1.msra.mxu0 %v3194
    %3671 = vmatprep.subr.mxu0 %v3193
    %3672 = vmatpush1.msra.mxu0 %v3192
    %3673 = vmatprep.subr.mxu0 %v3191
    %3674 = vmatpush1.msra.mxu0 %v3190
    %3675 = vmatprep.subr.mxu0 %v3189
    %3676 = vmatpush1.msra.mxu0 %v3188
    %3677 = vmatprep.subr.mxu0 %v3187
    %3678 = vmatpush1.msra.mxu0 %v3186
    %3679 = vmatprep.subr.mxu0 %v3249
    %3680 = vmatpush2.msra.mxu0 %v3248
    %3681 = vmatprep.subr.mxu0 %v3247
    %3682 = vmatpush2.msra.mxu0 %v3246
    %3683 = vmatprep.subr.mxu0 %v3245
    %3684 = vmatpush2.msra.mxu0 %v3244
    %3685 = vmatprep.subr.mxu0 %v3243
    %3686 = vmatpush2.msra.mxu0 %v3242
    %3687 = vmatprep.subr.mxu0 %v3241
    %3688 = vmatpush2.msra.mxu0 %v3240
    %3689 = vmatprep.subr.mxu0 %v3239
    %3690 = vmatpush2.msra.mxu0 %v3238
    %3691 = vmatprep.subr.mxu0 %v3237
    %3692 = vmatpush2.msra.mxu0 %v3236
    %3693 = vmatprep.subr.mxu0 %v3235
    %3694 = vmatpush2.msra.mxu0 %v3234
    %3695 = vmatprep.subr.mxu0 %v3233
    %3696 = vmatpush2.msra.mxu0 %v3232
    %3697 = vmatprep.subr.mxu0 %v3231
    %3698 = vmatpush2.msra.mxu0 %v3230
    %3699 = vmatprep.subr.mxu0 %v3229
    %3700 = vmatpush2.msra.mxu0 %v3228
    %3701 = vmatprep.subr.mxu0 %v3227
    %3702 = vmatpush2.msra.mxu0 %v3226
    %3703 = vmatprep.subr.mxu0 %v3225
    %3704 = vmatpush2.msra.mxu0 %v3224
    %3705 = vmatprep.subr.mxu0 %v3223
    %3706 = vmatpush2.msra.mxu0 %v3222
    %3707 = vmatprep.subr.mxu0 %v3221
    %3708 = vmatpush2.msra.mxu0 %v3220
    %3709 = vmatprep.subr.mxu0 %v3219
    %3710 = vmatpush2.msra.mxu0 %v3218
    %3711 = vmatprep.mubr.f32.mxu0 %v2741
    %3712 = vmatmul.mubr.f32.gmra.mxu0 %v2740
    %v3713 = vpop.f32.mrf.mxu0
    %v3714 = vadd.f32 %v3457, %v3713
    %v3715 = vpop.f32.mrf.mxu0
    %v3716 = vadd.f32 %v3459, %v3715
    %3717 = vmatprep.mubr.f32.mxu0 %v2749
    %3718 = vmatmul.mubr.f32.gmra.mxu0 %v2748
    %v3719 = vpop.f32.mrf.mxu0
    %v3720 = vadd.f32 %v3463, %v3719
    %v3721 = vpop.f32.mrf.mxu0
    %v3722 = vadd.f32 %v3465, %v3721
    %3723 = vmatprep.mubr.f32.mxu0 %v2757
    %3724 = vmatmul.mubr.f32.gmra.mxu0 %v2756
    %v3725 = vpop.f32.mrf.mxu0
    %v3726 = vadd.f32 %v3469, %v3725
    %v3727 = vpop.f32.mrf.mxu0
    %v3728 = vadd.f32 %v3471, %v3727
    %3729 = vmatprep.mubr.f32.mxu0 %v2765
    %3730 = vmatmul.mubr.f32.gmra.mxu0 %v2764
    %v3731 = vpop.f32.mrf.mxu0
    %v3732 = vadd.f32 %v3475, %v3731
    %v3733 = vpop.f32.mrf.mxu0
    %v3734 = vadd.f32 %v3477, %v3733
    %3735 = vmatprep.mubr.f32.mxu0 %v2773
    %3736 = vmatmul.mubr.f32.gmra.mxu0 %v2772
    %v3737 = vpop.f32.mrf.mxu0
    %v3738 = vadd.f32 %v3481, %v3737
    %v3739 = vpop.f32.mrf.mxu0
    %v3740 = vadd.f32 %v3483, %v3739
    %3741 = vmatprep.mubr.f32.mxu0 %v2781
    %3742 = vmatmul.mubr.f32.gmra.mxu0 %v2780
    %v3743 = vpop.f32.mrf.mxu0
    %v3744 = vadd.f32 %v3487, %v3743
    %v3745 = vpop.f32.mrf.mxu0
    %v3746 = vadd.f32 %v3489, %v3745
    %3747 = vmatprep.mubr.f32.mxu0 %v2789
    %3748 = vmatmul.mubr.f32.gmra.mxu0 %v2788
    %v3749 = vpop.f32.mrf.mxu0
    %v3750 = vadd.f32 %v3493, %v3749
    %v3751 = vpop.f32.mrf.mxu0
    %v3752 = vadd.f32 %v3495, %v3751
    %3753 = vmatprep.mubr.f32.mxu0 %v2797
    %3754 = vmatmul.mubr.f32.gmra.mxu0 %v2796
    %v3755 = vpop.f32.mrf.mxu0
    %v3756 = vadd.f32 %v3499, %v3755
    %v3757 = vpop.f32.mrf.mxu0
    %v3758 = vadd.f32 %v3501, %v3757
    %3759 = vmatprep.mubr.f32.mxu0 %v2805
    %3760 = vmatmul.mubr.f32.gmra.mxu0 %v2804
    %v3761 = vpop.f32.mrf.mxu0
    %v3762 = vadd.f32 %v3505, %v3761
    %v3763 = vpop.f32.mrf.mxu0
    %v3764 = vadd.f32 %v3507, %v3763
    %3765 = vmatprep.mubr.f32.mxu0 %v2813
    %3766 = vmatmul.mubr.f32.gmra.mxu0 %v2812
    %v3767 = vpop.f32.mrf.mxu0
    %v3768 = vadd.f32 %v3511, %v3767
    %v3769 = vpop.f32.mrf.mxu0
    %v3770 = vadd.f32 %v3513, %v3769
    %3771 = vmatprep.mubr.f32.mxu0 %v2821
    %3772 = vmatmul.mubr.f32.gmra.mxu0 %v2820
    %v3773 = vpop.f32.mrf.mxu0
    %v3774 = vadd.f32 %v3517, %v3773
    %v3775 = vpop.f32.mrf.mxu0
    %v3776 = vadd.f32 %v3519, %v3775
    %3777 = vmatprep.mubr.f32.mxu0 %v2829
    %3778 = vmatmul.mubr.f32.gmra.mxu0 %v2828
    %v3779 = vpop.f32.mrf.mxu0
    %v3780 = vadd.f32 %v3523, %v3779
    %v3781 = vpop.f32.mrf.mxu0
    %v3782 = vadd.f32 %v3525, %v3781
    %3783 = vmatprep.mubr.f32.mxu0 %v2837
    %3784 = vmatmul.mubr.f32.gmra.mxu0 %v2836
    %v3785 = vpop.f32.mrf.mxu0
    %v3786 = vadd.f32 %v3529, %v3785
    %v3787 = vpop.f32.mrf.mxu0
    %v3788 = vadd.f32 %v3531, %v3787
    %3789 = vmatprep.mubr.f32.mxu0 %v2845
    %3790 = vmatmul.mubr.f32.gmra.mxu0 %v2844
    %v3791 = vpop.f32.mrf.mxu0
    %v3792 = vadd.f32 %v3535, %v3791
    %v3793 = vpop.f32.mrf.mxu0
    %v3794 = vadd.f32 %v3537, %v3793
    %3795 = vmatprep.mubr.f32.mxu0 %v2853
    %3796 = vmatmul.mubr.f32.gmra.mxu0 %v2852
    %v3797 = vpop.f32.mrf.mxu0
    %v3798 = vadd.f32 %v3541, %v3797
    %v3799 = vpop.f32.mrf.mxu0
    %v3800 = vadd.f32 %v3543, %v3799
    %3801 = vmatprep.mubr.f32.mxu0 %v2861
    %3802 = vmatmul.mubr.f32.gmra.mxu0 %v2860
    %v3803 = vpop.f32.mrf.mxu0
    %v3804 = vadd.f32 %v3547, %v3803
    %v3805 = vpop.f32.mrf.mxu0
    %v3806 = vadd.f32 %v3549, %v3805
    %3807 = vmatprep.mubr.f32.mxu0 %v2869
    %3808 = vmatmul.mubr.f32.gmra.mxu0 %v2868
    %v3809 = vpop.f32.mrf.mxu0
    %v3810 = vadd.f32 %v3553, %v3809
    %v3811 = vpop.f32.mrf.mxu0
    %v3812 = vadd.f32 %v3555, %v3811
    %3813 = vmatprep.mubr.f32.mxu0 %v2877
    %3814 = vmatmul.mubr.f32.gmra.mxu0 %v2876
    %v3815 = vpop.f32.mrf.mxu0
    %v3816 = vadd.f32 %v3559, %v3815
    %v3817 = vpop.f32.mrf.mxu0
    %v3818 = vadd.f32 %v3561, %v3817
    %3819 = vmatprep.mubr.f32.mxu0 %v2885
    %3820 = vmatmul.mubr.f32.gmra.mxu0 %v2884
    %v3821 = vpop.f32.mrf.mxu0
    %v3822 = vadd.f32 %v3565, %v3821
    %v3823 = vpop.f32.mrf.mxu0
    %v3824 = vadd.f32 %v3567, %v3823
    %3825 = vmatprep.mubr.f32.mxu0 %v2893
    %3826 = vmatmul.mubr.f32.gmra.mxu0 %v2892
    %v3827 = vpop.f32.mrf.mxu0
    %v3828 = vadd.f32 %v3571, %v3827
    %v3829 = vpop.f32.mrf.mxu0
    %v3830 = vadd.f32 %v3573, %v3829
    %3831 = vmatprep.mubr.f32.mxu0 %v2901
    %3832 = vmatmul.mubr.f32.gmra.mxu0 %v2900
    %v3833 = vpop.f32.mrf.mxu0
    %v3834 = vadd.f32 %v3577, %v3833
    %v3835 = vpop.f32.mrf.mxu0
    %v3836 = vadd.f32 %v3579, %v3835
    %3837 = vmatprep.mubr.f32.mxu0 %v2909
    %3838 = vmatmul.mubr.f32.gmra.mxu0 %v2908
    %v3839 = vpop.f32.mrf.mxu0
    %v3840 = vadd.f32 %v3583, %v3839
    %v3841 = vpop.f32.mrf.mxu0
    %v3842 = vadd.f32 %v3585, %v3841
    %3843 = vmatprep.mubr.f32.mxu0 %v2917
    %3844 = vmatmul.mubr.f32.gmra.mxu0 %v2916
    %v3845 = vpop.f32.mrf.mxu0
    %v3846 = vadd.f32 %v3589, %v3845
    %v3847 = vpop.f32.mrf.mxu0
    %v3848 = vadd.f32 %v3591, %v3847
    %3849 = vmatprep.mubr.f32.mxu0 %v2925
    %3850 = vmatmul.mubr.f32.gmra.mxu0 %v2924
    %v3851 = vpop.f32.mrf.mxu0
    %v3852 = vadd.f32 %v3595, %v3851
    %v3853 = vpop.f32.mrf.mxu0
    %v3854 = vadd.f32 %v3597, %v3853
    %3855 = vmatprep.mubr.f32.mxu0 %v2933
    %3856 = vmatmul.mubr.f32.gmra.mxu0 %v2932
    %v3857 = vpop.f32.mrf.mxu0
    %v3858 = vadd.f32 %v3601, %v3857
    %v3859 = vpop.f32.mrf.mxu0
    %v3860 = vadd.f32 %v3603, %v3859
    %3861 = vmatprep.mubr.f32.mxu0 %v2941
    %3862 = vmatmul.mubr.f32.gmra.mxu0 %v2940
    %v3863 = vpop.f32.mrf.mxu0
    %v3864 = vadd.f32 %v3607, %v3863
    %v3865 = vpop.f32.mrf.mxu0
    %v3866 = vadd.f32 %v3609, %v3865
    %3867 = vmatprep.mubr.f32.mxu0 %v2949
    %3868 = vmatmul.mubr.f32.gmra.mxu0 %v2948
    %v3869 = vpop.f32.mrf.mxu0
    %v3870 = vadd.f32 %v3613, %v3869
    %v3871 = vpop.f32.mrf.mxu0
    %v3872 = vadd.f32 %v3615, %v3871
    %3873 = vmatprep.mubr.f32.mxu0 %v2957
    %3874 = vmatmul.mubr.f32.gmra.mxu0 %v2956
    %v3875 = vpop.f32.mrf.mxu0
    %v3876 = vadd.f32 %v3619, %v3875
    %v3877 = vpop.f32.mrf.mxu0
    %v3878 = vadd.f32 %v3621, %v3877
    %3879 = vmatprep.mubr.f32.mxu0 %v2965
    %3880 = vmatmul.mubr.f32.gmra.mxu0 %v2964
    %v3881 = vpop.f32.mrf.mxu0
    %v3882 = vadd.f32 %v3625, %v3881
    %v3883 = vpop.f32.mrf.mxu0
    %v3884 = vadd.f32 %v3627, %v3883
    %3885 = vmatprep.mubr.f32.mxu0 %v2973
    %3886 = vmatmul.mubr.f32.gmra.mxu0 %v2972
    %v3887 = vpop.f32.mrf.mxu0
    %v3888 = vadd.f32 %v3631, %v3887
    %v3889 = vpop.f32.mrf.mxu0
    %v3890 = vadd.f32 %v3633, %v3889
    %3891 = vmatprep.mubr.f32.mxu0 %v2981
    %3892 = vmatmul.mubr.f32.gmra.mxu0 %v2980
    %v3893 = vpop.f32.mrf.mxu0
    %v3894 = vadd.f32 %v3637, %v3893
    %v3895 = vpop.f32.mrf.mxu0
    %v3896 = vadd.f32 %v3639, %v3895
    %3897 = vmatprep.mubr.f32.mxu0 %v2989
    %3898 = vmatmul.mubr.f32.gmra.mxu0 %v2988
    %v3899 = vpop.f32.mrf.mxu0
    %v3900 = vadd.f32 %v3643, %v3899
    %v3901 = vpop.f32.mrf.mxu0
    %v3902 = vadd.f32 %v3645, %v3901
    %3903 = vdwg.mxu0
    %3904 = vmatprep.subr.mxu0 %v3281
    %3905 = vmatpush1.msra.mxu0 %v3280
    %3906 = vmatprep.subr.mxu0 %v3279
    %3907 = vmatpush1.msra.mxu0 %v3278
    %3908 = vmatprep.subr.mxu0 %v3277
    %3909 = vmatpush1.msra.mxu0 %v3276
    %3910 = vmatprep.subr.mxu0 %v3275
    %3911 = vmatpush1.msra.mxu0 %v3274
    %3912 = vmatprep.subr.mxu0 %v3273
    %3913 = vmatpush1.msra.mxu0 %v3272
    %3914 = vmatprep.subr.mxu0 %v3271
    %3915 = vmatpush1.msra.mxu0 %v3270
    %3916 = vmatprep.subr.mxu0 %v3269
    %3917 = vmatpush1.msra.mxu0 %v3268
    %3918 = vmatprep.subr.mxu0 %v3267
    %3919 = vmatpush1.msra.mxu0 %v3266
    %3920 = vmatprep.subr.mxu0 %v3265
    %3921 = vmatpush1.msra.mxu0 %v3264
    %3922 = vmatprep.subr.mxu0 %v3263
    %3923 = vmatpush1.msra.mxu0 %v3262
    %3924 = vmatprep.subr.mxu0 %v3261
    %3925 = vmatpush1.msra.mxu0 %v3260
    %3926 = vmatprep.subr.mxu0 %v3259
    %3927 = vmatpush1.msra.mxu0 %v3258
    %3928 = vmatprep.subr.mxu0 %v3257
    %3929 = vmatpush1.msra.mxu0 %v3256
    %3930 = vmatprep.subr.mxu0 %v3255
    %3931 = vmatpush1.msra.mxu0 %v3254
    %3932 = vmatprep.subr.mxu0 %v3253
    %3933 = vmatpush1.msra.mxu0 %v3252
    %3934 = vmatprep.subr.mxu0 %v3251
    %3935 = vmatpush1.msra.mxu0 %v3250
    %3936 = vmatprep.subr.mxu0 %v3313
    %3937 = vmatpush2.msra.mxu0 %v3312
    %3938 = vmatprep.subr.mxu0 %v3311
    %3939 = vmatpush2.msra.mxu0 %v3310
    %3940 = vmatprep.subr.mxu0 %v3309
    %3941 = vmatpush2.msra.mxu0 %v3308
    %3942 = vmatprep.subr.mxu0 %v3307
    %3943 = vmatpush2.msra.mxu0 %v3306
    %3944 = vmatprep.subr.mxu0 %v3305
    %3945 = vmatpush2.msra.mxu0 %v3304
    %3946 = vmatprep.subr.mxu0 %v3303
    %3947 = vmatpush2.msra.mxu0 %v3302
    %3948 = vmatprep.subr.mxu0 %v3301
    %3949 = vmatpush2.msra.mxu0 %v3300
    %3950 = vmatprep.subr.mxu0 %v3299
    %3951 = vmatpush2.msra.mxu0 %v3298
    %3952 = vmatprep.subr.mxu0 %v3297
    %3953 = vmatpush2.msra.mxu0 %v3296
    %3954 = vmatprep.subr.mxu0 %v3295
    %3955 = vmatpush2.msra.mxu0 %v3294
    %3956 = vmatprep.subr.mxu0 %v3293
    %3957 = vmatpush2.msra.mxu0 %v3292
    %3958 = vmatprep.subr.mxu0 %v3291
    %3959 = vmatpush2.msra.mxu0 %v3290
    %3960 = vmatprep.subr.mxu0 %v3289
    %3961 = vmatpush2.msra.mxu0 %v3288
    %3962 = vmatprep.subr.mxu0 %v3287
    %3963 = vmatpush2.msra.mxu0 %v3286
    %3964 = vmatprep.subr.mxu0 %v3285
    %3965 = vmatpush2.msra.mxu0 %v3284
    %3966 = vmatprep.subr.mxu0 %v3283
    %3967 = vmatpush2.msra.mxu0 %v3282
    %3968 = vmatprep.mubr.f32.mxu0 %v2743
    %3969 = vmatmul.mubr.f32.gmra.mxu0 %v2742
    %v3970 = vpop.f32.mrf.mxu0
    %v3971 = vadd.f32 %v3714, %v3970
    %v3972 = vpop.f32.mrf.mxu0
    %v3973 = vadd.f32 %v3716, %v3972
    %3974 = vmatprep.mubr.f32.mxu0 %v2751
    %3975 = vmatmul.mubr.f32.gmra.mxu0 %v2750
    %v3976 = vpop.f32.mrf.mxu0
    %v3977 = vadd.f32 %v3720, %v3976
    %v3978 = vpop.f32.mrf.mxu0
    %v3979 = vadd.f32 %v3722, %v3978
    %3980 = vmatprep.mubr.f32.mxu0 %v2759
    %3981 = vmatmul.mubr.f32.gmra.mxu0 %v2758
    %v3982 = vpop.f32.mrf.mxu0
    %v3983 = vadd.f32 %v3726, %v3982
    %v3984 = vpop.f32.mrf.mxu0
    %v3985 = vadd.f32 %v3728, %v3984
    %3986 = vmatprep.mubr.f32.mxu0 %v2767
    %3987 = vmatmul.mubr.f32.gmra.mxu0 %v2766
    %v3988 = vpop.f32.mrf.mxu0
    %v3989 = vadd.f32 %v3732, %v3988
    %v3990 = vpop.f32.mrf.mxu0
    %v3991 = vadd.f32 %v3734, %v3990
    %3992 = vmatprep.mubr.f32.mxu0 %v2775
    %3993 = vmatmul.mubr.f32.gmra.mxu0 %v2774
    %v3994 = vpop.f32.mrf.mxu0
    %v3995 = vadd.f32 %v3738, %v3994
    %v3996 = vpop.f32.mrf.mxu0
    %v3997 = vadd.f32 %v3740, %v3996
    %3998 = vmatprep.mubr.f32.mxu0 %v2783
    %3999 = vmatmul.mubr.f32.gmra.mxu0 %v2782
    %v4000 = vpop.f32.mrf.mxu0
    %v4001 = vadd.f32 %v3744, %v4000
    %v4002 = vpop.f32.mrf.mxu0
    %v4003 = vadd.f32 %v3746, %v4002
    %4004 = vmatprep.mubr.f32.mxu0 %v2791
    %4005 = vmatmul.mubr.f32.gmra.mxu0 %v2790
    %v4006 = vpop.f32.mrf.mxu0
    %v4007 = vadd.f32 %v3750, %v4006
    %v4008 = vpop.f32.mrf.mxu0
    %v4009 = vadd.f32 %v3752, %v4008
    %4010 = vmatprep.mubr.f32.mxu0 %v2799
    %4011 = vmatmul.mubr.f32.gmra.mxu0 %v2798
    %v4012 = vpop.f32.mrf.mxu0
    %v4013 = vadd.f32 %v3756, %v4012
    %v4014 = vpop.f32.mrf.mxu0
    %v4015 = vadd.f32 %v3758, %v4014
    %4016 = vmatprep.mubr.f32.mxu0 %v2807
    %4017 = vmatmul.mubr.f32.gmra.mxu0 %v2806
    %v4018 = vpop.f32.mrf.mxu0
    %v4019 = vadd.f32 %v3762, %v4018
    %v4020 = vpop.f32.mrf.mxu0
    %v4021 = vadd.f32 %v3764, %v4020
    %4022 = vmatprep.mubr.f32.mxu0 %v2815
    %4023 = vmatmul.mubr.f32.gmra.mxu0 %v2814
    %v4024 = vpop.f32.mrf.mxu0
    %v4025 = vadd.f32 %v3768, %v4024
    %v4026 = vpop.f32.mrf.mxu0
    %v4027 = vadd.f32 %v3770, %v4026
    %4028 = vmatprep.mubr.f32.mxu0 %v2823
    %4029 = vmatmul.mubr.f32.gmra.mxu0 %v2822
    %v4030 = vpop.f32.mrf.mxu0
    %v4031 = vadd.f32 %v3774, %v4030
    %v4032 = vpop.f32.mrf.mxu0
    %v4033 = vadd.f32 %v3776, %v4032
    %4034 = vmatprep.mubr.f32.mxu0 %v2831
    %4035 = vmatmul.mubr.f32.gmra.mxu0 %v2830
    %v4036 = vpop.f32.mrf.mxu0
    %v4037 = vadd.f32 %v3780, %v4036
    %v4038 = vpop.f32.mrf.mxu0
    %v4039 = vadd.f32 %v3782, %v4038
    %4040 = vmatprep.mubr.f32.mxu0 %v2839
    %4041 = vmatmul.mubr.f32.gmra.mxu0 %v2838
    %v4042 = vpop.f32.mrf.mxu0
    %v4043 = vadd.f32 %v3786, %v4042
    %v4044 = vpop.f32.mrf.mxu0
    %v4045 = vadd.f32 %v3788, %v4044
    %4046 = vmatprep.mubr.f32.mxu0 %v2847
    %4047 = vmatmul.mubr.f32.gmra.mxu0 %v2846
    %v4048 = vpop.f32.mrf.mxu0
    %v4049 = vadd.f32 %v3792, %v4048
    %v4050 = vpop.f32.mrf.mxu0
    %v4051 = vadd.f32 %v3794, %v4050
    %4052 = vmatprep.mubr.f32.mxu0 %v2855
    %4053 = vmatmul.mubr.f32.gmra.mxu0 %v2854
    %v4054 = vpop.f32.mrf.mxu0
    %v4055 = vadd.f32 %v3798, %v4054
    %v4056 = vpop.f32.mrf.mxu0
    %v4057 = vadd.f32 %v3800, %v4056
    %4058 = vmatprep.mubr.f32.mxu0 %v2863
    %4059 = vmatmul.mubr.f32.gmra.mxu0 %v2862
    %v4060 = vpop.f32.mrf.mxu0
    %v4061 = vadd.f32 %v3804, %v4060
    %v4062 = vpop.f32.mrf.mxu0
    %v4063 = vadd.f32 %v3806, %v4062
    %4064 = vmatprep.mubr.f32.mxu0 %v2871
    %4065 = vmatmul.mubr.f32.gmra.mxu0 %v2870
    %v4066 = vpop.f32.mrf.mxu0
    %v4067 = vadd.f32 %v3810, %v4066
    %v4068 = vpop.f32.mrf.mxu0
    %v4069 = vadd.f32 %v3812, %v4068
    %4070 = vmatprep.mubr.f32.mxu0 %v2879
    %4071 = vmatmul.mubr.f32.gmra.mxu0 %v2878
    %v4072 = vpop.f32.mrf.mxu0
    %v4073 = vadd.f32 %v3816, %v4072
    %v4074 = vpop.f32.mrf.mxu0
    %v4075 = vadd.f32 %v3818, %v4074
    %4076 = vmatprep.mubr.f32.mxu0 %v2887
    %4077 = vmatmul.mubr.f32.gmra.mxu0 %v2886
    %v4078 = vpop.f32.mrf.mxu0
    %v4079 = vadd.f32 %v3822, %v4078
    %v4080 = vpop.f32.mrf.mxu0
    %v4081 = vadd.f32 %v3824, %v4080
    %4082 = vmatprep.mubr.f32.mxu0 %v2895
    %4083 = vmatmul.mubr.f32.gmra.mxu0 %v2894
    %v4084 = vpop.f32.mrf.mxu0
    %v4085 = vadd.f32 %v3828, %v4084
    %v4086 = vpop.f32.mrf.mxu0
    %v4087 = vadd.f32 %v3830, %v4086
    %4088 = vmatprep.mubr.f32.mxu0 %v2903
    %4089 = vmatmul.mubr.f32.gmra.mxu0 %v2902
    %v4090 = vpop.f32.mrf.mxu0
    %v4091 = vadd.f32 %v3834, %v4090
    %v4092 = vpop.f32.mrf.mxu0
    %v4093 = vadd.f32 %v3836, %v4092
    %4094 = vmatprep.mubr.f32.mxu0 %v2911
    %4095 = vmatmul.mubr.f32.gmra.mxu0 %v2910
    %v4096 = vpop.f32.mrf.mxu0
    %v4097 = vadd.f32 %v3840, %v4096
    %v4098 = vpop.f32.mrf.mxu0
    %v4099 = vadd.f32 %v3842, %v4098
    %4100 = vmatprep.mubr.f32.mxu0 %v2919
    %4101 = vmatmul.mubr.f32.gmra.mxu0 %v2918
    %v4102 = vpop.f32.mrf.mxu0
    %v4103 = vadd.f32 %v3846, %v4102
    %v4104 = vpop.f32.mrf.mxu0
    %v4105 = vadd.f32 %v3848, %v4104
    %4106 = vmatprep.mubr.f32.mxu0 %v2927
    %4107 = vmatmul.mubr.f32.gmra.mxu0 %v2926
    %v4108 = vpop.f32.mrf.mxu0
    %v4109 = vadd.f32 %v3852, %v4108
    %v4110 = vpop.f32.mrf.mxu0
    %v4111 = vadd.f32 %v3854, %v4110
    %4112 = vmatprep.mubr.f32.mxu0 %v2935
    %4113 = vmatmul.mubr.f32.gmra.mxu0 %v2934
    %v4114 = vpop.f32.mrf.mxu0
    %v4115 = vadd.f32 %v3858, %v4114
    %v4116 = vpop.f32.mrf.mxu0
    %v4117 = vadd.f32 %v3860, %v4116
    %4118 = vmatprep.mubr.f32.mxu0 %v2943
    %4119 = vmatmul.mubr.f32.gmra.mxu0 %v2942
    %v4120 = vpop.f32.mrf.mxu0
    %v4121 = vadd.f32 %v3864, %v4120
    %v4122 = vpop.f32.mrf.mxu0
    %v4123 = vadd.f32 %v3866, %v4122
    %4124 = vmatprep.mubr.f32.mxu0 %v2951
    %4125 = vmatmul.mubr.f32.gmra.mxu0 %v2950
    %v4126 = vpop.f32.mrf.mxu0
    %v4127 = vadd.f32 %v3870, %v4126
    %v4128 = vpop.f32.mrf.mxu0
    %v4129 = vadd.f32 %v3872, %v4128
    %4130 = vmatprep.mubr.f32.mxu0 %v2959
    %4131 = vmatmul.mubr.f32.gmra.mxu0 %v2958
    %v4132 = vpop.f32.mrf.mxu0
    %v4133 = vadd.f32 %v3876, %v4132
    %v4134 = vpop.f32.mrf.mxu0
    %v4135 = vadd.f32 %v3878, %v4134
    %4136 = vmatprep.mubr.f32.mxu0 %v2967
    %4137 = vmatmul.mubr.f32.gmra.mxu0 %v2966
    %v4138 = vpop.f32.mrf.mxu0
    %v4139 = vadd.f32 %v3882, %v4138
    %v4140 = vpop.f32.mrf.mxu0
    %v4141 = vadd.f32 %v3884, %v4140
    %4142 = vmatprep.mubr.f32.mxu0 %v2975
    %4143 = vmatmul.mubr.f32.gmra.mxu0 %v2974
    %v4144 = vpop.f32.mrf.mxu0
    %v4145 = vadd.f32 %v3888, %v4144
    %v4146 = vpop.f32.mrf.mxu0
    %v4147 = vadd.f32 %v3890, %v4146
    %4148 = vmatprep.mubr.f32.mxu0 %v2983
    %4149 = vmatmul.mubr.f32.gmra.mxu0 %v2982
    %v4150 = vpop.f32.mrf.mxu0
    %v4151 = vadd.f32 %v3894, %v4150
    %v4152 = vpop.f32.mrf.mxu0
    %v4153 = vadd.f32 %v3896, %v4152
    %4154 = vmatprep.mubr.f32.mxu0 %v2991
    %4155 = vmatmul.mubr.f32.gmra.mxu0 %v2990
    %v4156 = vpop.f32.mrf.mxu0
    %v4157 = vadd.f32 %v3900, %v4156
    %v4158 = vpop.f32.mrf.mxu0
    %v4159 = vadd.f32 %v3902, %v4158
    %4160 = vdwg.mxu0
    %4161 = vmatprep.subr.mxu0 %v3345
    %4162 = vmatpush1.msra.mxu0 %v3344
    %4163 = vmatprep.subr.mxu0 %v3343
    %4164 = vmatpush1.msra.mxu0 %v3342
    %4165 = vmatprep.subr.mxu0 %v3341
    %4166 = vmatpush1.msra.mxu0 %v3340
    %4167 = vmatprep.subr.mxu0 %v3339
    %4168 = vmatpush1.msra.mxu0 %v3338
    %4169 = vmatprep.subr.mxu0 %v3337
    %4170 = vmatpush1.msra.mxu0 %v3336
    %4171 = vmatprep.subr.mxu0 %v3335
    %4172 = vmatpush1.msra.mxu0 %v3334
    %4173 = vmatprep.subr.mxu0 %v3333
    %4174 = vmatpush1.msra.mxu0 %v3332
    %4175 = vmatprep.subr.mxu0 %v3331
    %4176 = vmatpush1.msra.mxu0 %v3330
    %4177 = vmatprep.subr.mxu0 %v3329
    %4178 = vmatpush1.msra.mxu0 %v3328
    %4179 = vmatprep.subr.mxu0 %v3327
    %4180 = vmatpush1.msra.mxu0 %v3326
    %4181 = vmatprep.subr.mxu0 %v3325
    %4182 = vmatpush1.msra.mxu0 %v3324
    %4183 = vmatprep.subr.mxu0 %v3323
    %4184 = vmatpush1.msra.mxu0 %v3322
    %4185 = vmatprep.subr.mxu0 %v3321
    %4186 = vmatpush1.msra.mxu0 %v3320
    %4187 = vmatprep.subr.mxu0 %v3319
    %4188 = vmatpush1.msra.mxu0 %v3318
    %4189 = vmatprep.subr.mxu0 %v3317
    %4190 = vmatpush1.msra.mxu0 %v3316
    %4191 = vmatprep.subr.mxu0 %v3315
    %4192 = vmatpush1.msra.mxu0 %v3314
    %4193 = vmatprep.subr.mxu0 %v3377
    %4194 = vmatpush2.msra.mxu0 %v3376
    %4195 = vmatprep.subr.mxu0 %v3375
    %4196 = vmatpush2.msra.mxu0 %v3374
    %4197 = vmatprep.subr.mxu0 %v3373
    %4198 = vmatpush2.msra.mxu0 %v3372
    %4199 = vmatprep.subr.mxu0 %v3371
    %4200 = vmatpush2.msra.mxu0 %v3370
    %4201 = vmatprep.subr.mxu0 %v3369
    %4202 = vmatpush2.msra.mxu0 %v3368
    %4203 = vmatprep.subr.mxu0 %v3367
    %4204 = vmatpush2.msra.mxu0 %v3366
    %4205 = vmatprep.subr.mxu0 %v3365
    %4206 = vmatpush2.msra.mxu0 %v3364
    %4207 = vmatprep.subr.mxu0 %v3363
    %4208 = vmatpush2.msra.mxu0 %v3362
    %4209 = vmatprep.subr.mxu0 %v3361
    %4210 = vmatpush2.msra.mxu0 %v3360
    %4211 = vmatprep.subr.mxu0 %v3359
    %4212 = vmatpush2.msra.mxu0 %v3358
    %4213 = vmatprep.subr.mxu0 %v3357
    %4214 = vmatpush2.msra.mxu0 %v3356
    %4215 = vmatprep.subr.mxu0 %v3355
    %4216 = vmatpush2.msra.mxu0 %v3354
    %4217 = vmatprep.subr.mxu0 %v3353
    %4218 = vmatpush2.msra.mxu0 %v3352
    %4219 = vmatprep.subr.mxu0 %v3351
    %4220 = vmatpush2.msra.mxu0 %v3350
    %4221 = vmatprep.subr.mxu0 %v3349
    %4222 = vmatpush2.msra.mxu0 %v3348
    %4223 = vmatprep.subr.mxu0 %v3347
    %4224 = vmatpush2.msra.mxu0 %v3346
    %4225 = vmatprep.mubr.f32.mxu0 %v2745
    %4226 = vmatmul.mubr.f32.gmra.mxu0 %v2744
    %v4227 = vpop.f32.mrf.mxu0
    %v4228 = vadd.f32 %v3971, %v4227
    %v4229 = vpop.f32.mrf.mxu0
    %v4230 = vadd.f32 %v3973, %v4229
    %4231 = vmatprep.mubr.f32.mxu0 %v2753
    %4232 = vmatmul.mubr.f32.gmra.mxu0 %v2752
    %v4233 = vpop.f32.mrf.mxu0
    %v4234 = vadd.f32 %v3977, %v4233
    %v4235 = vpop.f32.mrf.mxu0
    %v4236 = vadd.f32 %v3979, %v4235
    %4237 = vmatprep.mubr.f32.mxu0 %v2761
    %4238 = vmatmul.mubr.f32.gmra.mxu0 %v2760
    %v4239 = vpop.f32.mrf.mxu0
    %v4240 = vadd.f32 %v3983, %v4239
    %v4241 = vpop.f32.mrf.mxu0
    %v4242 = vadd.f32 %v3985, %v4241
    %4243 = vmatprep.mubr.f32.mxu0 %v2769
    %4244 = vmatmul.mubr.f32.gmra.mxu0 %v2768
    %v4245 = vpop.f32.mrf.mxu0
    %v4246 = vadd.f32 %v3989, %v4245
    %v4247 = vpop.f32.mrf.mxu0
    %v4248 = vadd.f32 %v3991, %v4247
    %4249 = vmatprep.mubr.f32.mxu0 %v2777
    %4250 = vmatmul.mubr.f32.gmra.mxu0 %v2776
    %v4251 = vpop.f32.mrf.mxu0
    %v4252 = vadd.f32 %v3995, %v4251
    %v4253 = vpop.f32.mrf.mxu0
    %v4254 = vadd.f32 %v3997, %v4253
    %4255 = vmatprep.mubr.f32.mxu0 %v2785
    %4256 = vmatmul.mubr.f32.gmra.mxu0 %v2784
    %v4257 = vpop.f32.mrf.mxu0
    %v4258 = vadd.f32 %v4001, %v4257
    %v4259 = vpop.f32.mrf.mxu0
    %v4260 = vadd.f32 %v4003, %v4259
    %4261 = vmatprep.mubr.f32.mxu0 %v2793
    %4262 = vmatmul.mubr.f32.gmra.mxu0 %v2792
    %v4263 = vpop.f32.mrf.mxu0
    %v4264 = vadd.f32 %v4007, %v4263
    %v4265 = vpop.f32.mrf.mxu0
    %v4266 = vadd.f32 %v4009, %v4265
    %4267 = vmatprep.mubr.f32.mxu0 %v2801
    %4268 = vmatmul.mubr.f32.gmra.mxu0 %v2800
    %v4269 = vpop.f32.mrf.mxu0
    %v4270 = vadd.f32 %v4013, %v4269
    %v4271 = vpop.f32.mrf.mxu0
    %v4272 = vadd.f32 %v4015, %v4271
    %4273 = vmatprep.mubr.f32.mxu0 %v2809
    %4274 = vmatmul.mubr.f32.gmra.mxu0 %v2808
    %v4275 = vpop.f32.mrf.mxu0
    %v4276 = vadd.f32 %v4019, %v4275
    %v4277 = vpop.f32.mrf.mxu0
    %v4278 = vadd.f32 %v4021, %v4277
    %4279 = vmatprep.mubr.f32.mxu0 %v2817
    %4280 = vmatmul.mubr.f32.gmra.mxu0 %v2816
    %v4281 = vpop.f32.mrf.mxu0
    %v4282 = vadd.f32 %v4025, %v4281
    %v4283 = vpop.f32.mrf.mxu0
    %v4284 = vadd.f32 %v4027, %v4283
    %4285 = vmatprep.mubr.f32.mxu0 %v2825
    %4286 = vmatmul.mubr.f32.gmra.mxu0 %v2824
    %v4287 = vpop.f32.mrf.mxu0
    %v4288 = vadd.f32 %v4031, %v4287
    %v4289 = vpop.f32.mrf.mxu0
    %v4290 = vadd.f32 %v4033, %v4289
    %4291 = vmatprep.mubr.f32.mxu0 %v2833
    %4292 = vmatmul.mubr.f32.gmra.mxu0 %v2832
    %v4293 = vpop.f32.mrf.mxu0
    %v4294 = vadd.f32 %v4037, %v4293
    %v4295 = vpop.f32.mrf.mxu0
    %v4296 = vadd.f32 %v4039, %v4295
    %4297 = vmatprep.mubr.f32.mxu0 %v2841
    %4298 = vmatmul.mubr.f32.gmra.mxu0 %v2840
    %v4299 = vpop.f32.mrf.mxu0
    %v4300 = vadd.f32 %v4043, %v4299
    %v4301 = vpop.f32.mrf.mxu0
    %v4302 = vadd.f32 %v4045, %v4301
    %4303 = vmatprep.mubr.f32.mxu0 %v2849
    %4304 = vmatmul.mubr.f32.gmra.mxu0 %v2848
    %v4305 = vpop.f32.mrf.mxu0
    %v4306 = vadd.f32 %v4049, %v4305
    %v4307 = vpop.f32.mrf.mxu0
    %v4308 = vadd.f32 %v4051, %v4307
    %4309 = vmatprep.mubr.f32.mxu0 %v2857
    %4310 = vmatmul.mubr.f32.gmra.mxu0 %v2856
    %v4311 = vpop.f32.mrf.mxu0
    %v4312 = vadd.f32 %v4055, %v4311
    %v4313 = vpop.f32.mrf.mxu0
    %v4314 = vadd.f32 %v4057, %v4313
    %4315 = vmatprep.mubr.f32.mxu0 %v2865
    %4316 = vmatmul.mubr.f32.gmra.mxu0 %v2864
    %v4317 = vpop.f32.mrf.mxu0
    %v4318 = vadd.f32 %v4061, %v4317
    %v4319 = vpop.f32.mrf.mxu0
    %v4320 = vadd.f32 %v4063, %v4319
    %4321 = vmatprep.mubr.f32.mxu0 %v2873
    %4322 = vmatmul.mubr.f32.gmra.mxu0 %v2872
    %v4323 = vpop.f32.mrf.mxu0
    %v4324 = vadd.f32 %v4067, %v4323
    %v4325 = vpop.f32.mrf.mxu0
    %v4326 = vadd.f32 %v4069, %v4325
    %4327 = vmatprep.mubr.f32.mxu0 %v2881
    %4328 = vmatmul.mubr.f32.gmra.mxu0 %v2880
    %v4329 = vpop.f32.mrf.mxu0
    %v4330 = vadd.f32 %v4073, %v4329
    %v4331 = vpop.f32.mrf.mxu0
    %v4332 = vadd.f32 %v4075, %v4331
    %4333 = vmatprep.mubr.f32.mxu0 %v2889
    %4334 = vmatmul.mubr.f32.gmra.mxu0 %v2888
    %v4335 = vpop.f32.mrf.mxu0
    %v4336 = vadd.f32 %v4079, %v4335
    %v4337 = vpop.f32.mrf.mxu0
    %v4338 = vadd.f32 %v4081, %v4337
    %4339 = vmatprep.mubr.f32.mxu0 %v2897
    %4340 = vmatmul.mubr.f32.gmra.mxu0 %v2896
    %v4341 = vpop.f32.mrf.mxu0
    %v4342 = vadd.f32 %v4085, %v4341
    %v4343 = vpop.f32.mrf.mxu0
    %v4344 = vadd.f32 %v4087, %v4343
    %4345 = vmatprep.mubr.f32.mxu0 %v2905
    %4346 = vmatmul.mubr.f32.gmra.mxu0 %v2904
    %v4347 = vpop.f32.mrf.mxu0
    %v4348 = vadd.f32 %v4091, %v4347
    %v4349 = vpop.f32.mrf.mxu0
    %v4350 = vadd.f32 %v4093, %v4349
    %4351 = vmatprep.mubr.f32.mxu0 %v2913
    %4352 = vmatmul.mubr.f32.gmra.mxu0 %v2912
    %v4353 = vpop.f32.mrf.mxu0
    %v4354 = vadd.f32 %v4097, %v4353
    %v4355 = vpop.f32.mrf.mxu0
    %v4356 = vadd.f32 %v4099, %v4355
    %4357 = vmatprep.mubr.f32.mxu0 %v2921
    %4358 = vmatmul.mubr.f32.gmra.mxu0 %v2920
    %v4359 = vpop.f32.mrf.mxu0
    %v4360 = vadd.f32 %v4103, %v4359
    %v4361 = vpop.f32.mrf.mxu0
    %v4362 = vadd.f32 %v4105, %v4361
    %4363 = vmatprep.mubr.f32.mxu0 %v2929
    %4364 = vmatmul.mubr.f32.gmra.mxu0 %v2928
    %v4365 = vpop.f32.mrf.mxu0
    %v4366 = vadd.f32 %v4109, %v4365
    %v4367 = vpop.f32.mrf.mxu0
    %v4368 = vadd.f32 %v4111, %v4367
    %4369 = vmatprep.mubr.f32.mxu0 %v2937
    %4370 = vmatmul.mubr.f32.gmra.mxu0 %v2936
    %v4371 = vpop.f32.mrf.mxu0
    %v4372 = vadd.f32 %v4115, %v4371
    %v4373 = vpop.f32.mrf.mxu0
    %v4374 = vadd.f32 %v4117, %v4373
    %4375 = vmatprep.mubr.f32.mxu0 %v2945
    %4376 = vmatmul.mubr.f32.gmra.mxu0 %v2944
    %v4377 = vpop.f32.mrf.mxu0
    %v4378 = vadd.f32 %v4121, %v4377
    %v4379 = vpop.f32.mrf.mxu0
    %v4380 = vadd.f32 %v4123, %v4379
    %4381 = vmatprep.mubr.f32.mxu0 %v2953
    %4382 = vmatmul.mubr.f32.gmra.mxu0 %v2952
    %v4383 = vpop.f32.mrf.mxu0
    %v4384 = vadd.f32 %v4127, %v4383
    %v4385 = vpop.f32.mrf.mxu0
    %v4386 = vadd.f32 %v4129, %v4385
    %4387 = vmatprep.mubr.f32.mxu0 %v2961
    %4388 = vmatmul.mubr.f32.gmra.mxu0 %v2960
    %v4389 = vpop.f32.mrf.mxu0
    %v4390 = vadd.f32 %v4133, %v4389
    %v4391 = vpop.f32.mrf.mxu0
    %v4392 = vadd.f32 %v4135, %v4391
    %4393 = vmatprep.mubr.f32.mxu0 %v2969
    %4394 = vmatmul.mubr.f32.gmra.mxu0 %v2968
    %v4395 = vpop.f32.mrf.mxu0
    %v4396 = vadd.f32 %v4139, %v4395
    %v4397 = vpop.f32.mrf.mxu0
    %v4398 = vadd.f32 %v4141, %v4397
    %4399 = vmatprep.mubr.f32.mxu0 %v2977
    %4400 = vmatmul.mubr.f32.gmra.mxu0 %v2976
    %v4401 = vpop.f32.mrf.mxu0
    %v4402 = vadd.f32 %v4145, %v4401
    %v4403 = vpop.f32.mrf.mxu0
    %v4404 = vadd.f32 %v4147, %v4403
    %4405 = vmatprep.mubr.f32.mxu0 %v2985
    %4406 = vmatmul.mubr.f32.gmra.mxu0 %v2984
    %v4407 = vpop.f32.mrf.mxu0
    %v4408 = vadd.f32 %v4151, %v4407
    %v4409 = vpop.f32.mrf.mxu0
    %v4410 = vadd.f32 %v4153, %v4409
    %4411 = vmatprep.mubr.f32.mxu0 %v2993
    %4412 = vmatmul.mubr.f32.gmra.mxu0 %v2992
    %v4413 = vpop.f32.mrf.mxu0
    %v4414 = vadd.f32 %v4157, %v4413
    %v4415 = vpop.f32.mrf.mxu0
    %v4416 = vadd.f32 %v4159, %v4415
    %4417 = vdwg.mxu0
    %v4418 = vmax.f32 %v4228, 0.0
    %v4419 = vmax.f32 %v4230, 0.0
    %v4420 = vmax.f32 %v4234, 0.0
    %v4421 = vmax.f32 %v4236, 0.0
    %v4422 = vmax.f32 %v4240, 0.0
    %v4423 = vmax.f32 %v4242, 0.0
    %v4424 = vmax.f32 %v4246, 0.0
    %v4425 = vmax.f32 %v4248, 0.0
    %v4426 = vmax.f32 %v4252, 0.0
    %v4427 = vmax.f32 %v4254, 0.0
    %v4428 = vmax.f32 %v4258, 0.0
    %v4429 = vmax.f32 %v4260, 0.0
    %v4430 = vmax.f32 %v4264, 0.0
    %v4431 = vmax.f32 %v4266, 0.0
    %v4432 = vmax.f32 %v4270, 0.0
    %v4433 = vmax.f32 %v4272, 0.0
    %v4434 = vmax.f32 %v4276, 0.0
    %v4435 = vmax.f32 %v4278, 0.0
    %v4436 = vmax.f32 %v4282, 0.0
    %v4437 = vmax.f32 %v4284, 0.0
    %v4438 = vmax.f32 %v4288, 0.0
    %v4439 = vmax.f32 %v4290, 0.0
    %v4440 = vmax.f32 %v4294, 0.0
    %v4441 = vmax.f32 %v4296, 0.0
    %v4442 = vmax.f32 %v4300, 0.0
    %v4443 = vmax.f32 %v4302, 0.0
    %v4444 = vmax.f32 %v4306, 0.0
    %v4445 = vmax.f32 %v4308, 0.0
    %v4446 = vmax.f32 %v4312, 0.0
    %v4447 = vmax.f32 %v4314, 0.0
    %v4448 = vmax.f32 %v4318, 0.0
    %v4449 = vmax.f32 %v4320, 0.0
    %v4450 = vmax.f32 %v4324, 0.0
    %v4451 = vmax.f32 %v4326, 0.0
    %v4452 = vmax.f32 %v4330, 0.0
    %v4453 = vmax.f32 %v4332, 0.0
    %v4454 = vmax.f32 %v4336, 0.0
    %v4455 = vmax.f32 %v4338, 0.0
    %v4456 = vmax.f32 %v4342, 0.0
    %v4457 = vmax.f32 %v4344, 0.0
    %v4458 = vmax.f32 %v4348, 0.0
    %v4459 = vmax.f32 %v4350, 0.0
    %v4460 = vmax.f32 %v4354, 0.0
    %v4461 = vmax.f32 %v4356, 0.0
    %v4462 = vmax.f32 %v4360, 0.0
    %v4463 = vmax.f32 %v4362, 0.0
    %v4464 = vmax.f32 %v4366, 0.0
    %v4465 = vmax.f32 %v4368, 0.0
    %v4466 = vmax.f32 %v4372, 0.0
    %v4467 = vmax.f32 %v4374, 0.0
    %v4468 = vmax.f32 %v4378, 0.0
    %v4469 = vmax.f32 %v4380, 0.0
    %v4470 = vmax.f32 %v4384, 0.0
    %v4471 = vmax.f32 %v4386, 0.0
    %v4472 = vmax.f32 %v4390, 0.0
    %v4473 = vmax.f32 %v4392, 0.0
    %v4474 = vmax.f32 %v4396, 0.0
    %v4475 = vmax.f32 %v4398, 0.0
    %v4476 = vmax.f32 %v4402, 0.0
    %v4477 = vmax.f32 %v4404, 0.0
    %v4478 = vmax.f32 %v4408, 0.0
    %v4479 = vmax.f32 %v4410, 0.0
    %v4480 = vmax.f32 %v4414, 0.0
    %v4481 = vmax.f32 %v4416, 0.0
    %v4482 = vld [vmem:[%s11] sm:$0xf]
    %v4483 = vld [vmem:[%s11 + $0x4] sm:$0xf]
    %v4484 = vld [vmem:[%s11 + $0x8] sm:$0xf]
    %v4485 = vld [vmem:[%s11 + $0xc] sm:$0xf]
    %v4486 = vld [vmem:[%s11 + $0x10] sm:$0xf]
    %v4487 = vld [vmem:[%s11 + $0x14] sm:$0xf]
    %v4488 = vld [vmem:[%s11 + $0x18] sm:$0xf]
    %v4489 = vld [vmem:[%s11 + $0x1c] sm:$0xf]
    %v4490 = vld [vmem:[%s11 + $0x20] sm:$0xf]
    %v4491 = vld [vmem:[%s11 + $0x24] sm:$0xf]
    %v4492 = vld [vmem:[%s11 + $0x28] sm:$0xf]
    %v4493 = vld [vmem:[%s11 + $0x2c] sm:$0xf]
    %v4494 = vld [vmem:[%s11 + $0x30] sm:$0xf]
    %v4495 = vld [vmem:[%s11 + $0x34] sm:$0xf]
    %v4496 = vld [vmem:[%s11 + $0x38] sm:$0xf]
    %v4497 = vld [vmem:[%s11 + $0x3c] sm:$0xf]
    %v4498 = vld [vmem:[%s11 + $0x40] sm:$0xf]
    %v4499 = vld [vmem:[%s11 + $0x44] sm:$0xf]
    %v4500 = vld [vmem:[%s11 + $0x48] sm:$0xf]
    %v4501 = vld [vmem:[%s11 + $0x4c] sm:$0xf]
    %v4502 = vld [vmem:[%s11 + $0x50] sm:$0xf]
    %v4503 = vld [vmem:[%s11 + $0x54] sm:$0xf]
    %v4504 = vld [vmem:[%s11 + $0x58] sm:$0xf]
    %v4505 = vld [vmem:[%s11 + $0x5c] sm:$0xf]
    %v4506 = vld [vmem:[%s11 + $0x60] sm:$0xf]
    %v4507 = vld [vmem:[%s11 + $0x64] sm:$0xf]
    %v4508 = vld [vmem:[%s11 + $0x68] sm:$0xf]
    %v4509 = vld [vmem:[%s11 + $0x6c] sm:$0xf]
    %v4510 = vld [vmem:[%s11 + $0x70] sm:$0xf]
    %v4511 = vld [vmem:[%s11 + $0x74] sm:$0xf]
    %v4512 = vld [vmem:[%s11 + $0x78] sm:$0xf]
    %v4513 = vld [vmem:[%s11 + $0x7c] sm:$0xf]
    %v4514 = vunpack.c.l.bf16 %v4482
    %v4515 = vunpack.c.l.bf16 %v4483
    %v4516 = vunpack.c.l.bf16 %v4484
    %v4517 = vunpack.c.l.bf16 %v4485
    %v4518 = vunpack.c.l.bf16 %v4486
    %v4519 = vunpack.c.l.bf16 %v4487
    %v4520 = vunpack.c.l.bf16 %v4488
    %v4521 = vunpack.c.l.bf16 %v4489
    %v4522 = vunpack.c.l.bf16 %v4490
    %v4523 = vunpack.c.l.bf16 %v4491
    %v4524 = vunpack.c.l.bf16 %v4492
    %v4525 = vunpack.c.l.bf16 %v4493
    %v4526 = vunpack.c.l.bf16 %v4494
    %v4527 = vunpack.c.l.bf16 %v4495
    %v4528 = vunpack.c.l.bf16 %v4496
    %v4529 = vunpack.c.l.bf16 %v4497
    %v4530 = vunpack.c.l.bf16 %v4498
    %v4531 = vunpack.c.l.bf16 %v4499
    %v4532 = vunpack.c.l.bf16 %v4500
    %v4533 = vunpack.c.l.bf16 %v4501
    %v4534 = vunpack.c.l.bf16 %v4502
    %v4535 = vunpack.c.l.bf16 %v4503
    %v4536 = vunpack.c.l.bf16 %v4504
    %v4537 = vunpack.c.l.bf16 %v4505
    %v4538 = vunpack.c.l.bf16 %v4506
    %v4539 = vunpack.c.l.bf16 %v4507
    %v4540 = vunpack.c.l.bf16 %v4508
    %v4541 = vunpack.c.l.bf16 %v4509
    %v4542 = vunpack.c.l.bf16 %v4510
    %v4543 = vunpack.c.l.bf16 %v4511
    %v4544 = vunpack.c.l.bf16 %v4512
    %v4545 = vunpack.c.l.bf16 %v4513
    %v4546 = vld [vmem:[%s12] sm:$0x1]
    %v4548 = vlaneseq
    %v4549 = vshrl.u32 %v4548, 7
    %v4550 = vsub.s32 0, %v4549
    %v4551 = vrot.slane %v4546, %v4550
    %4553 = vmatprep.subr.mxu0 0.0
    %4554 = vmatpush1.msra.mxu0 %v4529
    %4555 = vmatprep.subr.mxu0 0.0
    %4556 = vmatpush1.msra.mxu0 %v4528
    %4557 = vmatprep.subr.mxu0 0.0
    %4558 = vmatpush1.msra.mxu0 %v4527
    %4559 = vmatprep.subr.mxu0 0.0
    %4560 = vmatpush1.msra.mxu0 %v4526
    %4561 = vmatprep.subr.mxu0 0.0
    %4562 = vmatpush1.msra.mxu0 %v4525
    %4563 = vmatprep.subr.mxu0 0.0
    %4564 = vmatpush1.msra.mxu0 %v4524
    %4565 = vmatprep.subr.mxu0 0.0
    %4566 = vmatpush1.msra.mxu0 %v4523
    %4567 = vmatprep.subr.mxu0 0.0
    %4568 = vmatpush1.msra.mxu0 %v4522
    %4569 = vmatprep.subr.mxu0 0.0
    %4570 = vmatpush1.msra.mxu0 %v4521
    %4571 = vmatprep.subr.mxu0 0.0
    %4572 = vmatpush1.msra.mxu0 %v4520
    %4573 = vmatprep.subr.mxu0 0.0
    %4574 = vmatpush1.msra.mxu0 %v4519
    %4575 = vmatprep.subr.mxu0 0.0
    %4576 = vmatpush1.msra.mxu0 %v4518
    %4577 = vmatprep.subr.mxu0 0.0
    %4578 = vmatpush1.msra.mxu0 %v4517
    %4579 = vmatprep.subr.mxu0 0.0
    %4580 = vmatpush1.msra.mxu0 %v4516
    %4581 = vmatprep.subr.mxu0 0.0
    %4582 = vmatpush1.msra.mxu0 %v4515
    %4583 = vmatprep.subr.mxu0 0.0
    %4584 = vmatpush1.msra.mxu0 %v4514
    %4585 = vmatprep.subr.mxu0 0.0
    %4586 = vmatpush2.msra.mxu0 %v4545
    %4587 = vmatprep.subr.mxu0 0.0
    %4588 = vmatpush2.msra.mxu0 %v4544
    %4589 = vmatprep.subr.mxu0 0.0
    %4590 = vmatpush2.msra.mxu0 %v4543
    %4591 = vmatprep.subr.mxu0 0.0
    %4592 = vmatpush2.msra.mxu0 %v4542
    %4593 = vmatprep.subr.mxu0 0.0
    %4594 = vmatpush2.msra.mxu0 %v4541
    %4595 = vmatprep.subr.mxu0 0.0
    %4596 = vmatpush2.msra.mxu0 %v4540
    %4597 = vmatprep.subr.mxu0 0.0
    %4598 = vmatpush2.msra.mxu0 %v4539
    %4599 = vmatprep.subr.mxu0 0.0
    %4600 = vmatpush2.msra.mxu0 %v4538
    %4601 = vmatprep.subr.mxu0 0.0
    %4602 = vmatpush2.msra.mxu0 %v4537
    %4603 = vmatprep.subr.mxu0 0.0
    %4604 = vmatpush2.msra.mxu0 %v4536
    %4605 = vmatprep.subr.mxu0 0.0
    %4606 = vmatpush2.msra.mxu0 %v4535
    %4607 = vmatprep.subr.mxu0 0.0
    %4608 = vmatpush2.msra.mxu0 %v4534
    %4609 = vmatprep.subr.mxu0 0.0
    %4610 = vmatpush2.msra.mxu0 %v4533
    %4611 = vmatprep.subr.mxu0 0.0
    %4612 = vmatpush2.msra.mxu0 %v4532
    %4613 = vmatprep.subr.mxu0 0.0
    %4614 = vmatpush2.msra.mxu0 %v4531
    %4615 = vmatprep.subr.mxu0 0.0
    %4616 = vmatpush2.msra.mxu0 %v4530
    %4617 = vmatprep.mubr.f32.mxu0 %v4419
    %4618 = vmatmul.mubr.f32.gmra.mxu0 %v4418
    %v4619 = vpop.f32.mrf.mxu0
    %v4620 = vadd.f32 %v4551, %v4619
    %v4621 = vpop.f32.mrf.mxu0
    %4622 = vmatprep.mubr.f32.mxu0 %v4421
    %4623 = vmatmul.mubr.f32.gmra.mxu0 %v4420
    %v4624 = vpop.f32.mrf.mxu0
    %v4625 = vadd.f32 %v4551, %v4624
    %v4626 = vpop.f32.mrf.mxu0
    %4627 = vmatprep.mubr.f32.mxu0 %v4423
    %4628 = vmatmul.mubr.f32.gmra.mxu0 %v4422
    %v4629 = vpop.f32.mrf.mxu0
    %v4630 = vadd.f32 %v4551, %v4629
    %v4631 = vpop.f32.mrf.mxu0
    %4632 = vmatprep.mubr.f32.mxu0 %v4425
    %4633 = vmatmul.mubr.f32.gmra.mxu0 %v4424
    %v4634 = vpop.f32.mrf.mxu0
    %v4635 = vadd.f32 %v4551, %v4634
    %v4636 = vpop.f32.mrf.mxu0
    %4637 = vmatprep.mubr.f32.mxu0 %v4427
    %4638 = vmatmul.mubr.f32.gmra.mxu0 %v4426
    %v4639 = vpop.f32.mrf.mxu0
    %v4640 = vadd.f32 %v4551, %v4639
    %v4641 = vpop.f32.mrf.mxu0
    %4642 = vmatprep.mubr.f32.mxu0 %v4429
    %4643 = vmatmul.mubr.f32.gmra.mxu0 %v4428
    %v4644 = vpop.f32.mrf.mxu0
    %v4645 = vadd.f32 %v4551, %v4644
    %v4646 = vpop.f32.mrf.mxu0
    %4647 = vmatprep.mubr.f32.mxu0 %v4431
    %4648 = vmatmul.mubr.f32.gmra.mxu0 %v4430
    %v4649 = vpop.f32.mrf.mxu0
    %v4650 = vadd.f32 %v4551, %v4649
    %v4651 = vpop.f32.mrf.mxu0
    %4652 = vmatprep.mubr.f32.mxu0 %v4433
    %4653 = vmatmul.mubr.f32.gmra.mxu0 %v4432
    %v4654 = vpop.f32.mrf.mxu0
    %v4655 = vadd.f32 %v4551, %v4654
    %v4656 = vpop.f32.mrf.mxu0
    %4657 = vmatprep.mubr.f32.mxu0 %v4435
    %4658 = vmatmul.mubr.f32.gmra.mxu0 %v4434
    %v4659 = vpop.f32.mrf.mxu0
    %v4660 = vadd.f32 %v4551, %v4659
    %v4661 = vpop.f32.mrf.mxu0
    %4662 = vmatprep.mubr.f32.mxu0 %v4437
    %4663 = vmatmul.mubr.f32.gmra.mxu0 %v4436
    %v4664 = vpop.f32.mrf.mxu0
    %v4665 = vadd.f32 %v4551, %v4664
    %v4666 = vpop.f32.mrf.mxu0
    %4667 = vmatprep.mubr.f32.mxu0 %v4439
    %4668 = vmatmul.mubr.f32.gmra.mxu0 %v4438
    %v4669 = vpop.f32.mrf.mxu0
    %v4670 = vadd.f32 %v4551, %v4669
    %v4671 = vpop.f32.mrf.mxu0
    %4672 = vmatprep.mubr.f32.mxu0 %v4441
    %4673 = vmatmul.mubr.f32.gmra.mxu0 %v4440
    %v4674 = vpop.f32.mrf.mxu0
    %v4675 = vadd.f32 %v4551, %v4674
    %v4676 = vpop.f32.mrf.mxu0
    %4677 = vmatprep.mubr.f32.mxu0 %v4443
    %4678 = vmatmul.mubr.f32.gmra.mxu0 %v4442
    %v4679 = vpop.f32.mrf.mxu0
    %v4680 = vadd.f32 %v4551, %v4679
    %v4681 = vpop.f32.mrf.mxu0
    %4682 = vmatprep.mubr.f32.mxu0 %v4445
    %4683 = vmatmul.mubr.f32.gmra.mxu0 %v4444
    %v4684 = vpop.f32.mrf.mxu0
    %v4685 = vadd.f32 %v4551, %v4684
    %v4686 = vpop.f32.mrf.mxu0
    %4687 = vmatprep.mubr.f32.mxu0 %v4447
    %4688 = vmatmul.mubr.f32.gmra.mxu0 %v4446
    %v4689 = vpop.f32.mrf.mxu0
    %v4690 = vadd.f32 %v4551, %v4689
    %v4691 = vpop.f32.mrf.mxu0
    %4692 = vmatprep.mubr.f32.mxu0 %v4449
    %4693 = vmatmul.mubr.f32.gmra.mxu0 %v4448
    %v4694 = vpop.f32.mrf.mxu0
    %v4695 = vadd.f32 %v4551, %v4694
    %v4696 = vpop.f32.mrf.mxu0
    %4697 = vmatprep.mubr.f32.mxu0 %v4451
    %4698 = vmatmul.mubr.f32.gmra.mxu0 %v4450
    %v4699 = vpop.f32.mrf.mxu0
    %v4700 = vadd.f32 %v4551, %v4699
    %v4701 = vpop.f32.mrf.mxu0
    %4702 = vmatprep.mubr.f32.mxu0 %v4453
    %4703 = vmatmul.mubr.f32.gmra.mxu0 %v4452
    %v4704 = vpop.f32.mrf.mxu0
    %v4705 = vadd.f32 %v4551, %v4704
    %v4706 = vpop.f32.mrf.mxu0
    %4707 = vmatprep.mubr.f32.mxu0 %v4455
    %4708 = vmatmul.mubr.f32.gmra.mxu0 %v4454
    %v4709 = vpop.f32.mrf.mxu0
    %v4710 = vadd.f32 %v4551, %v4709
    %v4711 = vpop.f32.mrf.mxu0
    %4712 = vmatprep.mubr.f32.mxu0 %v4457
    %4713 = vmatmul.mubr.f32.gmra.mxu0 %v4456
    %v4714 = vpop.f32.mrf.mxu0
    %v4715 = vadd.f32 %v4551, %v4714
    %v4716 = vpop.f32.mrf.mxu0
    %4717 = vmatprep.mubr.f32.mxu0 %v4459
    %4718 = vmatmul.mubr.f32.gmra.mxu0 %v4458
    %v4719 = vpop.f32.mrf.mxu0
    %v4720 = vadd.f32 %v4551, %v4719
    %v4721 = vpop.f32.mrf.mxu0
    %4722 = vmatprep.mubr.f32.mxu0 %v4461
    %4723 = vmatmul.mubr.f32.gmra.mxu0 %v4460
    %v4724 = vpop.f32.mrf.mxu0
    %v4725 = vadd.f32 %v4551, %v4724
    %v4726 = vpop.f32.mrf.mxu0
    %4727 = vmatprep.mubr.f32.mxu0 %v4463
    %4728 = vmatmul.mubr.f32.gmra.mxu0 %v4462
    %v4729 = vpop.f32.mrf.mxu0
    %v4730 = vadd.f32 %v4551, %v4729
    %v4731 = vpop.f32.mrf.mxu0
    %4732 = vmatprep.mubr.f32.mxu0 %v4465
    %4733 = vmatmul.mubr.f32.gmra.mxu0 %v4464
    %v4734 = vpop.f32.mrf.mxu0
    %v4735 = vadd.f32 %v4551, %v4734
    %v4736 = vpop.f32.mrf.mxu0
    %4737 = vmatprep.mubr.f32.mxu0 %v4467
    %4738 = vmatmul.mubr.f32.gmra.mxu0 %v4466
    %v4739 = vpop.f32.mrf.mxu0
    %v4740 = vadd.f32 %v4551, %v4739
    %v4741 = vpop.f32.mrf.mxu0
    %4742 = vmatprep.mubr.f32.mxu0 %v4469
    %4743 = vmatmul.mubr.f32.gmra.mxu0 %v4468
    %v4744 = vpop.f32.mrf.mxu0
    %v4745 = vadd.f32 %v4551, %v4744
    %v4746 = vpop.f32.mrf.mxu0
    %4747 = vmatprep.mubr.f32.mxu0 %v4471
    %4748 = vmatmul.mubr.f32.gmra.mxu0 %v4470
    %v4749 = vpop.f32.mrf.mxu0
    %v4750 = vadd.f32 %v4551, %v4749
    %v4751 = vpop.f32.mrf.mxu0
    %4752 = vmatprep.mubr.f32.mxu0 %v4473
    %4753 = vmatmul.mubr.f32.gmra.mxu0 %v4472
    %v4754 = vpop.f32.mrf.mxu0
    %v4755 = vadd.f32 %v4551, %v4754
    %v4756 = vpop.f32.mrf.mxu0
    %4757 = vmatprep.mubr.f32.mxu0 %v4475
    %4758 = vmatmul.mubr.f32.gmra.mxu0 %v4474
    %v4759 = vpop.f32.mrf.mxu0
    %v4760 = vadd.f32 %v4551, %v4759
    %v4761 = vpop.f32.mrf.mxu0
    %4762 = vmatprep.mubr.f32.mxu0 %v4477
    %4763 = vmatmul.mubr.f32.gmra.mxu0 %v4476
    %v4764 = vpop.f32.mrf.mxu0
    %v4765 = vadd.f32 %v4551, %v4764
    %v4766 = vpop.f32.mrf.mxu0
    %4767 = vmatprep.mubr.f32.mxu0 %v4479
    %4768 = vmatmul.mubr.f32.gmra.mxu0 %v4478
    %v4769 = vpop.f32.mrf.mxu0
    %v4770 = vadd.f32 %v4551, %v4769
    %v4771 = vpop.f32.mrf.mxu0
    %4772 = vmatprep.mubr.f32.mxu0 %v4481
    %4773 = vmatmul.mubr.f32.gmra.mxu0 %v4480
    %v4774 = vpop.f32.mrf.mxu0
    %v4775 = vadd.f32 %v4551, %v4774
    %v4776 = vpop.f32.mrf.mxu0
    %4777 = vdwg.mxu0
    %v4778 = vmax.f32 %v4620, 0.0
    %v4779 = vmax.f32 %v4625, 0.0
    %v4780 = vmax.f32 %v4630, 0.0
    %v4781 = vmax.f32 %v4635, 0.0
    %v4782 = vmax.f32 %v4640, 0.0
    %v4783 = vmax.f32 %v4645, 0.0
    %v4784 = vmax.f32 %v4650, 0.0
    %v4785 = vmax.f32 %v4655, 0.0
    %v4786 = vmax.f32 %v4660, 0.0
    %v4787 = vmax.f32 %v4665, 0.0
    %v4788 = vmax.f32 %v4670, 0.0
    %v4789 = vmax.f32 %v4675, 0.0
    %v4790 = vmax.f32 %v4680, 0.0
    %v4791 = vmax.f32 %v4685, 0.0
    %v4792 = vmax.f32 %v4690, 0.0
    %v4793 = vmax.f32 %v4695, 0.0
    %v4794 = vmax.f32 %v4700, 0.0
    %v4795 = vmax.f32 %v4705, 0.0
    %v4796 = vmax.f32 %v4710, 0.0
    %v4797 = vmax.f32 %v4715, 0.0
    %v4798 = vmax.f32 %v4720, 0.0
    %v4799 = vmax.f32 %v4725, 0.0
    %v4800 = vmax.f32 %v4730, 0.0
    %v4801 = vmax.f32 %v4735, 0.0
    %v4802 = vmax.f32 %v4740, 0.0
    %v4803 = vmax.f32 %v4745, 0.0
    %v4804 = vmax.f32 %v4750, 0.0
    %v4805 = vmax.f32 %v4755, 0.0
    %v4806 = vmax.f32 %v4760, 0.0
    %v4807 = vmax.f32 %v4765, 0.0
    %v4808 = vmax.f32 %v4770, 0.0
    %v4809 = vmax.f32 %v4775, 0.0
    %v4810 = vld [vmem:[%s13] sm:$0xf]
    %v4811 = vld [vmem:[%s13 + $0x4] sm:$0xf]
    %v4812 = vld [vmem:[%s13 + $0x8] sm:$0xf]
    %v4813 = vld [vmem:[%s13 + $0xc] sm:$0xf]
    %v4814 = vld [vmem:[%s13 + $0x10] sm:$0xf]
    %v4815 = vld [vmem:[%s13 + $0x14] sm:$0xf]
    %v4816 = vld [vmem:[%s13 + $0x18] sm:$0xf]
    %v4817 = vld [vmem:[%s13 + $0x1c] sm:$0xf]
    %v4818 = vunpack.c.l.bf16 %v4810
    %v4819 = vunpack.c.l.bf16 %v4811
    %v4820 = vunpack.c.l.bf16 %v4812
    %v4821 = vunpack.c.l.bf16 %v4813
    %v4822 = vunpack.c.l.bf16 %v4814
    %v4823 = vunpack.c.l.bf16 %v4815
    %v4824 = vunpack.c.l.bf16 %v4816
    %v4825 = vunpack.c.l.bf16 %v4817
    %v4826 = vld [vmem:[%s14] sm:$0x1]
    %v4828 = vlaneseq
    %v4829 = vshrl.u32 %v4828, 7
    %v4830 = vsub.s32 0, %v4829
    %v4831 = vrot.slane %v4826, %v4830
    %vm4833 = vcmask 523264
    %v4835 = vsel %vm4833, %v4778, 0
    %v4838 = vsel %vm4833, %v4779, 0
    %v4841 = vsel %vm4833, %v4780, 0
    %v4844 = vsel %vm4833, %v4781, 0
    %v4847 = vsel %vm4833, %v4782, 0
    %v4850 = vsel %vm4833, %v4783, 0
    %v4853 = vsel %vm4833, %v4784, 0
    %v4856 = vsel %vm4833, %v4785, 0
    %v4859 = vsel %vm4833, %v4786, 0
    %v4862 = vsel %vm4833, %v4787, 0
    %v4865 = vsel %vm4833, %v4788, 0
    %v4868 = vsel %vm4833, %v4789, 0
    %v4871 = vsel %vm4833, %v4790, 0
    %v4874 = vsel %vm4833, %v4791, 0
    %v4877 = vsel %vm4833, %v4792, 0
    %v4880 = vsel %vm4833, %v4793, 0
    %v4883 = vsel %vm4833, %v4794, 0
    %v4886 = vsel %vm4833, %v4795, 0
    %v4889 = vsel %vm4833, %v4796, 0
    %v4892 = vsel %vm4833, %v4797, 0
    %v4895 = vsel %vm4833, %v4798, 0
    %v4898 = vsel %vm4833, %v4799, 0
    %v4901 = vsel %vm4833, %v4800, 0
    %v4904 = vsel %vm4833, %v4801, 0
    %v4907 = vsel %vm4833, %v4802, 0
    %v4910 = vsel %vm4833, %v4803, 0
    %v4913 = vsel %vm4833, %v4804, 0
    %v4916 = vsel %vm4833, %v4805, 0
    %v4919 = vsel %vm4833, %v4806, 0
    %v4922 = vsel %vm4833, %v4807, 0
    %v4925 = vsel %vm4833, %v4808, 0
    %v4928 = vsel %vm4833, %v4809, 0
    %4930 = vmatprep.subr.mxu0 0.0
    %4931 = vmatpush1.msra.mxu0 0.0
    %4932 = vmatprep.subr.mxu0 0.0
    %4933 = vmatpush1.msra.mxu0 0.0
    %4934 = vmatprep.subr.mxu0 0.0
    %4935 = vmatpush1.msra.mxu0 0.0
    %4936 = vmatprep.subr.mxu0 0.0
    %4937 = vmatpush1.msra.mxu0 0.0
    %4938 = vmatprep.subr.mxu0 0.0
    %4939 = vmatpush1.msra.mxu0 0.0
    %4940 = vmatprep.subr.mxu0 0.0
    %4941 = vmatpush1.msra.mxu0 0.0
    %4942 = vmatprep.subr.mxu0 0.0
    %4943 = vmatpush1.msra.mxu0 0.0
    %4944 = vmatprep.subr.mxu0 0.0
    %4945 = vmatpush1.msra.mxu0 0.0
    %4946 = vmatprep.subr.mxu0 0.0
    %4947 = vmatpush1.msra.mxu0 %v4825
    %4948 = vmatprep.subr.mxu0 0.0
    %4949 = vmatpush1.msra.mxu0 %v4824
    %4950 = vmatprep.subr.mxu0 0.0
    %4951 = vmatpush1.msra.mxu0 %v4823
    %4952 = vmatprep.subr.mxu0 0.0
    %4953 = vmatpush1.msra.mxu0 %v4822
    %4954 = vmatprep.subr.mxu0 0.0
    %4955 = vmatpush1.msra.mxu0 %v4821
    %4956 = vmatprep.subr.mxu0 0.0
    %4957 = vmatpush1.msra.mxu0 %v4820
    %4958 = vmatprep.subr.mxu0 0.0
    %4959 = vmatpush1.msra.mxu0 %v4819
    %4960 = vmatprep.subr.mxu0 0.0
    %4961 = vmatpush1.msra.mxu0 %v4818
    %4962 = vmatprep.subr.mxu0 0.0
    %4963 = vmatpush2.msra.mxu0 0.0
    %4964 = vmatprep.subr.mxu0 0.0
    %4965 = vmatpush2.msra.mxu0 0.0
    %4966 = vmatprep.subr.mxu0 0.0
    %4967 = vmatpush2.msra.mxu0 0.0
    %4968 = vmatprep.subr.mxu0 0.0
    %4969 = vmatpush2.msra.mxu0 0.0
    %4970 = vmatprep.subr.mxu0 0.0
    %4971 = vmatpush2.msra.mxu0 0.0
    %4972 = vmatprep.subr.mxu0 0.0
    %4973 = vmatpush2.msra.mxu0 0.0
    %4974 = vmatprep.subr.mxu0 0.0
    %4975 = vmatpush2.msra.mxu0 0.0
    %4976 = vmatprep.subr.mxu0 0.0
    %4977 = vmatpush2.msra.mxu0 0.0
    %4978 = vmatprep.subr.mxu0 0.0
    %4979 = vmatpush2.msra.mxu0 0.0
    %4980 = vmatprep.subr.mxu0 0.0
    %4981 = vmatpush2.msra.mxu0 0.0
    %4982 = vmatprep.subr.mxu0 0.0
    %4983 = vmatpush2.msra.mxu0 0.0
    %4984 = vmatprep.subr.mxu0 0.0
    %4985 = vmatpush2.msra.mxu0 0.0
    %4986 = vmatprep.subr.mxu0 0.0
    %4987 = vmatpush2.msra.mxu0 0.0
    %4988 = vmatprep.subr.mxu0 0.0
    %4989 = vmatpush2.msra.mxu0 0.0
    %4990 = vmatprep.subr.mxu0 0.0
    %4991 = vmatpush2.msra.mxu0 0.0
    %4992 = vmatprep.subr.mxu0 0.0
    %4993 = vmatpush2.msra.mxu0 0.0
    %4994 = vmatprep.mubr.f32.mxu0 0.0
    %4995 = vmatmul.mubr.f32.gmra.mxu0 %v4835
    %v4996 = vpop.f32.mrf.mxu0
    %v4997 = vadd.f32 %v4831, %v4996
    %v4998 = vpop.f32.mrf.mxu0
    %4999 = vmatprep.mubr.f32.mxu0 0.0
    %5000 = vmatmul.mubr.f32.gmra.mxu0 %v4838
    %v5001 = vpop.f32.mrf.mxu0
    %v5002 = vadd.f32 %v4831, %v5001
    %v5003 = vpop.f32.mrf.mxu0
    %5004 = vmatprep.mubr.f32.mxu0 0.0
    %5005 = vmatmul.mubr.f32.gmra.mxu0 %v4841
    %v5006 = vpop.f32.mrf.mxu0
    %v5007 = vadd.f32 %v4831, %v5006
    %v5008 = vpop.f32.mrf.mxu0
    %5009 = vmatprep.mubr.f32.mxu0 0.0
    %5010 = vmatmul.mubr.f32.gmra.mxu0 %v4844
    %v5011 = vpop.f32.mrf.mxu0
    %v5012 = vadd.f32 %v4831, %v5011
    %v5013 = vpop.f32.mrf.mxu0
    %5014 = vmatprep.mubr.f32.mxu0 0.0
    %5015 = vmatmul.mubr.f32.gmra.mxu0 %v4847
    %v5016 = vpop.f32.mrf.mxu0
    %v5017 = vadd.f32 %v4831, %v5016
    %v5018 = vpop.f32.mrf.mxu0
    %5019 = vmatprep.mubr.f32.mxu0 0.0
    %5020 = vmatmul.mubr.f32.gmra.mxu0 %v4850
    %v5021 = vpop.f32.mrf.mxu0
    %v5022 = vadd.f32 %v4831, %v5021
    %v5023 = vpop.f32.mrf.mxu0
    %5024 = vmatprep.mubr.f32.mxu0 0.0
    %5025 = vmatmul.mubr.f32.gmra.mxu0 %v4853
    %v5026 = vpop.f32.mrf.mxu0
    %v5027 = vadd.f32 %v4831, %v5026
    %v5028 = vpop.f32.mrf.mxu0
    %5029 = vmatprep.mubr.f32.mxu0 0.0
    %5030 = vmatmul.mubr.f32.gmra.mxu0 %v4856
    %v5031 = vpop.f32.mrf.mxu0
    %v5032 = vadd.f32 %v4831, %v5031
    %v5033 = vpop.f32.mrf.mxu0
    %5034 = vmatprep.mubr.f32.mxu0 0.0
    %5035 = vmatmul.mubr.f32.gmra.mxu0 %v4859
    %v5036 = vpop.f32.mrf.mxu0
    %v5037 = vadd.f32 %v4831, %v5036
    %v5038 = vpop.f32.mrf.mxu0
    %5039 = vmatprep.mubr.f32.mxu0 0.0
    %5040 = vmatmul.mubr.f32.gmra.mxu0 %v4862
    %v5041 = vpop.f32.mrf.mxu0
    %v5042 = vadd.f32 %v4831, %v5041
    %v5043 = vpop.f32.mrf.mxu0
    %5044 = vmatprep.mubr.f32.mxu0 0.0
    %5045 = vmatmul.mubr.f32.gmra.mxu0 %v4865
    %v5046 = vpop.f32.mrf.mxu0
    %v5047 = vadd.f32 %v4831, %v5046
    %v5048 = vpop.f32.mrf.mxu0
    %5049 = vmatprep.mubr.f32.mxu0 0.0
    %5050 = vmatmul.mubr.f32.gmra.mxu0 %v4868
    %v5051 = vpop.f32.mrf.mxu0
    %v5052 = vadd.f32 %v4831, %v5051
    %v5053 = vpop.f32.mrf.mxu0
    %5054 = vmatprep.mubr.f32.mxu0 0.0
    %5055 = vmatmul.mubr.f32.gmra.mxu0 %v4871
    %v5056 = vpop.f32.mrf.mxu0
    %v5057 = vadd.f32 %v4831, %v5056
    %v5058 = vpop.f32.mrf.mxu0
    %5059 = vmatprep.mubr.f32.mxu0 0.0
    %5060 = vmatmul.mubr.f32.gmra.mxu0 %v4874
    %v5061 = vpop.f32.mrf.mxu0
    %v5062 = vadd.f32 %v4831, %v5061
    %v5063 = vpop.f32.mrf.mxu0
    %5064 = vmatprep.mubr.f32.mxu0 0.0
    %5065 = vmatmul.mubr.f32.gmra.mxu0 %v4877
    %v5066 = vpop.f32.mrf.mxu0
    %v5067 = vadd.f32 %v4831, %v5066
    %v5068 = vpop.f32.mrf.mxu0
    %5069 = vmatprep.mubr.f32.mxu0 0.0
    %5070 = vmatmul.mubr.f32.gmra.mxu0 %v4880
    %v5071 = vpop.f32.mrf.mxu0
    %v5072 = vadd.f32 %v4831, %v5071
    %v5073 = vpop.f32.mrf.mxu0
    %5074 = vmatprep.mubr.f32.mxu0 0.0
    %5075 = vmatmul.mubr.f32.gmra.mxu0 %v4883
    %v5076 = vpop.f32.mrf.mxu0
    %v5077 = vadd.f32 %v4831, %v5076
    %v5078 = vpop.f32.mrf.mxu0
    %5079 = vmatprep.mubr.f32.mxu0 0.0
    %5080 = vmatmul.mubr.f32.gmra.mxu0 %v4886
    %v5081 = vpop.f32.mrf.mxu0
    %v5082 = vadd.f32 %v4831, %v5081
    %v5083 = vpop.f32.mrf.mxu0
    %5084 = vmatprep.mubr.f32.mxu0 0.0
    %5085 = vmatmul.mubr.f32.gmra.mxu0 %v4889
    %v5086 = vpop.f32.mrf.mxu0
    %v5087 = vadd.f32 %v4831, %v5086
    %v5088 = vpop.f32.mrf.mxu0
    %5089 = vmatprep.mubr.f32.mxu0 0.0
    %5090 = vmatmul.mubr.f32.gmra.mxu0 %v4892
    %v5091 = vpop.f32.mrf.mxu0
    %v5092 = vadd.f32 %v4831, %v5091
    %v5093 = vpop.f32.mrf.mxu0
    %5094 = vmatprep.mubr.f32.mxu0 0.0
    %5095 = vmatmul.mubr.f32.gmra.mxu0 %v4895
    %v5096 = vpop.f32.mrf.mxu0
    %v5097 = vadd.f32 %v4831, %v5096
    %v5098 = vpop.f32.mrf.mxu0
    %5099 = vmatprep.mubr.f32.mxu0 0.0
    %5100 = vmatmul.mubr.f32.gmra.mxu0 %v4898
    %v5101 = vpop.f32.mrf.mxu0
    %v5102 = vadd.f32 %v4831, %v5101
    %v5103 = vpop.f32.mrf.mxu0
    %5104 = vmatprep.mubr.f32.mxu0 0.0
    %5105 = vmatmul.mubr.f32.gmra.mxu0 %v4901
    %v5106 = vpop.f32.mrf.mxu0
    %v5107 = vadd.f32 %v4831, %v5106
    %v5108 = vpop.f32.mrf.mxu0
    %5109 = vmatprep.mubr.f32.mxu0 0.0
    %5110 = vmatmul.mubr.f32.gmra.mxu0 %v4904
    %v5111 = vpop.f32.mrf.mxu0
    %v5112 = vadd.f32 %v4831, %v5111
    %v5113 = vpop.f32.mrf.mxu0
    %5114 = vmatprep.mubr.f32.mxu0 0.0
    %5115 = vmatmul.mubr.f32.gmra.mxu0 %v4907
    %v5116 = vpop.f32.mrf.mxu0
    %v5117 = vadd.f32 %v4831, %v5116
    %v5118 = vpop.f32.mrf.mxu0
    %5119 = vmatprep.mubr.f32.mxu0 0.0
    %5120 = vmatmul.mubr.f32.gmra.mxu0 %v4910
    %v5121 = vpop.f32.mrf.mxu0
    %v5122 = vadd.f32 %v4831, %v5121
    %v5123 = vpop.f32.mrf.mxu0
    %5124 = vmatprep.mubr.f32.mxu0 0.0
    %5125 = vmatmul.mubr.f32.gmra.mxu0 %v4913
    %v5126 = vpop.f32.mrf.mxu0
    %v5127 = vadd.f32 %v4831, %v5126
    %v5128 = vpop.f32.mrf.mxu0
    %5129 = vmatprep.mubr.f32.mxu0 0.0
    %5130 = vmatmul.mubr.f32.gmra.mxu0 %v4916
    %v5131 = vpop.f32.mrf.mxu0
    %v5132 = vadd.f32 %v4831, %v5131
    %v5133 = vpop.f32.mrf.mxu0
    %5134 = vmatprep.mubr.f32.mxu0 0.0
    %5135 = vmatmul.mubr.f32.gmra.mxu0 %v4919
    %v5136 = vpop.f32.mrf.mxu0
    %v5137 = vadd.f32 %v4831, %v5136
    %v5138 = vpop.f32.mrf.mxu0
    %5139 = vmatprep.mubr.f32.mxu0 0.0
    %5140 = vmatmul.mubr.f32.gmra.mxu0 %v4922
    %v5141 = vpop.f32.mrf.mxu0
    %v5142 = vadd.f32 %v4831, %v5141
    %v5143 = vpop.f32.mrf.mxu0
    %5144 = vmatprep.mubr.f32.mxu0 0.0
    %5145 = vmatmul.mubr.f32.gmra.mxu0 %v4925
    %v5146 = vpop.f32.mrf.mxu0
    %v5147 = vadd.f32 %v4831, %v5146
    %v5148 = vpop.f32.mrf.mxu0
    %5149 = vmatprep.mubr.f32.mxu0 0.0
    %5150 = vmatmul.mubr.f32.gmra.mxu0 %v4928
    %v5151 = vpop.f32.mrf.mxu0
    %v5152 = vadd.f32 %v4831, %v5151
    %v5153 = vpop.f32.mrf.mxu0
    %5154 = vdwg.mxu0
    %v5155 = vtanh.pop %v4997
    %v5156 = vtanh.pop %v5002
    %v5157 = vtanh.pop %v5007
    %v5158 = vtanh.pop %v5012
    %v5159 = vtanh.pop %v5017
    %v5160 = vtanh.pop %v5022
    %v5161 = vtanh.pop %v5027
    %v5162 = vtanh.pop %v5032
    %v5163 = vtanh.pop %v5037
    %v5164 = vtanh.pop %v5042
    %v5165 = vtanh.pop %v5047
    %v5166 = vtanh.pop %v5052
    %v5167 = vtanh.pop %v5057
    %v5168 = vtanh.pop %v5062
    %v5169 = vtanh.pop %v5067
    %v5170 = vtanh.pop %v5072
    %v5171 = vtanh.pop %v5077
    %v5172 = vtanh.pop %v5082
    %v5173 = vtanh.pop %v5087
    %v5174 = vtanh.pop %v5092
    %v5175 = vtanh.pop %v5097
    %v5176 = vtanh.pop %v5102
    %v5177 = vtanh.pop %v5107
    %v5178 = vtanh.pop %v5112
    %v5179 = vtanh.pop %v5117
    %v5180 = vtanh.pop %v5122
    %v5181 = vtanh.pop %v5127
    %v5182 = vtanh.pop %v5132
    %v5183 = vtanh.pop %v5137
    %v5184 = vtanh.pop %v5142
    %v5185 = vtanh.pop %v5147
    %v5186 = vtanh.pop %v5152
    %5187 = vst [vmem:[#allocation7] sm:$0xff] %v5155
    %5188 = vst [vmem:[#allocation7 + $0x8] sm:$0xff] %v5156
    %5189 = vst [vmem:[#allocation7 + $0x10] sm:$0xff] %v5157
    %5190 = vst [vmem:[#allocation7 + $0x18] sm:$0xff] %v5158
    %5191 = vst [vmem:[#allocation7 + $0x20] sm:$0xff] %v5159
    %5192 = vst [vmem:[#allocation7 + $0x28] sm:$0xff] %v5160
    %5193 = vst [vmem:[#allocation7 + $0x30] sm:$0xff] %v5161
    %5194 = vst [vmem:[#allocation7 + $0x38] sm:$0xff] %v5162
    %5195 = vst [vmem:[#allocation7 + $0x40] sm:$0xff] %v5163
    %5196 = vst [vmem:[#allocation7 + $0x48] sm:$0xff] %v5164
    %5197 = vst [vmem:[#allocation7 + $0x50] sm:$0xff] %v5165
    %5198 = vst [vmem:[#allocation7 + $0x58] sm:$0xff] %v5166
    %5199 = vst [vmem:[#allocation7 + $0x60] sm:$0xff] %v5167
    %5200 = vst [vmem:[#allocation7 + $0x68] sm:$0xff] %v5168
    %5201 = vst [vmem:[#allocation7 + $0x70] sm:$0xff] %v5169
    %5202 = vst [vmem:[#allocation7 + $0x78] sm:$0xff] %v5170
    %5203 = vst [vmem:[#allocation7 + $0x80] sm:$0xff] %v5171
    %5204 = vst [vmem:[#allocation7 + $0x88] sm:$0xff] %v5172
    %5205 = vst [vmem:[#allocation7 + $0x90] sm:$0xff] %v5173
    %5206 = vst [vmem:[#allocation7 + $0x98] sm:$0xff] %v5174
    %5207 = vst [vmem:[#allocation7 + $0xa0] sm:$0xff] %v5175
    %5208 = vst [vmem:[#allocation7 + $0xa8] sm:$0xff] %v5176
    %5209 = vst [vmem:[#allocation7 + $0xb0] sm:$0xff] %v5177
    %5210 = vst [vmem:[#allocation7 + $0xb8] sm:$0xff] %v5178
    %5211 = vst [vmem:[#allocation7 + $0xc0] sm:$0xff] %v5179
    %5212 = vst [vmem:[#allocation7 + $0xc8] sm:$0xff] %v5180
    %5213 = vst [vmem:[#allocation7 + $0xd0] sm:$0xff] %v5181
    %5214 = vst [vmem:[#allocation7 + $0xd8] sm:$0xff] %v5182
    %5215 = vst [vmem:[#allocation7 + $0xe0] sm:$0xff] %v5183
    %5216 = vst [vmem:[#allocation7 + $0xe8] sm:$0xff] %v5184
    %5217 = vst [vmem:[#allocation7 + $0xf0] sm:$0xff] %v5185
    %5218 = vst [vmem:[#allocation7 + $0xf8] sm:$0xff] %v5186
    // Predicated region
    $region70: #{tpu_custom_call.1} parent=1 // pred_check
      _
    $region71: #{tpu_custom_call.1} parent=1 // pred_check_branch
      %5220 = sbr.rel (0) target = $region73
    $region72: #{tpu_custom_call.1} parent=1 // pred_region
      %s5222 = ssub.s32 4096, 4096
      %5223 = vsyncadd [#allocation4], %s5222
      %s5224 = sshll.u32 [#allocation7], 4
      %s5225 = int_to_ptr.vmem [resolvable:$true] %s5224
      %5230 = dma.vmem_to_hbm [thread:$0]  %s5225, 4096, %s15, [#allocation4], 128, 128, 8
    $region73: #{tpu_custom_call.1} parent=1 // pred_fallthru
      _
    // Predicated region
    $region74: #{tpu_custom_call.1} parent=1 // pred_check
      _
    $region75: #{tpu_custom_call.1} parent=1 // pred_check_branch
      %5232 = sbr.rel (0) target = $region77
    $region76: #{tpu_custom_call.1} parent=1 // pred_region
      %5233 = dma.done [#allocation4], 4096
    $region77: #{tpu_custom_call.1} parent=1 // pred_fallthru
      _
    %5234 = vsyncpa [#allocation3], 1
    %5235 = vsyncpa [#allocation6], 1
    %5236 = vsyncpa [#allocation4], 1

</llo_original>
